<compile_context>
chip_gen: v5e
topology: v5e:2x2
jax: 0.10.0
libtpu: 0.0.40
codegen_flags: <defaults>
</compile_context>

<pallas_src>
import numpy as np
import jax
import jax.numpy as jnp
from jax.experimental import pallas as pl
from jax.experimental.pallas import tpu as pltpu


_H = 64        # input spatial size implied by fc1 = 10*13*13
_XW = 512      # padded flat width of each mod-4 input phase plane (16*16 -> 512)
_P1W = 384     # flat width of pooled conv1 phase planes (15x15, row stride 16)
_OW = 256      # flat width of the conv-tower output (13x13, row stride 16)


# ------------------------- Pallas kernels -------------------------

def _conv_tower_kernel(x4_ref, w1_ref, b1_ref, w2_ref, b2_ref, o_ref, x1_s, x2_s):
    # x4_ref: (TB, 16, 512) bf16  mod-4 phase planes per image (zero padded)
    # w1_ref: (256, 64) bf16      conv1: row = ph*64 + k*16 + cout, col = g*16 + plane
    #                             (ph = pool1 parity phase, k = pos in 2x2 window,
    #                              g indexes lane offsets [0, 1, 16, 17])
    # b1_ref: (16, 1) f32         conv1 bias, rows >= 10 zero
    # w2_ref: (64, 576) bf16      conv2: row = cand2*16 + cout, col = g2*64 + ph*16 + cin
    #                             (g2 indexes the 9 lane offsets (0..2) + 16*(0..2))
    # b2_ref: (16, 1) f32         conv2 bias, rows >= 10 zero
    # o_ref : (TB, 16, 256) bf16  relu(pool2), row = cout, lane = i*16 + j
    # x1_s  : (64, 384) bf16      K-stacked conv1 operand scratch
    # x2_s  : (576, 256) bf16     K-stacked conv2 operand scratch
    tb = x4_ref.shape[0]
    b1 = b1_ref[...]
    b2 = b2_ref[...]
    for t in range(tb):
        x4 = x4_ref[t]                                          # (16, 512) bf16

        # ---- conv1 operand: 4 lane-shifted copies of the 16 planes, K-stacked ----
        for g, off in enumerate((0, 1, 16, 17)):
            x1_s[g * 16:(g + 1) * 16, :] = x4[:, off:off + _P1W]
        x1 = x1_s[...]                                          # (64, 384)

        # ---- conv1 + 2x2 maxpool + relu, pool-as-you-go per pool phase ----
        # The relu'd phase result is scattered straight into the K-stacked conv2
        # operand (9 lane shifts), so pooled conv1 never needs its own buffer.
        for ph in range(4):
            c1 = jnp.dot(w1_ref[ph * 64:(ph + 1) * 64, :], x1,
                         preferred_element_type=jnp.float32)    # (64, 384) f32
            m1 = jnp.maximum(jnp.maximum(c1[0:16], c1[16:32]),
                             jnp.maximum(c1[32:48], c1[48:64]))
            pp = jnp.maximum(m1 + b1, 0.0).astype(jnp.bfloat16)  # (16, 384)
            for g2 in range(9):
                off2 = (g2 // 3) * 16 + (g2 % 3)
                r0 = g2 * 64 + ph * 16
                x2_s[r0:r0 + 16, :] = pp[:, off2:off2 + _OW]

        # ---- conv2 (one K=576 matmul) + 2x2 maxpool + relu ----
        c2 = jnp.dot(w2_ref[...], x2_s[...],
                     preferred_element_type=jnp.float32)        # (64, 256) f32
        m2 = jnp.maximum(jnp.maximum(c2[0:16], c2[16:32]),
                         jnp.maximum(c2[32:48], c2[48:64]))
        o_ref[t] = jnp.maximum(m2 + b2, 0.0).astype(jnp.bfloat16)


def _fc_tail_kernel(x_ref, w1_ref, b1_ref, w2_ref, b2_ref, o_ref):
    # x_ref : (TB, 4096) bf16  flattened conv-tower output (row-major (16, 256))
    # w1_ref: (4096, 128) bf16 fc1 weight permuted/zero-padded to that layout
    # b1_ref: (1, 128) f32 ; w2_ref: (128, 128) bf16 ; b2_ref: (1, 128) f32
    # o_ref : (TB, 128) f32  log-probabilities (cols >= 10 are ~-1e30, sliced off outside)
    x = x_ref[...]
    z1 = jnp.dot(x, w1_ref[...], preferred_element_type=jnp.float32) + b1_ref[...]
    z1 = jnp.maximum(z1, 0.0)
    # TODO(synk): F.dropout is identity in eval mode; training-mode RNG dropout not implemented.
    z2 = jnp.dot(z1.astype(jnp.bfloat16), w2_ref[...],
                 preferred_element_type=jnp.float32) + b2_ref[...]
    m = jnp.max(z2, axis=-1, keepdims=True)
    lse = jnp.log(jnp.sum(jnp.exp(z2 - m), axis=-1, keepdims=True)) + m
    o_ref[...] = z2 - lse


# ------------------------- pallas_call wrappers -------------------------

def _pick_tb(B):
    for tb in (8, 4, 2):
        if B % tb == 0 and B // tb >= 2:
            return tb
    return 1


def conv_tower(x4, w1all, b1p, w2all, b2p):
    B = x4.shape[0]
    tb = _pick_tb(B)
    return pl.pallas_call(
        _conv_tower_kernel,
        out_shape=jax.ShapeDtypeStruct((B, 16, _OW), jnp.bfloat16),
        grid=(B // tb,),
        in_specs=[
            pl.BlockSpec((tb, 16, _XW), lambda b: (b, 0, 0)),
            pl.BlockSpec((256, 64), lambda b: (0, 0)),
            pl.BlockSpec((16, 1), lambda b: (0, 0)),
            pl.BlockSpec((64, 576), lambda b: (0, 0)),
            pl.BlockSpec((16, 1), lambda b: (0, 0)),
        ],
        out_specs=pl.BlockSpec((tb, 16, _OW), lambda b: (b, 0, 0)),
        scratch_shapes=[pltpu.VMEM((64, _P1W), jnp.bfloat16),
                        pltpu.VMEM((576, _OW), jnp.bfloat16)],
        compiler_params=pltpu.CompilerParams(
            dimension_semantics=("parallel",),
            vmem_limit_bytes=32 * 1024 * 1024),
    )(x4, w1all, b1p, w2all, b2p)


def fc_tail(act, w1, b1, w2, b2):
    B, K = act.shape
    tb = B if B <= 256 else 256
    return pl.pallas_call(
        _fc_tail_kernel,
        out_shape=jax.ShapeDtypeStruct((B, 128), jnp.float32),
        grid=(pl.cdiv(B, tb),),
        in_specs=[
            pl.BlockSpec((tb, K), lambda i: (i, 0)),
            pl.BlockSpec((K, 128), lambda i: (0, 0)),
            pl.BlockSpec((1, 128), lambda i: (0, 0)),
            pl.BlockSpec((128, 128), lambda i: (0, 0)),
            pl.BlockSpec((1, 128), lambda i: (0, 0)),
        ],
        out_specs=pl.BlockSpec((tb, 128), lambda i: (i, 0)),
        compiler_params=pltpu.CompilerParams(
            dimension_semantics=("parallel",),
            vmem_limit_bytes=32 * 1024 * 1024),
    )(act, w1, b1, w2, b2)


# ------------------------- one-time parameter prep (hoisted out of forward) ----

def prepare_params(params):
    w1 = np.asarray(params["conv1_w"], np.float32).reshape(10, 5, 5)
    b1 = np.asarray(params["conv1_b"], np.float32)
    w2 = np.asarray(params["conv2_w"], np.float32)           # (cout, cin, 5, 5)
    b2 = np.asarray(params["conv2_b"], np.float32)
    fw1 = np.asarray(params["fc1_w"], np.float32)             # (1690, 100), stored (in, out)
    fb1 = np.asarray(params["fc1_b"], np.float32)
    fw2 = np.asarray(params["fc2_w"], np.float32)             # (100, 10), stored (in, out)
    fb2 = np.asarray(params["fc2_b"], np.float32)

    # conv1 -> (256, 64): row = ph*64 + k*16 + cout, col = g*16 + plane,
    # where candidate conv position parity A = 2u+dr, C = 2v+ds (ph = u*2+v, k = dr*2+ds),
    # U = A+di, V = C+dj, g = 2*(U//4) + (V//4), plane = (U%4)*4 + (V%4).
    w1all = np.zeros((256, 64), np.float32)
    for u in range(2):
        for v in range(2):
            ph = u * 2 + v
            for dr in range(2):
                for ds in range(2):
                    k = dr * 2 + ds
                    A, C = 2 * u + dr, 2 * v + ds
                    for di in range(5):
                        for dj in range(5):
                            U, V = A + di, C + dj
                            g = 2 * (U // 4) + (V // 4)
                            p = (U % 4) * 4 + (V % 4)
                            r0 = ph * 64 + k * 16
                            w1all[r0:r0 + 10, g * 16 + p] += w1[:, di, dj]
    b1p = np.zeros((16, 1), np.float32)
    b1p[:10, 0] = b1

    # conv2 -> (64, 576): row = (p*2+q)*16 + cout, col = g2*64 + ph*16 + cin,
    # where U = p+di, V = q+dj, g2 = (U//2)*3 + (V//2), ph = (U%2)*2 + (V%2).
    w2all = np.zeros((64, 576), np.float32)
    for p in range(2):
        for q in range(2):
            for di in range(5):
                for dj in range(5):
                    U, V = p + di, q + dj
                    g2 = (U // 2) * 3 + (V // 2)
                    ph = (U % 2) * 2 + (V % 2)
                    r0 = (p * 2 + q) * 16
                    c0 = g2 * 64 + ph * 16
                    w2all[r0:r0 + 10, c0:c0 + 10] += w2[:, :, di, dj]
    b2p = np.zeros((16, 1), np.float32)
    b2p[:10, 0] = b2

    # fc1: consume the (16, 256) conv-tower layout directly (feature = c*256 + i*16 + j);
    # zero rows cancel the padded / garbage activation columns.  Output padded 100 -> 128.
    fw1p = np.zeros((16 * _OW, 128), np.float32)
    fr = fw1.reshape(10, 13, 13, 100)
    for c in range(10):
        for i in range(13):
            fw1p[c * _OW + i * 16: c * _OW + i * 16 + 13, :100] = fr[c, i]
    fb1p = np.zeros((1, 128), np.float32)
    fb1p[0, :100] = fb1

    # fc2: (128, 128); pad logit columns get a huge negative bias so log_softmax ignores them.
    fw2p = np.zeros((128, 128), np.float32)
    fw2p[:100, :10] = fw2
    fb2p = np.full((1, 128), -1e30, np.float32)
    fb2p[0, :10] = fb2

    return {
        "w1": jnp.asarray(w1all, jnp.bfloat16), "b1": jnp.asarray(b1p),
        "w2": jnp.asarray(w2all, jnp.bfloat16), "b2": jnp.asarray(b2p),
        "fw1": jnp.asarray(fw1p, jnp.bfloat16), "fb1": jnp.asarray(fb1p),
        "fw2": jnp.asarray(fw2p, jnp.bfloat16), "fb2": jnp.asarray(fb2p),
    }


# ------------------------- the Net -------------------------

def init_params(key):
    ks = jax.random.split(key, 8)

    def u(k, shape, fan_in):
        bound = 1.0 / np.sqrt(fan_in)
        return jax.random.uniform(k, shape, jnp.float32, -bound, bound)

    return {
        "conv1_w": u(ks[0], (10, 1, 5, 5), 1 * 5 * 5),
        "conv1_b": u(ks[1], (10,), 1 * 5 * 5),
        "conv2_w": u(ks[2], (10, 10, 5, 5), 10 * 5 * 5),
        "conv2_b": u(ks[3], (10,), 10 * 5 * 5),
        "fc1_w": u(ks[4], (10 * 13 * 13, 100), 10 * 13 * 13),  # stored (in, out)
        "fc1_b": u(ks[5], (100,), 10 * 13 * 13),
        "fc2_w": u(ks[6], (100, 10), 100),                      # stored (in, out)
        "fc2_b": u(ks[7], (10,), 100),
    }


def net_forward(prep, x):
    # x: (B, 1, 64, 64) float32 (64x64 implied by fc1 = 10*13*13)
    B = x.shape[0]
    # mod-4 phase planes: x4[b, e*4+f, a*16+c] = x[b, 4a+e, 4c+f], zero padded to 512 lanes.
    xr = x.reshape(B, _H, _H)
    x4 = xr.reshape(B, 16, 4, 16, 4).transpose(0, 2, 4, 1, 3).reshape(B, 16, 256)
    x4 = jnp.pad(x4, ((0, 0), (0, 0), (0, _XW - 256))).astype(jnp.bfloat16)

    conv_out = conv_tower(x4, prep["w1"], prep["b1"], prep["w2"], prep["b2"])  # (B,16,256) bf16
    act = conv_out.reshape(B, 16 * _OW)                                        # (B, 4096) bf16
    logp = fc_tail(act, prep["fw1"], prep["fb1"], prep["fw2"], prep["fb2"])    # (B, 128) f32
    return logp[:, :10]


# ------------------------- pure-JAX reference -------------------------

def reference_forward(params, x):
    hp = jax.lax.Precision.HIGHEST
    dn = ("NCHW", "OIHW", "NCHW")
    y = jax.lax.conv_general_dilated(x, params["conv1_w"], (1, 1), "VALID",
                                     dimension_numbers=dn, precision=hp)
    y = y + params["conv1_b"][None, :, None, None]
    y = jax.lax.reduce_window(y, -jnp.inf, jax.lax.max, (1, 1, 2, 2), (1, 1, 2, 2), "VALID")
    y = jnp.maximum(y, 0.0)
    y = jax.lax.conv_general_dilated(y, params["conv2_w"], (1, 1), "VALID",
                                     dimension_numbers=dn, precision=hp)
    y = y + params["conv2_b"][None, :, None, None]
    y = jax.lax.reduce_window(y, -jnp.inf, jax.lax.max, (1, 1, 2, 2), (1, 1, 2, 2), "VALID")
    y = jnp.maximum(y, 0.0)
    y = y.reshape(y.shape[0], -1)
    y = jnp.maximum(jnp.dot(y, params["fc1_w"], precision=hp) + params["fc1_b"], 0.0)
    y = jnp.dot(y, params["fc2_w"], precision=hp) + params["fc2_b"]
    return jax.nn.log_softmax(y, axis=-1)


if __name__ == "__main__":
    x = jax.random.normal(jax.random.PRNGKey(0), (2, 1, 64, 64), jnp.float32)
    params = init_params(jax.random.PRNGKey(42))
    prep = prepare_params(params)          # one-time weight re-layout, outside the forward

    out = jax.jit(net_forward)(prep, x)
    out = jax.block_until_ready(out)

    assert out.shape == (2, 10)
    assert bool(jnp.all(jnp.isfinite(out)))
    assert bool(jnp.allclose(jnp.sum(jnp.exp(out), axis=1), 1.0, atol=1e-4))

    ref = jax.block_until_ready(jax.jit(reference_forward)(params, x))
    assert bool(jnp.allclose(out, ref, atol=5e-2, rtol=5e-2))

    print("KERNEL_OK")
</pallas_src>

<mosaic_0001>
module attributes {stable_mosaic.version = 11 : i64} {
  func.func @_conv_tower_kernel(%arg0: i32, %arg1: memref<1x16x512xbf16, #tpu.memory_space<vmem>>, %arg2: memref<256x64xbf16, #tpu.memory_space<vmem>>, %arg3: memref<16x1xf32, #tpu.memory_space<vmem>>, %arg4: memref<64x576xbf16, #tpu.memory_space<vmem>>, %arg5: memref<16x1xf32, #tpu.memory_space<vmem>>, %arg6: memref<1x16x256xbf16, #tpu.memory_space<vmem>>, %arg7: memref<64x384xbf16, #tpu.memory_space<vmem>>, %arg8: memref<576x256xbf16, #tpu.memory_space<vmem>>) attributes {dimension_semantics = [#tpu.dimension_semantics<parallel>], iteration_bounds = array<i64: 2>, scalar_prefetch = 0 : i64, scratch_operands = 2 : i64, tpu.core_type = #tpu.core_type<tc>, window_params = [{transform_indices = @transform_0, window_bounds = array<i64: 1, 16, 512>}, {pipeline_mode = #tpu.pipeline_mode<synchronous>, transform_indices = @transform_1, window_bounds = array<i64: 256, 64>}, {pipeline_mode = #tpu.pipeline_mode<synchronous>, transform_indices = @transform_2, window_bounds = array<i64: 16, 1>}, {pipeline_mode = #tpu.pipeline_mode<synchronous>, transform_indices = @transform_3, window_bounds = array<i64: 64, 576>}, {pipeline_mode = #tpu.pipeline_mode<synchronous>, transform_indices = @transform_4, window_bounds = array<i64: 16, 1>}, {transform_indices = @transform_5, window_bounds = array<i64: 1, 16, 256>}]} {
    %c0 = arith.constant 0 : index
    %c0_0 = arith.constant 0 : index
    %0 = vector.load %arg3[%c0, %c0_0] : memref<16x1xf32, #tpu.memory_space<vmem>>, vector<16x1xf32>
    %c0_1 = arith.constant 0 : index
    %c0_2 = arith.constant 0 : index
    %1 = vector.load %arg5[%c0_1, %c0_2] : memref<16x1xf32, #tpu.memory_space<vmem>>, vector<16x1xf32>
    %c0_3 = arith.constant 0 : index
    %c0_4 = arith.constant 0 : index
    %c0_5 = arith.constant 0 : index
    %2 = vector.load %arg1[%c0_3, %c0_4, %c0_5] : memref<1x16x512xbf16, #tpu.memory_space<vmem>>, vector<1x16x512xbf16>
    %3 = vector.shape_cast %2 : vector<1x16x512xbf16> to vector<16x512xbf16>
    %4 = vector.extract_strided_slice %3 {offsets = [0, 0], sizes = [16, 384], strides = [1, 1]} : vector<16x512xbf16> to vector<16x384xbf16>
    %c0_6 = arith.constant 0 : index
    %c0_7 = arith.constant 0 : index
    %5 = vector.load %arg7[%c0_6, %c0_7] : memref<64x384xbf16, #tpu.memory_space<vmem>>, vector<16x384xbf16>
    tpu.vector_store %arg7[%c0_6, %c0_7], %4 {strides = array<i32>} : memref<64x384xbf16, #tpu.memory_space<vmem>>, vector<16x384xbf16>,
    %6 = vector.extract_strided_slice %3 {offsets = [0, 1], sizes = [16, 384], strides = [1, 1]} : vector<16x512xbf16> to vector<16x384xbf16>
    %c16 = arith.constant 16 : index
    %c0_8 = arith.constant 0 : index
    %7 = vector.load %arg7[%c16, %c0_8] : memref<64x384xbf16, #tpu.memory_space<vmem>>, vector<16x384xbf16>
    tpu.vector_store %arg7[%c16, %c0_8], %6 {strides = array<i32>} : memref<64x384xbf16, #tpu.memory_space<vmem>>, vector<16x384xbf16>,
    %8 = vector.extract_strided_slice %3 {offsets = [0, 16], sizes = [16, 384], strides = [1, 1]} : vector<16x512xbf16> to vector<16x384xbf16>
    %c32 = arith.constant 32 : index
    %c0_9 = arith.constant 0 : index
    %9 = vector.load %arg7[%c32, %c0_9] : memref<64x384xbf16, #tpu.memory_space<vmem>>, vector<16x384xbf16>
    tpu.vector_store %arg7[%c32, %c0_9], %8 {strides = array<i32>} : memref<64x384xbf16, #tpu.memory_space<vmem>>, vector<16x384xbf16>,
    %10 = vector.extract_strided_slice %3 {offsets = [0, 17], sizes = [16, 384], strides = [1, 1]} : vector<16x512xbf16> to vector<16x384xbf16>
    %c48 = arith.constant 48 : index
    %c0_10 = arith.constant 0 : index
    %11 = vector.load %arg7[%c48, %c0_10] : memref<64x384xbf16, #tpu.memory_space<vmem>>, vector<16x384xbf16>
    tpu.vector_store %arg7[%c48, %c0_10], %10 {strides = array<i32>} : memref<64x384xbf16, #tpu.memory_space<vmem>>, vector<16x384xbf16>,
    %c0_11 = arith.constant 0 : index
    %c0_12 = arith.constant 0 : index
    %12 = vector.load %arg7[%c0_11, %c0_12] : memref<64x384xbf16, #tpu.memory_space<vmem>>, vector<64x384xbf16>
    %c0_13 = arith.constant 0 : index
    %c0_14 = arith.constant 0 : index
    %13 = vector.load %arg2[%c0_13, %c0_14] : memref<256x64xbf16, #tpu.memory_space<vmem>>, vector<64x64xbf16>
    %cst = arith.constant dense<0.000000e+00> : vector<64x384xf32>
    %14 = tpu.matmul %13, %12, %cst {dimension_numbers = #tpu.dot_dimension_numbers<[1], [0], [0], [1], [0, 0, 1, 1], [], []>} : vector<64x64xbf16>, vector<64x384xbf16>, vector<64x384xf32> -> vector<64x384xf32>
    %15 = vector.extract_strided_slice %14 {offsets = [0, 0], sizes = [16, 384], strides = [1, 1]} : vector<64x384xf32> to vector<16x384xf32>
    %16 = vector.extract_strided_slice %14 {offsets = [16, 0], sizes = [16, 384], strides = [1, 1]} : vector<64x384xf32> to vector<16x384xf32>
    %17 = arith.maximumf %15, %16 : vector<16x384xf32>
    %18 = vector.extract_strided_slice %14 {offsets = [32, 0], sizes = [16, 384], strides = [1, 1]} : vector<64x384xf32> to vector<16x384xf32>
    %19 = vector.extract_strided_slice %14 {offsets = [48, 0], sizes = [16, 384], strides = [1, 1]} : vector<64x384xf32> to vector<16x384xf32>
    %20 = arith.maximumf %18, %19 : vector<16x384xf32>
    %21 = arith.maximumf %17, %20 : vector<16x384xf32>
    %22 = vector.broadcast %0 : vector<16x1xf32> to vector<16x384xf32>
    %23 = arith.addf %21, %22 : vector<16x384xf32>
    %cst_15 = arith.constant 0.000000e+00 : f32
    %24 = vector.broadcast %cst_15 : f32 to vector<16x384xf32>
    %25 = arith.maximumf %23, %24 : vector<16x384xf32>
    %26 = arith.truncf %25 : vector<16x384xf32> to vector<16x384xbf16>
    %27 = vector.extract_strided_slice %26 {offsets = [0, 0], sizes = [16, 256], strides = [1, 1]} : vector<16x384xbf16> to vector<16x256xbf16>
    %c0_16 = arith.constant 0 : index
    %c0_17 = arith.constant 0 : index
    %28 = vector.load %arg8[%c0_16, %c0_17] : memref<576x256xbf16, #tpu.memory_space<vmem>>, vector<16x256xbf16>
    tpu.vector_store %arg8[%c0_16, %c0_17], %27 {strides = array<i32>} : memref<576x256xbf16, #tpu.memory_space<vmem>>, vector<16x256xbf16>,
    %29 = vector.extract_strided_slice %26 {offsets = [0, 1], sizes = [16, 256], strides = [1, 1]} : vector<16x384xbf16> to vector<16x256xbf16>
    %c64 = arith.constant 64 : index
    %c0_18 = arith.constant 0 : index
    %30 = vector.load %arg8[%c64, %c0_18] : memref<576x256xbf16, #tpu.memory_space<vmem>>, vector<16x256xbf16>
    tpu.vector_store %arg8[%c64, %c0_18], %29 {strides = array<i32>} : memref<576x256xbf16, #tpu.memory_space<vmem>>, vector<16x256xbf16>,
    %31 = vector.extract_strided_slice %26 {offsets = [0, 2], sizes = [16, 256], strides = [1, 1]} : vector<16x384xbf16> to vector<16x256xbf16>
    %c128 = arith.constant 128 : index
    %c0_19 = arith.constant 0 : index
    %32 = vector.load %arg8[%c128, %c0_19] : memref<576x256xbf16, #tpu.memory_space<vmem>>, vector<16x256xbf16>
    tpu.vector_store %arg8[%c128, %c0_19], %31 {strides = array<i32>} : memref<576x256xbf16, #tpu.memory_space<vmem>>, vector<16x256xbf16>,
    %33 = vector.extract_strided_slice %26 {offsets = [0, 16], sizes = [16, 256], strides = [1, 1]} : vector<16x384xbf16> to vector<16x256xbf16>
    %c192 = arith.constant 192 : index
    %c0_20 = arith.constant 0 : index
    %34 = vector.load %arg8[%c192, %c0_20] : memref<576x256xbf16, #tpu.memory_space<vmem>>, vector<16x256xbf16>
    tpu.vector_store %arg8[%c192, %c0_20], %33 {strides = array<i32>} : memref<576x256xbf16, #tpu.memory_space<vmem>>, vector<16x256xbf16>,
    %35 = vector.extract_strided_slice %26 {offsets = [0, 17], sizes = [16, 256], strides = [1, 1]} : vector<16x384xbf16> to vector<16x256xbf16>
    %c256 = arith.constant 256 : index
    %c0_21 = arith.constant 0 : index
    %36 = vector.load %arg8[%c256, %c0_21] : memref<576x256xbf16, #tpu.memory_space<vmem>>, vector<16x256xbf16>
    tpu.vector_store %arg8[%c256, %c0_21], %35 {strides = array<i32>} : memref<576x256xbf16, #tpu.memory_space<vmem>>, vector<16x256xbf16>,
    %37 = vector.extract_strided_slice %26 {offsets = [0, 18], sizes = [16, 256], strides = [1, 1]} : vector<16x384xbf16> to vector<16x256xbf16>
    %c320 = arith.constant 320 : index
    %c0_22 = arith.constant 0 : index
    %38 = vector.load %arg8[%c320, %c0_22] : memref<576x256xbf16, #tpu.memory_space<vmem>>, vector<16x256xbf16>
    tpu.vector_store %arg8[%c320, %c0_22], %37 {strides = array<i32>} : memref<576x256xbf16, #tpu.memory_space<vmem>>, vector<16x256xbf16>,
    %39 = vector.extract_strided_slice %26 {offsets = [0, 32], sizes = [16, 256], strides = [1, 1]} : vector<16x384xbf16> to vector<16x256xbf16>
    %c384 = arith.constant 384 : index
    %c0_23 = arith.constant 0 : index
    %40 = vector.load %arg8[%c384, %c0_23] : memref<576x256xbf16, #tpu.memory_space<vmem>>, vector<16x256xbf16>
    tpu.vector_store %arg8[%c384, %c0_23], %39 {strides = array<i32>} : memref<576x256xbf16, #tpu.memory_space<vmem>>, vector<16x256xbf16>,
    %41 = vector.extract_strided_slice %26 {offsets = [0, 33], sizes = [16, 256], strides = [1, 1]} : vector<16x384xbf16> to vector<16x256xbf16>
    %c448 = arith.constant 448 : index
    %c0_24 = arith.constant 0 : index
    %42 = vector.load %arg8[%c448, %c0_24] : memref<576x256xbf16, #tpu.memory_space<vmem>>, vector<16x256xbf16>
    tpu.vector_store %arg8[%c448, %c0_24], %41 {strides = array<i32>} : memref<576x256xbf16, #tpu.memory_space<vmem>>, vector<16x256xbf16>,
    %43 = vector.extract_strided_slice %26 {offsets = [0, 34], sizes = [16, 256], strides = [1, 1]} : vector<16x384xbf16> to vector<16x256xbf16>
    %c512 = arith.constant 512 : index
    %c0_25 = arith.constant 0 : index
    %44 = vector.load %arg8[%c512, %c0_25] : memref<576x256xbf16, #tpu.memory_space<vmem>>, vector<16x256xbf16>
    tpu.vector_store %arg8[%c512, %c0_25], %43 {strides = array<i32>} : memref<576x256xbf16, #tpu.memory_space<vmem>>, vector<16x256xbf16>,
    %c64_26 = arith.constant 64 : index
    %c0_27 = arith.constant 0 : index
    %45 = vector.load %arg2[%c64_26, %c0_27] : memref<256x64xbf16, #tpu.memory_space<vmem>>, vector<64x64xbf16>
    %cst_28 = arith.constant dense<0.000000e+00> : vector<64x384xf32>
    %46 = tpu.matmul %45, %12, %cst_28 {dimension_numbers = #tpu.dot_dimension_numbers<[1], [0], [0], [1], [0, 0, 1, 1], [], []>} : vector<64x64xbf16>, vector<64x384xbf16>, vector<64x384xf32> -> vector<64x384xf32>
    %47 = vector.extract_strided_slice %46 {offsets = [0, 0], sizes = [16, 384], strides = [1, 1]} : vector<64x384xf32> to vector<16x384xf32>
    %48 = vector.extract_strided_slice %46 {offsets = [16, 0], sizes = [16, 384], strides = [1, 1]} : vector<64x384xf32> to vector<16x384xf32>
    %49 = arith.maximumf %47, %48 : vector<16x384xf32>
    %50 = vector.extract_strided_slice %46 {offsets = [32, 0], sizes = [16, 384], strides = [1, 1]} : vector<64x384xf32> to vector<16x384xf32>
    %51 = vector.extract_strided_slice %46 {offsets = [48, 0], sizes = [16, 384], strides = [1, 1]} : vector<64x384xf32> to vector<16x384xf32>
    %52 = arith.maximumf %50, %51 : vector<16x384xf32>
    %53 = arith.maximumf %49, %52 : vector<16x384xf32>
    %54 = vector.broadcast %0 : vector<16x1xf32> to vector<16x384xf32>
    %55 = arith.addf %53, %54 : vector<16x384xf32>
    %cst_29 = arith.constant 0.000000e+00 : f32
    %56 = vector.broadcast %cst_29 : f32 to vector<16x384xf32>
    %57 = arith.maximumf %55, %56 : vector<16x384xf32>
    %58 = arith.truncf %57 : vector<16x384xf32> to vector<16x384xbf16>
    %59 = vector.extract_strided_slice %58 {offsets = [0, 0], sizes = [16, 256], strides = [1, 1]} : vector<16x384xbf16> to vector<16x256xbf16>
    %c16_30 = arith.constant 16 : index
    %c0_31 = arith.constant 0 : index
    %60 = vector.load %arg8[%c16_30, %c0_31] : memref<576x256xbf16, #tpu.memory_space<vmem>>, vector<16x256xbf16>
    tpu.vector_store %arg8[%c16_30, %c0_31], %59 {strides = array<i32>} : memref<576x256xbf16, #tpu.memory_space<vmem>>, vector<16x256xbf16>,
    %61 = vector.extract_strided_slice %58 {offsets = [0, 1], sizes = [16, 256], strides = [1, 1]} : vector<16x384xbf16> to vector<16x256xbf16>
    %c80 = arith.constant 80 : index
    %c0_32 = arith.constant 0 : index
    %62 = vector.load %arg8[%c80, %c0_32] : memref<576x256xbf16, #tpu.memory_space<vmem>>, vector<16x256xbf16>
    tpu.vector_store %arg8[%c80, %c0_32], %61 {strides = array<i32>} : memref<576x256xbf16, #tpu.memory_space<vmem>>, vector<16x256xbf16>,
    %63 = vector.extract_strided_slice %58 {offsets = [0, 2], sizes = [16, 256], strides = [1, 1]} : vector<16x384xbf16> to vector<16x256xbf16>
    %c144 = arith.constant 144 : index
    %c0_33 = arith.constant 0 : index
    %64 = vector.load %arg8[%c144, %c0_33] : memref<576x256xbf16, #tpu.memory_space<vmem>>, vector<16x256xbf16>
    tpu.vector_store %arg8[%c144, %c0_33], %63 {strides = array<i32>} : memref<576x256xbf16, #tpu.memory_space<vmem>>, vector<16x256xbf16>,
    %65 = vector.extract_strided_slice %58 {offsets = [0, 16], sizes = [16, 256], strides = [1, 1]} : vector<16x384xbf16> to vector<16x256xbf16>
    %c208 = arith.constant 208 : index
    %c0_34 = arith.constant 0 : index
    %66 = vector.load %arg8[%c208, %c0_34] : memref<576x256xbf16, #tpu.memory_space<vmem>>, vector<16x256xbf16>
    tpu.vector_store %arg8[%c208, %c0_34], %65 {strides = array<i32>} : memref<576x256xbf16, #tpu.memory_space<vmem>>, vector<16x256xbf16>,
    %67 = vector.extract_strided_slice %58 {offsets = [0, 17], sizes = [16, 256], strides = [1, 1]} : vector<16x384xbf16> to vector<16x256xbf16>
    %c272 = arith.constant 272 : index
    %c0_35 = arith.constant 0 : index
    %68 = vector.load %arg8[%c272, %c0_35] : memref<576x256xbf16, #tpu.memory_space<vmem>>, vector<16x256xbf16>
    tpu.vector_store %arg8[%c272, %c0_35], %67 {strides = array<i32>} : memref<576x256xbf16, #tpu.memory_space<vmem>>, vector<16x256xbf16>,
    %69 = vector.extract_strided_slice %58 {offsets = [0, 18], sizes = [16, 256], strides = [1, 1]} : vector<16x384xbf16> to vector<16x256xbf16>
    %c336 = arith.constant 336 : index
    %c0_36 = arith.constant 0 : index
    %70 = vector.load %arg8[%c336, %c0_36] : memref<576x256xbf16, #tpu.memory_space<vmem>>, vector<16x256xbf16>
    tpu.vector_store %arg8[%c336, %c0_36], %69 {strides = array<i32>} : memref<576x256xbf16, #tpu.memory_space<vmem>>, vector<16x256xbf16>,
    %71 = vector.extract_strided_slice %58 {offsets = [0, 32], sizes = [16, 256], strides = [1, 1]} : vector<16x384xbf16> to vector<16x256xbf16>
    %c400 = arith.constant 400 : index
    %c0_37 = arith.constant 0 : index
    %72 = vector.load %arg8[%c400, %c0_37] : memref<576x256xbf16, #tpu.memory_space<vmem>>, vector<16x256xbf16>
    tpu.vector_store %arg8[%c400, %c0_37], %71 {strides = array<i32>} : memref<576x256xbf16, #tpu.memory_space<vmem>>, vector<16x256xbf16>,
    %73 = vector.extract_strided_slice %58 {offsets = [0, 33], sizes = [16, 256], strides = [1, 1]} : vector<16x384xbf16> to vector<16x256xbf16>
    %c464 = arith.constant 464 : index
    %c0_38 = arith.constant 0 : index
    %74 = vector.load %arg8[%c464, %c0_38] : memref<576x256xbf16, #tpu.memory_space<vmem>>, vector<16x256xbf16>
    tpu.vector_store %arg8[%c464, %c0_38], %73 {strides = array<i32>} : memref<576x256xbf16, #tpu.memory_space<vmem>>, vector<16x256xbf16>,
    %75 = vector.extract_strided_slice %58 {offsets = [0, 34], sizes = [16, 256], strides = [1, 1]} : vector<16x384xbf16> to vector<16x256xbf16>
    %c528 = arith.constant 528 : index
    %c0_39 = arith.constant 0 : index
    %76 = vector.load %arg8[%c528, %c0_39] : memref<576x256xbf16, #tpu.memory_space<vmem>>, vector<16x256xbf16>
    tpu.vector_store %arg8[%c528, %c0_39], %75 {strides = array<i32>} : memref<576x256xbf16, #tpu.memory_space<vmem>>, vector<16x256xbf16>,
    %c128_40 = arith.constant 128 : index
    %c0_41 = arith.constant 0 : index
    %77 = vector.load %arg2[%c128_40, %c0_41] : memref<256x64xbf16, #tpu.memory_space<vmem>>, vector<64x64xbf16>
    %cst_42 = arith.constant dense<0.000000e+00> : vector<64x384xf32>
    %78 = tpu.matmul %77, %12, %cst_42 {dimension_numbers = #tpu.dot_dimension_numbers<[1], [0], [0], [1], [0, 0, 1, 1], [], []>} : vector<64x64xbf16>, vector<64x384xbf16>, vector<64x384xf32> -> vector<64x384xf32>
    %79 = vector.extract_strided_slice %78 {offsets = [0, 0], sizes = [16, 384], strides = [1, 1]} : vector<64x384xf32> to vector<16x384xf32>
    %80 = vector.extract_strided_slice %78 {offsets = [16, 0], sizes = [16, 384], strides = [1, 1]} : vector<64x384xf32> to vector<16x384xf32>
    %81 = arith.maximumf %79, %80 : vector<16x384xf32>
    %82 = vector.extract_strided_slice %78 {offsets = [32, 0], sizes = [16, 384], strides = [1, 1]} : vector<64x384xf32> to vector<16x384xf32>
    %83 = vector.extract_strided_slice %78 {offsets = [48, 0], sizes = [16, 384], strides = [1, 1]} : vector<64x384xf32> to vector<16x384xf32>
    %84 = arith.maximumf %82, %83 : vector<16x384xf32>
    %85 = arith.maximumf %81, %84 : vector<16x384xf32>
    %86 = vector.broadcast %0 : vector<16x1xf32> to vector<16x384xf32>
    %87 = arith.addf %85, %86 : vector<16x384xf32>
    %cst_43 = arith.constant 0.000000e+00 : f32
    %88 = vector.broadcast %cst_43 : f32 to vector<16x384xf32>
    %89 = arith.maximumf %87, %88 : vector<16x384xf32>
    %90 = arith.truncf %89 : vector<16x384xf32> to vector<16x384xbf16>
    %91 = vector.extract_strided_slice %90 {offsets = [0, 0], sizes = [16, 256], strides = [1, 1]} : vector<16x384xbf16> to vector<16x256xbf16>
    %c32_44 = arith.constant 32 : index
    %c0_45 = arith.constant 0 : index
    %92 = vector.load %arg8[%c32_44, %c0_45] : memref<576x256xbf16, #tpu.memory_space<vmem>>, vector<16x256xbf16>
    tpu.vector_store %arg8[%c32_44, %c0_45], %91 {strides = array<i32>} : memref<576x256xbf16, #tpu.memory_space<vmem>>, vector<16x256xbf16>,
    %93 = vector.extract_strided_slice %90 {offsets = [0, 1], sizes = [16, 256], strides = [1, 1]} : vector<16x384xbf16> to vector<16x256xbf16>
    %c96 = arith.constant 96 : index
    %c0_46 = arith.constant 0 : index
    %94 = vector.load %arg8[%c96, %c0_46] : memref<576x256xbf16, #tpu.memory_space<vmem>>, vector<16x256xbf16>
    tpu.vector_store %arg8[%c96, %c0_46], %93 {strides = array<i32>} : memref<576x256xbf16, #tpu.memory_space<vmem>>, vector<16x256xbf16>,
    %95 = vector.extract_strided_slice %90 {offsets = [0, 2], sizes = [16, 256], strides = [1, 1]} : vector<16x384xbf16> to vector<16x256xbf16>
    %c160 = arith.constant 160 : index
    %c0_47 = arith.constant 0 : index
    %96 = vector.load %arg8[%c160, %c0_47] : memref<576x256xbf16, #tpu.memory_space<vmem>>, vector<16x256xbf16>
    tpu.vector_store %arg8[%c160, %c0_47], %95 {strides = array<i32>} : memref<576x256xbf16, #tpu.memory_space<vmem>>, vector<16x256xbf16>,
    %97 = vector.extract_strided_slice %90 {offsets = [0, 16], sizes = [16, 256], strides = [1, 1]} : vector<16x384xbf16> to vector<16x256xbf16>
    %c224 = arith.constant 224 : index
    %c0_48 = arith.constant 0 : index
    %98 = vector.load %arg8[%c224, %c0_48] : memref<576x256xbf16, #tpu.memory_space<vmem>>, vector<16x256xbf16>
    tpu.vector_store %arg8[%c224, %c0_48], %97 {strides = array<i32>} : memref<576x256xbf16, #tpu.memory_space<vmem>>, vector<16x256xbf16>,
    %99 = vector.extract_strided_slice %90 {offsets = [0, 17], sizes = [16, 256], strides = [1, 1]} : vector<16x384xbf16> to vector<16x256xbf16>
    %c288 = arith.constant 288 : index
    %c0_49 = arith.constant 0 : index
    %100 = vector.load %arg8[%c288, %c0_49] : memref<576x256xbf16, #tpu.memory_space<vmem>>, vector<16x256xbf16>
    tpu.vector_store %arg8[%c288, %c0_49], %99 {strides = array<i32>} : memref<576x256xbf16, #tpu.memory_space<vmem>>, vector<16x256xbf16>,
    %101 = vector.extract_strided_slice %90 {offsets = [0, 18], sizes = [16, 256], strides = [1, 1]} : vector<16x384xbf16> to vector<16x256xbf16>
    %c352 = arith.constant 352 : index
    %c0_50 = arith.constant 0 : index
    %102 = vector.load %arg8[%c352, %c0_50] : memref<576x256xbf16, #tpu.memory_space<vmem>>, vector<16x256xbf16>
    tpu.vector_store %arg8[%c352, %c0_50], %101 {strides = array<i32>} : memref<576x256xbf16, #tpu.memory_space<vmem>>, vector<16x256xbf16>,
    %103 = vector.extract_strided_slice %90 {offsets = [0, 32], sizes = [16, 256], strides = [1, 1]} : vector<16x384xbf16> to vector<16x256xbf16>
    %c416 = arith.constant 416 : index
    %c0_51 = arith.constant 0 : index
    %104 = vector.load %arg8[%c416, %c0_51] : memref<576x256xbf16, #tpu.memory_space<vmem>>, vector<16x256xbf16>
    tpu.vector_store %arg8[%c416, %c0_51], %103 {strides = array<i32>} : memref<576x256xbf16, #tpu.memory_space<vmem>>, vector<16x256xbf16>,
    %105 = vector.extract_strided_slice %90 {offsets = [0, 33], sizes = [16, 256], strides = [1, 1]} : vector<16x384xbf16> to vector<16x256xbf16>
    %c480 = arith.constant 480 : index
    %c0_52 = arith.constant 0 : index
    %106 = vector.load %arg8[%c480, %c0_52] : memref<576x256xbf16, #tpu.memory_space<vmem>>, vector<16x256xbf16>
    tpu.vector_store %arg8[%c480, %c0_52], %105 {strides = array<i32>} : memref<576x256xbf16, #tpu.memory_space<vmem>>, vector<16x256xbf16>,
    %107 = vector.extract_strided_slice %90 {offsets = [0, 34], sizes = [16, 256], strides = [1, 1]} : vector<16x384xbf16> to vector<16x256xbf16>
    %c544 = arith.constant 544 : index
    %c0_53 = arith.constant 0 : index
    %108 = vector.load %arg8[%c544, %c0_53] : memref<576x256xbf16, #tpu.memory_space<vmem>>, vector<16x256xbf16>
    tpu.vector_store %arg8[%c544, %c0_53], %107 {strides = array<i32>} : memref<576x256xbf16, #tpu.memory_space<vmem>>, vector<16x256xbf16>,
    %c192_54 = arith.constant 192 : index
    %c0_55 = arith.constant 0 : index
    %109 = vector.load %arg2[%c192_54, %c0_55] : memref<256x64xbf16, #tpu.memory_space<vmem>>, vector<64x64xbf16>
    %cst_56 = arith.constant dense<0.000000e+00> : vector<64x384xf32>
    %110 = tpu.matmul %109, %12, %cst_56 {dimension_numbers = #tpu.dot_dimension_numbers<[1], [0], [0], [1], [0, 0, 1, 1], [], []>} : vector<64x64xbf16>, vector<64x384xbf16>, vector<64x384xf32> -> vector<64x384xf32>
    %111 = vector.extract_strided_slice %110 {offsets = [0, 0], sizes = [16, 384], strides = [1, 1]} : vector<64x384xf32> to vector<16x384xf32>
    %112 = vector.extract_strided_slice %110 {offsets = [16, 0], sizes = [16, 384], strides = [1, 1]} : vector<64x384xf32> to vector<16x384xf32>
    %113 = arith.maximumf %111, %112 : vector<16x384xf32>
    %114 = vector.extract_strided_slice %110 {offsets = [32, 0], sizes = [16, 384], strides = [1, 1]} : vector<64x384xf32> to vector<16x384xf32>
    %115 = vector.extract_strided_slice %110 {offsets = [48, 0], sizes = [16, 384], strides = [1, 1]} : vector<64x384xf32> to vector<16x384xf32>
    %116 = arith.maximumf %114, %115 : vector<16x384xf32>
    %117 = arith.maximumf %113, %116 : vector<16x384xf32>
    %118 = vector.broadcast %0 : vector<16x1xf32> to vector<16x384xf32>
    %119 = arith.addf %117, %118 : vector<16x384xf32>
    %cst_57 = arith.constant 0.000000e+00 : f32
    %120 = vector.broadcast %cst_57 : f32 to vector<16x384xf32>
    %121 = arith.maximumf %119, %120 : vector<16x384xf32>
    %122 = arith.truncf %121 : vector<16x384xf32> to vector<16x384xbf16>
    %123 = vector.extract_strided_slice %122 {offsets = [0, 0], sizes = [16, 256], strides = [1, 1]} : vector<16x384xbf16> to vector<16x256xbf16>
    %c48_58 = arith.constant 48 : index
    %c0_59 = arith.constant 0 : index
    %124 = vector.load %arg8[%c48_58, %c0_59] : memref<576x256xbf16, #tpu.memory_space<vmem>>, vector<16x256xbf16>
    tpu.vector_store %arg8[%c48_58, %c0_59], %123 {strides = array<i32>} : memref<576x256xbf16, #tpu.memory_space<vmem>>, vector<16x256xbf16>,
    %125 = vector.extract_strided_slice %122 {offsets = [0, 1], sizes = [16, 256], strides = [1, 1]} : vector<16x384xbf16> to vector<16x256xbf16>
    %c112 = arith.constant 112 : index
    %c0_60 = arith.constant 0 : index
    %126 = vector.load %arg8[%c112, %c0_60] : memref<576x256xbf16, #tpu.memory_space<vmem>>, vector<16x256xbf16>
    tpu.vector_store %arg8[%c112, %c0_60], %125 {strides = array<i32>} : memref<576x256xbf16, #tpu.memory_space<vmem>>, vector<16x256xbf16>,
    %127 = vector.extract_strided_slice %122 {offsets = [0, 2], sizes = [16, 256], strides = [1, 1]} : vector<16x384xbf16> to vector<16x256xbf16>
    %c176 = arith.constant 176 : index
    %c0_61 = arith.constant 0 : index
    %128 = vector.load %arg8[%c176, %c0_61] : memref<576x256xbf16, #tpu.memory_space<vmem>>, vector<16x256xbf16>
    tpu.vector_store %arg8[%c176, %c0_61], %127 {strides = array<i32>} : memref<576x256xbf16, #tpu.memory_space<vmem>>, vector<16x256xbf16>,
    %129 = vector.extract_strided_slice %122 {offsets = [0, 16], sizes = [16, 256], strides = [1, 1]} : vector<16x384xbf16> to vector<16x256xbf16>
    %c240 = arith.constant 240 : index
    %c0_62 = arith.constant 0 : index
    %130 = vector.load %arg8[%c240, %c0_62] : memref<576x256xbf16, #tpu.memory_space<vmem>>, vector<16x256xbf16>
    tpu.vector_store %arg8[%c240, %c0_62], %129 {strides = array<i32>} : memref<576x256xbf16, #tpu.memory_space<vmem>>, vector<16x256xbf16>,
    %131 = vector.extract_strided_slice %122 {offsets = [0, 17], sizes = [16, 256], strides = [1, 1]} : vector<16x384xbf16> to vector<16x256xbf16>
    %c304 = arith.constant 304 : index
    %c0_63 = arith.constant 0 : index
    %132 = vector.load %arg8[%c304, %c0_63] : memref<576x256xbf16, #tpu.memory_space<vmem>>, vector<16x256xbf16>
    tpu.vector_store %arg8[%c304, %c0_63], %131 {strides = array<i32>} : memref<576x256xbf16, #tpu.memory_space<vmem>>, vector<16x256xbf16>,
    %133 = vector.extract_strided_slice %122 {offsets = [0, 18], sizes = [16, 256], strides = [1, 1]} : vector<16x384xbf16> to vector<16x256xbf16>
    %c368 = arith.constant 368 : index
    %c0_64 = arith.constant 0 : index
    %134 = vector.load %arg8[%c368, %c0_64] : memref<576x256xbf16, #tpu.memory_space<vmem>>, vector<16x256xbf16>
    tpu.vector_store %arg8[%c368, %c0_64], %133 {strides = array<i32>} : memref<576x256xbf16, #tpu.memory_space<vmem>>, vector<16x256xbf16>,
    %135 = vector.extract_strided_slice %122 {offsets = [0, 32], sizes = [16, 256], strides = [1, 1]} : vector<16x384xbf16> to vector<16x256xbf16>
    %c432 = arith.constant 432 : index
    %c0_65 = arith.constant 0 : index
    %136 = vector.load %arg8[%c432, %c0_65] : memref<576x256xbf16, #tpu.memory_space<vmem>>, vector<16x256xbf16>
    tpu.vector_store %arg8[%c432, %c0_65], %135 {strides = array<i32>} : memref<576x256xbf16, #tpu.memory_space<vmem>>, vector<16x256xbf16>,
    %137 = vector.extract_strided_slice %122 {offsets = [0, 33], sizes = [16, 256], strides = [1, 1]} : vector<16x384xbf16> to vector<16x256xbf16>
    %c496 = arith.constant 496 : index
    %c0_66 = arith.constant 0 : index
    %138 = vector.load %arg8[%c496, %c0_66] : memref<576x256xbf16, #tpu.memory_space<vmem>>, vector<16x256xbf16>
    tpu.vector_store %arg8[%c496, %c0_66], %137 {strides = array<i32>} : memref<576x256xbf16, #tpu.memory_space<vmem>>, vector<16x256xbf16>,
    %139 = vector.extract_strided_slice %122 {offsets = [0, 34], sizes = [16, 256], strides = [1, 1]} : vector<16x384xbf16> to vector<16x256xbf16>
    %c560 = arith.constant 560 : index
    %c0_67 = arith.constant 0 : index
    %140 = vector.load %arg8[%c560, %c0_67] : memref<576x256xbf16, #tpu.memory_space<vmem>>, vector<16x256xbf16>
    tpu.vector_store %arg8[%c560, %c0_67], %139 {strides = array<i32>} : memref<576x256xbf16, #tpu.memory_space<vmem>>, vector<16x256xbf16>,
    %c0_68 = arith.constant 0 : index
    %c0_69 = arith.constant 0 : index
    %141 = vector.load %arg4[%c0_68, %c0_69] : memref<64x576xbf16, #tpu.memory_space<vmem>>, vector<64x576xbf16>
    %c0_70 = arith.constant 0 : index
    %c0_71 = arith.constant 0 : index
    %142 = vector.load %arg8[%c0_70, %c0_71] : memref<576x256xbf16, #tpu.memory_space<vmem>>, vector<576x256xbf16>
    %cst_72 = arith.constant dense<0.000000e+00> : vector<64x256xf32>
    %143 = tpu.matmul %141, %142, %cst_72 {dimension_numbers = #tpu.dot_dimension_numbers<[1], [0], [0], [1], [0, 0, 1, 1], [], []>} : vector<64x576xbf16>, vector<576x256xbf16>, vector<64x256xf32> -> vector<64x256xf32>
    %144 = vector.extract_strided_slice %143 {offsets = [0, 0], sizes = [16, 256], strides = [1, 1]} : vector<64x256xf32> to vector<16x256xf32>
    %145 = vector.extract_strided_slice %143 {offsets = [16, 0], sizes = [16, 256], strides = [1, 1]} : vector<64x256xf32> to vector<16x256xf32>
    %146 = arith.maximumf %144, %145 : vector<16x256xf32>
    %147 = vector.extract_strided_slice %143 {offsets = [32, 0], sizes = [16, 256], strides = [1, 1]} : vector<64x256xf32> to vector<16x256xf32>
    %148 = vector.extract_strided_slice %143 {offsets = [48, 0], sizes = [16, 256], strides = [1, 1]} : vector<64x256xf32> to vector<16x256xf32>
    %149 = arith.maximumf %147, %148 : vector<16x256xf32>
    %150 = arith.maximumf %146, %149 : vector<16x256xf32>
    %151 = vector.broadcast %1 : vector<16x1xf32> to vector<16x256xf32>
    %152 = arith.addf %150, %151 : vector<16x256xf32>
    %cst_73 = arith.constant 0.000000e+00 : f32
    %153 = vector.broadcast %cst_73 : f32 to vector<16x256xf32>
    %154 = arith.maximumf %152, %153 : vector<16x256xf32>
    %155 = arith.truncf %154 : vector<16x256xf32> to vector<16x256xbf16>
    %c0_74 = arith.constant 0 : index
    %c0_75 = arith.constant 0 : index
    %c0_76 = arith.constant 0 : index
    %156 = vector.load %arg6[%c0_74, %c0_75, %c0_76] : memref<1x16x256xbf16, #tpu.memory_space<vmem>>, vector<1x16x256xbf16>
    %157 = vector.shape_cast %156 : vector<1x16x256xbf16> to vector<16x256xbf16>
    %158 = vector.shape_cast %155 : vector<16x256xbf16> to vector<1x16x256xbf16>
    tpu.vector_store %arg6[%c0_74, %c0_75, %c0_76], %158 {strides = array<i32>} : memref<1x16x256xbf16, #tpu.memory_space<vmem>>, vector<1x16x256xbf16>,
    return
  }
  func.func @transform_0(%arg0: i32) -> (i32, i32, i32) {
    %c0_i32 = arith.constant 0 : i32
    %c0_i32_0 = arith.constant 0 : i32
    %c0_i32_1 = arith.constant 0 : i32
    return %arg0, %c0_i32, %c0_i32_0 : i32, i32, i32
  }
  func.func @transform_1(%arg0: i32) -> (i32, i32) {
    %c0_i32 = arith.constant 0 : i32
    %c0_i32_0 = arith.constant 0 : i32
    %c0_i32_1 = arith.constant 0 : i32
    return %c0_i32, %c0_i32_0 : i32, i32
  }
  func.func @transform_2(%arg0: i32) -> (i32, i32) {
    %c0_i32 = arith.constant 0 : i32
    %c0_i32_0 = arith.constant 0 : i32
    %c0_i32_1 = arith.constant 0 : i32
    return %c0_i32, %c0_i32_0 : i32, i32
  }
  func.func @transform_3(%arg0: i32) -> (i32, i32) {
    %c0_i32 = arith.constant 0 : i32
    %c0_i32_0 = arith.constant 0 : i32
    %c0_i32_1 = arith.constant 0 : i32
    return %c0_i32, %c0_i32_0 : i32, i32
  }
  func.func @transform_4(%arg0: i32) -> (i32, i32) {
    %c0_i32 = arith.constant 0 : i32
    %c0_i32_0 = arith.constant 0 : i32
    %c0_i32_1 = arith.constant 0 : i32
    return %c0_i32, %c0_i32_0 : i32, i32
  }
  func.func @transform_5(%arg0: i32) -> (i32, i32, i32) {
    %c0_i32 = arith.constant 0 : i32
    %c0_i32_0 = arith.constant 0 : i32
    %c0_i32_1 = arith.constant 0 : i32
    return %arg0, %c0_i32, %c0_i32_0 : i32, i32, i32
  }
}

module attributes {stable_mosaic.version = 11 : i64} {
  func.func @_fc_tail_kernel(%arg0: i32, %arg1: memref<2x4096xbf16, #tpu.memory_space<vmem>>, %arg2: memref<4096x128xbf16, #tpu.memory_space<vmem>>, %arg3: memref<1x128xf32, #tpu.memory_space<vmem>>, %arg4: memref<128x128xbf16, #tpu.memory_space<vmem>>, %arg5: memref<1x128xf32, #tpu.memory_space<vmem>>, %arg6: memref<2x128xf32, #tpu.memory_space<vmem>>) attributes {dimension_semantics = [#tpu.dimension_semantics<parallel>], iteration_bounds = array<i64: 1>, scalar_prefetch = 0 : i64, scratch_operands = 0 : i64, tpu.core_type = #tpu.core_type<tc>, window_params = [{transform_indices = @transform_0, window_bounds = array<i64: 2, 4096>}, {pipeline_mode = #tpu.pipeline_mode<synchronous>, transform_indices = @transform_1, window_bounds = array<i64: 4096, 128>}, {pipeline_mode = #tpu.pipeline_mode<synchronous>, transform_indices = @transform_2, window_bounds = array<i64: 1, 128>}, {pipeline_mode = #tpu.pipeline_mode<synchronous>, transform_indices = @transform_3, window_bounds = array<i64: 128, 128>}, {pipeline_mode = #tpu.pipeline_mode<synchronous>, transform_indices = @transform_4, window_bounds = array<i64: 1, 128>}, {transform_indices = @transform_5, window_bounds = array<i64: 2, 128>}]} {
    %c0 = arith.constant 0 : index
    %c0_0 = arith.constant 0 : index
    %0 = vector.load %arg1[%c0, %c0_0] : memref<2x4096xbf16, #tpu.memory_space<vmem>>, vector<2x4096xbf16>
    %c0_1 = arith.constant 0 : index
    %c0_2 = arith.constant 0 : index
    %1 = vector.load %arg2[%c0_1, %c0_2] : memref<4096x128xbf16, #tpu.memory_space<vmem>>, vector<4096x128xbf16>
    %cst = arith.constant dense<0.000000e+00> : vector<2x128xf32>
    %2 = tpu.matmul %0, %1, %cst {dimension_numbers = #tpu.dot_dimension_numbers<[1], [0], [0], [1], [0, 0, 1, 1], [], []>} : vector<2x4096xbf16>, vector<4096x128xbf16>, vector<2x128xf32> -> vector<2x128xf32>
    %c0_3 = arith.constant 0 : index
    %c0_4 = arith.constant 0 : index
    %3 = vector.load %arg3[%c0_3, %c0_4] : memref<1x128xf32, #tpu.memory_space<vmem>>, vector<1x128xf32>
    %4 = vector.broadcast %3 : vector<1x128xf32> to vector<2x128xf32>
    %5 = arith.addf %2, %4 : vector<2x128xf32>
    %cst_5 = arith.constant 0.000000e+00 : f32
    %6 = vector.broadcast %cst_5 : f32 to vector<2x128xf32>
    %7 = arith.maximumf %5, %6 : vector<2x128xf32>
    %8 = arith.truncf %7 : vector<2x128xf32> to vector<2x128xbf16>
    %c0_6 = arith.constant 0 : index
    %c0_7 = arith.constant 0 : index
    %9 = vector.load %arg4[%c0_6, %c0_7] : memref<128x128xbf16, #tpu.memory_space<vmem>>, vector<128x128xbf16>
    %cst_8 = arith.constant dense<0.000000e+00> : vector<2x128xf32>
    %10 = tpu.matmul %8, %9, %cst_8 {dimension_numbers = #tpu.dot_dimension_numbers<[1], [0], [0], [1], [0, 0, 1, 1], [], []>} : vector<2x128xbf16>, vector<128x128xbf16>, vector<2x128xf32> -> vector<2x128xf32>
    %c0_9 = arith.constant 0 : index
    %c0_10 = arith.constant 0 : index
    %11 = vector.load %arg5[%c0_9, %c0_10] : memref<1x128xf32, #tpu.memory_space<vmem>>, vector<1x128xf32>
    %12 = vector.broadcast %11 : vector<1x128xf32> to vector<2x128xf32>
    %13 = arith.addf %10, %12 : vector<2x128xf32>
    %cst_11 = arith.constant dense<0xFF800000> : vector<2xf32>
    %14 = vector.multi_reduction <maximumf>, %13, %cst_11 [1] : vector<2x128xf32> to vector<2xf32>
    %15 = vector.shape_cast %14 : vector<2xf32> to vector<2x1xf32>
    %16 = vector.broadcast %15 : vector<2x1xf32> to vector<2x128xf32>
    %17 = arith.subf %13, %16 : vector<2x128xf32>
    %18 = math.exp %17 : vector<2x128xf32>
    %cst_12 = arith.constant dense<0.000000e+00> : vector<2xf32>
    %19 = vector.multi_reduction <add>, %18, %cst_12 [1] : vector<2x128xf32> to vector<2xf32>
    %20 = vector.shape_cast %19 : vector<2xf32> to vector<2x1xf32>
    %21 = math.log %20 : vector<2x1xf32>
    %22 = arith.addf %21, %15 : vector<2x1xf32>
    %23 = vector.broadcast %22 : vector<2x1xf32> to vector<2x128xf32>
    %24 = arith.subf %13, %23 : vector<2x128xf32>
    %c0_13 = arith.constant 0 : index
    %c0_14 = arith.constant 0 : index
    %25 = vector.load %arg6[%c0_13, %c0_14] : memref<2x128xf32, #tpu.memory_space<vmem>>, vector<2x128xf32>
    tpu.vector_store %arg6[%c0_13, %c0_14], %24 {strides = array<i32>} : memref<2x128xf32, #tpu.memory_space<vmem>>, vector<2x128xf32>,
    return
  }
  func.func @transform_0(%arg0: i32) -> (i32, i32) {
    %c0_i32 = arith.constant 0 : i32
    %c0_i32_0 = arith.constant 0 : i32
    return %arg0, %c0_i32 : i32, i32
  }
  func.func @transform_1(%arg0: i32) -> (i32, i32) {
    %c0_i32 = arith.constant 0 : i32
    %c0_i32_0 = arith.constant 0 : i32
    %c0_i32_1 = arith.constant 0 : i32
    return %c0_i32, %c0_i32_0 : i32, i32
  }
  func.func @transform_2(%arg0: i32) -> (i32, i32) {
    %c0_i32 = arith.constant 0 : i32
    %c0_i32_0 = arith.constant 0 : i32
    %c0_i32_1 = arith.constant 0 : i32
    return %c0_i32, %c0_i32_0 : i32, i32
  }
  func.func @transform_3(%arg0: i32) -> (i32, i32) {
    %c0_i32 = arith.constant 0 : i32
    %c0_i32_0 = arith.constant 0 : i32
    %c0_i32_1 = arith.constant 0 : i32
    return %c0_i32, %c0_i32_0 : i32, i32
  }
  func.func @transform_4(%arg0: i32) -> (i32, i32) {
    %c0_i32 = arith.constant 0 : i32
    %c0_i32_0 = arith.constant 0 : i32
    %c0_i32_1 = arith.constant 0 : i32
    return %c0_i32, %c0_i32_0 : i32, i32
  }
  func.func @transform_5(%arg0: i32) -> (i32, i32) {
    %c0_i32 = arith.constant 0 : i32
    %c0_i32_0 = arith.constant 0 : i32
    return %arg0, %c0_i32 : i32, i32
  }
}

</mosaic_0001>

<llo_original>
// kernel: net_forward.2
$region0: #{net_forward.2}
  #allocation0 [shape = 'u32[]', space=smem, size = 0x4, offset = 0x4, fixed_abs, tag = 'smem constant byte address 0x4 - core index']
  #allocation1 [shape = 'u32[72,128]{1,0:T(1,128)}', space=vmem, size = 0x9000, scoped, tag = 'internal scratch']
  #allocation2 [shape = 'bf16[64,384]{1,0:T(8,128)(2,1)}', space=vmem, size = 0xc000, scoped, tag = 'scratch operand']
  #allocation3 [shape = 'bf16[576,256]{1,0:T(8,128)(2,1)}', space=vmem, size = 0x48000, scoped, tag = 'scratch operand']
  %s0 = inlined_call_operand.vmem [shape: bf16[2,16,512], index: 0, kind: input, shape index: {}]
  %s1 = inlined_call_operand.vmem [shape: bf16[256,64], index: 1, kind: input, shape index: {}]
  %s2 = inlined_call_operand.vmem [shape: f32[16,1], index: 2, kind: input, shape index: {}]
  %s3 = inlined_call_operand.vmem [shape: bf16[64,576], index: 3, kind: input, shape index: {}]
  %s4 = inlined_call_operand.vmem [shape: f32[16,1], index: 4, kind: input, shape index: {}]
  %s5 = inlined_call_operand.vmem [shape: bf16[2,16,256], index: 5, kind: output, shape index: {}]
  %s6 = sld [smem:[#allocation0]]
  $region53: #{net_forward.2} parent=0
    _
  %s8 = ssub.s32 1, %s6
  %s9 = scalar_select 0, %s8, %s6
  loop: start=0, step=1, limit=4
  $region2: #{net_forward.2} parent=0 // loop_pre_header
    _
  $region3: #{net_forward.2} parent=0 // loop_header
    %s11 = sphi 0, %s15
    %p12 = scmp.ge.s32.totalorder %s11, 4
    %s21 = sphi 0, %s23
    %s24 = sphi 0, %s21
    %s25 = sphi 0, %s24
    %s41 = sphi 0, %s25
    %s45 = sphi 0, %s45
    %s47 = sphi 0, %s45
    %s48 = sphi 0, %s47
    %s62 = sphi 0, %s48
    %s66 = sphi 0, %s66
    %s68 = sphi 0, %s66
    %s69 = sphi 0, %s68
    %s83 = sphi 0, %s69
    %s87 = sphi 0, %s87
    %s89 = sphi 0, %s87
    %s90 = sphi 0, %s89
    %s104 = sphi 0, %s90
    %s108 = sphi 0, %s108
    %s110 = sphi 0, %s108
    %s111 = sphi 0, %s110
    %s125 = sphi 0, %s111
    %s131 = sphi 0, %s133
    %s134 = sphi 0, %s131
    %s135 = sphi 0, %s134
    %s151 = sphi 0, %s135
  $region4: #{net_forward.2} parent=0 // loop_header_branch
    %14 = sbr.rel (%p12) target = $region8
  $region5: #{net_forward.2} parent=0 // loop_body
    %s16 = ssub.s32 %s11, 1
    %s17 = ssub.s32 %s11, 2
    %s18 = sadd.s32 %s11, 1
    %s19 = ssub.s32 %s11, %s18
    %p20 = scmp.eq.s32.totalorder %s19, 0
    %s22 = sadd.s32 %s21, 1
    %s23 = scalar_select %p20, %s21, %s22
    %p26 = pneg %p20
    %p27 = scmp.eq.s32.totalorder %s11, 1
    %p28 = por %p26, %p27
    %p29 = scmp.ne.s32.totalorder %s21, %s24
    %p30 = scmp.eq.s32.totalorder %s11, 0
    %p31 = por %p29, %p30
    %p32 = scmp.ne.s32.totalorder %s21, %s24
    %p33 = scmp.eq.s32.totalorder %s16, 1
    %p34 = por %p32, %p33
    %p35 = scmp.ne.s32.totalorder %s24, %s25
    %p36 = scmp.eq.s32.totalorder %s16, 0
    %p37 = por %p35, %p36
    %p38 = scmp.ne.s32.totalorder %s24, %s25
    %p39 = scmp.eq.s32.totalorder %s17, 1
    %p40 = por %p38, %p39
    %p42 = scmp.ne.s32.totalorder %s25, %s41
    %p43 = scmp.eq.s32.totalorder %s17, 0
    %p44 = por %p42, %p43
    %s46 = sadd.s32 %s45, 1
    %p49 = scmp.eq.s32.totalorder %s11, 1
    %p50 = scmp.ne.s32.totalorder %s45, %s47
    %p51 = scmp.eq.s32.totalorder %s11, 0
    %p52 = por %p50, %p51
    %p53 = scmp.ne.s32.totalorder %s45, %s47
    %p54 = scmp.eq.s32.totalorder %s16, 1
    %p55 = por %p53, %p54
    %p56 = scmp.ne.s32.totalorder %s47, %s48
    %p57 = scmp.eq.s32.totalorder %s16, 0
    %p58 = por %p56, %p57
    %p59 = scmp.ne.s32.totalorder %s47, %s48
    %p60 = scmp.eq.s32.totalorder %s17, 1
    %p61 = por %p59, %p60
    %p63 = scmp.ne.s32.totalorder %s48, %s62
    %p64 = scmp.eq.s32.totalorder %s17, 0
    %p65 = por %p63, %p64
    %s67 = sadd.s32 %s66, 1
    %p70 = scmp.eq.s32.totalorder %s11, 1
    %p71 = scmp.ne.s32.totalorder %s66, %s68
    %p72 = scmp.eq.s32.totalorder %s11, 0
    %p73 = por %p71, %p72
    %p74 = scmp.ne.s32.totalorder %s66, %s68
    %p75 = scmp.eq.s32.totalorder %s16, 1
    %p76 = por %p74, %p75
    %p77 = scmp.ne.s32.totalorder %s68, %s69
    %p78 = scmp.eq.s32.totalorder %s16, 0
    %p79 = por %p77, %p78
    %p80 = scmp.ne.s32.totalorder %s68, %s69
    %p81 = scmp.eq.s32.totalorder %s17, 1
    %p82 = por %p80, %p81
    %p84 = scmp.ne.s32.totalorder %s69, %s83
    %p85 = scmp.eq.s32.totalorder %s17, 0
    %p86 = por %p84, %p85
    %s88 = sadd.s32 %s87, 1
    %p91 = scmp.eq.s32.totalorder %s11, 1
    %p92 = scmp.ne.s32.totalorder %s87, %s89
    %p93 = scmp.eq.s32.totalorder %s11, 0
    %p94 = por %p92, %p93
    %p95 = scmp.ne.s32.totalorder %s87, %s89
    %p96 = scmp.eq.s32.totalorder %s16, 1
    %p97 = por %p95, %p96
    %p98 = scmp.ne.s32.totalorder %s89, %s90
    %p99 = scmp.eq.s32.totalorder %s16, 0
    %p100 = por %p98, %p99
    %p101 = scmp.ne.s32.totalorder %s89, %s90
    %p102 = scmp.eq.s32.totalorder %s17, 1
    %p103 = por %p101, %p102
    %p105 = scmp.ne.s32.totalorder %s90, %s104
    %p106 = scmp.eq.s32.totalorder %s17, 0
    %p107 = por %p105, %p106
    %s109 = sadd.s32 %s108, 1
    %p112 = scmp.eq.s32.totalorder %s11, 1
    %p113 = scmp.ne.s32.totalorder %s108, %s110
    %p114 = scmp.eq.s32.totalorder %s11, 0
    %p115 = por %p113, %p114
    %p116 = scmp.ne.s32.totalorder %s108, %s110
    %p117 = scmp.eq.s32.totalorder %s16, 1
    %p118 = por %p116, %p117
    %p119 = scmp.ne.s32.totalorder %s110, %s111
    %p120 = scmp.eq.s32.totalorder %s16, 0
    %p121 = por %p119, %p120
    %p122 = scmp.ne.s32.totalorder %s110, %s111
    %p123 = scmp.eq.s32.totalorder %s17, 1
    %p124 = por %p122, %p123
    %p126 = scmp.ne.s32.totalorder %s111, %s125
    %p127 = scmp.eq.s32.totalorder %s17, 0
    %p128 = por %p126, %p127
    %s129 = ssub.s32 %s11, %s18
    %p130 = scmp.eq.s32.totalorder %s129, 0
    %s132 = sadd.s32 %s131, 1
    %s133 = scalar_select %p130, %s131, %s132
    %p136 = pneg %p130
    %p137 = scmp.eq.s32.totalorder %s11, 1
    %p138 = por %p136, %p137
    %p139 = scmp.ne.s32.totalorder %s131, %s134
    %p140 = scmp.eq.s32.totalorder %s11, 0
    %p141 = por %p139, %p140
    %p142 = scmp.ne.s32.totalorder %s131, %s134
    %p143 = scmp.eq.s32.totalorder %s16, 1
    %p144 = por %p142, %p143
    %p145 = scmp.ne.s32.totalorder %s134, %s135
    %p146 = scmp.eq.s32.totalorder %s16, 0
    %p147 = por %p145, %p146
    %p148 = scmp.ne.s32.totalorder %s134, %s135
    %p149 = scmp.eq.s32.totalorder %s17, 1
    %p150 = por %p148, %p149
    %p152 = scmp.ne.s32.totalorder %s135, %s151
    %p153 = scmp.eq.s32.totalorder %s17, 0
    %p154 = por %p152, %p153
    %p155 = scmp.le.s32.totalorder 1, %s11
    %p156 = scmp.lt.s32.totalorder %s11, 3
    %p157 = pnand %p155, %p156
    %p158 = pneg %p157
    // Predicated region
    $region9: #{net_forward.2} parent=5 // pred_check
      _
    $region10: #{net_forward.2} parent=5 // pred_check_branch
      %160 = sbr.rel (%p157) target = $region12
    $region11: #{net_forward.2} parent=5 // pred_region
      %s161 = ssub.s32 %s11, 1
      // Predicated region
      $region13: #{net_forward.2} parent=11 // pred_check
        %p162 = pneg %p58
      $region14: #{net_forward.2} parent=11 // pred_check_branch
        %164 = sbr.rel (%p162) target = $region16
      $region15: #{net_forward.2} parent=11 // pred_region
        _
      $region16: #{net_forward.2} parent=11 // pred_fallthru
        _
      // Predicated region
      $region17: #{net_forward.2} parent=11 // pred_check
        %p165 = pneg %p79
      $region18: #{net_forward.2} parent=11 // pred_check_branch
        %167 = sbr.rel (%p165) target = $region20
      $region19: #{net_forward.2} parent=11 // pred_region
        _
      $region20: #{net_forward.2} parent=11 // pred_fallthru
        _
      // Predicated region
      $region21: #{net_forward.2} parent=11 // pred_check
        %p168 = pneg %p100
      $region22: #{net_forward.2} parent=11 // pred_check_branch
        %170 = sbr.rel (%p168) target = $region24
      $region23: #{net_forward.2} parent=11 // pred_region
        _
      $region24: #{net_forward.2} parent=11 // pred_fallthru
        _
      // Predicated region
      $region25: #{net_forward.2} parent=11 // pred_check
        %p171 = pneg %p121
      $region26: #{net_forward.2} parent=11 // pred_check_branch
        %173 = sbr.rel (%p171) target = $region28
      $region27: #{net_forward.2} parent=11 // pred_region
        _
      $region28: #{net_forward.2} parent=11 // pred_fallthru
        _
    $region12: #{net_forward.2} parent=5 // pred_fallthru
      _
    %p174 = scmp.lt.s32.totalorder %s11, 2
    // Predicated region
    $region29: #{net_forward.2} parent=5 // pred_check
      %p175 = pneg %p174
    $region30: #{net_forward.2} parent=5 // pred_check_branch
      %177 = sbr.rel (%p175) target = $region32
    $region31: #{net_forward.2} parent=5 // pred_region
      // Predicated region
      $region33: #{net_forward.2} parent=31 // pred_check
        %p178 = pneg %p31
      $region34: #{net_forward.2} parent=31 // pred_check_branch
        %180 = sbr.rel (%p178) target = $region36
      $region35: #{net_forward.2} parent=31 // pred_region
        %p181 = scmp.lt.s32.totalorder %s11, 1
        %s182 = scalar_select %p181, %s11, 1
        %s183 = smul.addr %s182, 8
        %s184 = smul.addr %s183, 4
        %s185 = scalar_lea.vmem %s0, %s184
      $region36: #{net_forward.2} parent=31 // pred_fallthru
        _
    $region32: #{net_forward.2} parent=5 // pred_fallthru
      _
    %p186 = scmp.le.s32.totalorder 1, %s11
    %p187 = scmp.lt.s32.totalorder %s11, 3
    %p188 = pnand %p186, %p187
    %p189 = pneg %p188
    // Predicated region
    $region37: #{net_forward.2} parent=5 // pred_check
      _
    $region38: #{net_forward.2} parent=5 // pred_check_branch
      %191 = sbr.rel (%p188) target = $region40
    $region39: #{net_forward.2} parent=5 // pred_region
      %s192 = ssub.s32 %s11, 1
      %p193 = scmp.lt.s32.totalorder %s16, 1
      %s194 = scalar_select %p193, %s16, 1
      %s195 = smul.addr %s194, 8
      %s196 = smul.addr %s195, 4
      %s197 = scalar_lea.vmem %s0, %s196
      %p198 = pneg %p37
      %p199 = pneg %p34
      %p200 = pneg %p58
      %p201 = pneg %p55
      %p202 = pneg %p79
      %p203 = pneg %p76
      %p204 = pneg %p100
      %p205 = pneg %p97
      %p206 = pneg %p121
      %p207 = pneg %p118
      %p208 = pneg %p147
      %p209 = pneg %p144
      %p210 = scmp.lt.s32.totalorder %s16, 1
      %s211 = scalar_select %p210, %s16, 1
      %s212 = smul.addr %s211, 4
      %s213 = smul.addr %s212, 4
      %s214 = scalar_lea.vmem %s5, %s213
      %p215 = scmp.lt.s32.totalorder %s16, 1
      %s216 = scalar_select %p215, %s16, 1
      %s217 = smul.addr %s216, 8
      %s218 = smul.addr %s217, 4
      %s219 = scalar_lea.vmem %s0, %s218
      %p220 = scmp.lt.s32.totalorder %s16, 1
      %s221 = scalar_select %p220, %s16, 1
      %s222 = smul.addr %s221, 4
      %s223 = smul.addr %s222, 4
      %s224 = scalar_lea.vmem %s5, %s223
      %v226 = vld [vmem:[%s2] sm:$0xff]
      %v227 = vld [vmem:[%s2 + $0x8] sm:$0xff]
      %v228 = vld [vmem:[%s4] sm:$0xff]
      %v229 = vld [vmem:[%s4 + $0x8] sm:$0xff]
      %v230 = vld [vmem:[%s219] sm:$0xff]
      %v231 = vld [vmem:[%s219 + $0x8] sm:$0xff]
      %v232 = vld [vmem:[%s219 + $0x10] sm:$0xff]
      %v233 = vld [vmem:[%s219 + $0x18] sm:$0xff]
      %234 = vst [vmem:[#allocation2] sm:$0xff] %v230
      %235 = vst [vmem:[#allocation2 + $0x8] sm:$0xf] %v231
      %236 = vst [vmem:[#allocation2 + $0xc] sm:$0xff] %v232
      %237 = vst [vmem:[#allocation2 + $0x14] sm:$0xf] %v233
      %242 = vrot.lane.b32.xlu0 %v230, 127
      %v243 = vpop.permute.xlu0 %242
      %244 = vrot.lane.b32.xlu0 %v231, 127
      %v245 = vpop.permute.xlu0 %244
      %246 = vrot.lane.b32.xlu0 %v232, 127
      %v247 = vpop.permute.xlu0 %246
      %248 = vrot.lane.b32.xlu0 %v233, 127
      %v249 = vpop.permute.xlu0 %248
      %v250 = vrot.slane %v243, 4
      %v251 = vrot.slane %v245, 4
      %v252 = vrot.slane %v247, 4
      %v253 = vrot.slane %v249, 4
      %vm254 = vcmask 1043456
      %v255 = vsel %vm254, %v250, %v251
      %vm256 = vcmask 1039360
      %v257 = vsel %vm256, %v243, %v255
      %v258 = vsel %vm256, %v245, %v251
      %v259 = vsel %vm254, %v252, %v253
      %v260 = vsel %vm256, %v247, %v259
      %v261 = vsel %vm256, %v249, %v253
      %266 = vst [vmem:[#allocation2 + $0x18] sm:$0xff] %v257
      %267 = vst [vmem:[#allocation2 + $0x20] sm:$0xf] %v258
      %268 = vst [vmem:[#allocation2 + $0x24] sm:$0xff] %v260
      %269 = vst [vmem:[#allocation2 + $0x2c] sm:$0xf] %v261
      %270 = vrot.lane.b32.xlu0 %v230, 112
      %v271 = vpop.permute.xlu0 %270
      %272 = vrot.lane.b32.xlu0 %v231, 112
      %v273 = vpop.permute.xlu0 %272
      %274 = vrot.lane.b32.xlu0 %v232, 112
      %v275 = vpop.permute.xlu0 %274
      %276 = vrot.lane.b32.xlu0 %v233, 112
      %v277 = vpop.permute.xlu0 %276
      %v278 = vrot.slane %v271, 4
      %v279 = vrot.slane %v273, 4
      %v280 = vrot.slane %v275, 4
      %v281 = vrot.slane %v277, 4
      %v282 = vsel %vm254, %v278, %v279
      %vm283 = vcmask 916480
      %v284 = vsel %vm283, %v271, %v282
      %v285 = vsel %vm283, %v273, %v279
      %v286 = vsel %vm254, %v280, %v281
      %v287 = vsel %vm283, %v275, %v286
      %v288 = vsel %vm283, %v277, %v281
      %293 = vst [vmem:[#allocation2 + $0x30] sm:$0xff] %v284
      %294 = vst [vmem:[#allocation2 + $0x38] sm:$0xf] %v285
      %295 = vst [vmem:[#allocation2 + $0x3c] sm:$0xff] %v287
      %296 = vst [vmem:[#allocation2 + $0x44] sm:$0xf] %v288
      %297 = vrot.lane.b32.xlu0 %v230, 111
      %v298 = vpop.permute.xlu0 %297
      %299 = vrot.lane.b32.xlu0 %v231, 111
      %v300 = vpop.permute.xlu0 %299
      %301 = vrot.lane.b32.xlu0 %v232, 111
      %v302 = vpop.permute.xlu0 %301
      %303 = vrot.lane.b32.xlu0 %v233, 111
      %v304 = vpop.permute.xlu0 %303
      %v305 = vrot.slane %v298, 4
      %v306 = vrot.slane %v300, 4
      %v307 = vrot.slane %v302, 4
      %v308 = vrot.slane %v304, 4
      %v309 = vsel %vm254, %v305, %v306
      %vm310 = vcmask 908288
      %v311 = vsel %vm310, %v298, %v309
      %v312 = vsel %vm310, %v300, %v306
      %v313 = vsel %vm254, %v307, %v308
      %v314 = vsel %vm310, %v302, %v313
      %v315 = vsel %vm310, %v304, %v308
      %320 = vst [vmem:[#allocation2 + $0x48] sm:$0xff] %v311
      %321 = vst [vmem:[#allocation2 + $0x50] sm:$0xf] %v312
      %322 = vst [vmem:[#allocation2 + $0x54] sm:$0xff] %v314
      %323 = vst [vmem:[#allocation2 + $0x5c] sm:$0xf] %v315
      %v324 = vld [vmem:[#allocation2] sm:$0xff]
      %v325 = vld [vmem:[#allocation2 + $0x8] sm:$0xf]
      %v326 = vld [vmem:[#allocation2 + $0xc] sm:$0xff]
      %v327 = vld [vmem:[#allocation2 + $0x14] sm:$0xf]
      %v328 = vld [vmem:[#allocation2 + $0x18] sm:$0xff]
      %v329 = vld [vmem:[#allocation2 + $0x20] sm:$0xf]
      %v330 = vld [vmem:[#allocation2 + $0x24] sm:$0xff]
      %v331 = vld [vmem:[#allocation2 + $0x2c] sm:$0xf]
      %v332 = vld [vmem:[#allocation2 + $0x30] sm:$0xff]
      %v333 = vld [vmem:[#allocation2 + $0x38] sm:$0xf]
      %v334 = vld [vmem:[#allocation2 + $0x3c] sm:$0xff]
      %v335 = vld [vmem:[#allocation2 + $0x44] sm:$0xf]
      %v336 = vld [vmem:[#allocation2 + $0x48] sm:$0xff]
      %v337 = vld [vmem:[#allocation2 + $0x50] sm:$0xf]
      %v338 = vld [vmem:[#allocation2 + $0x54] sm:$0xff]
      %v339 = vld [vmem:[#allocation2 + $0x5c] sm:$0xf]
      %v340 = vld [vmem:[%s1] sm:$0xf]
      %v341 = vld [vmem:[%s1 + $0x4] sm:$0xf]
      %v342 = vld [vmem:[%s1 + $0x8] sm:$0xf]
      %v343 = vld [vmem:[%s1 + $0xc] sm:$0xf]
      %v344 = vld [vmem:[%s1 + $0x10] sm:$0xf]
      %v345 = vld [vmem:[%s1 + $0x14] sm:$0xf]
      %v346 = vld [vmem:[%s1 + $0x18] sm:$0xf]
      %v347 = vld [vmem:[%s1 + $0x1c] sm:$0xf]
      %v356 = vunpack.c.l.b16 %v340
      %v357 = vunpack.c.l.b16 %v341
      %v358 = vunpack.c.l.b16 %v342
      %v359 = vunpack.c.l.b16 %v343
      %v360 = vunpack.c.l.b16 %v344
      %v361 = vunpack.c.l.b16 %v345
      %v362 = vunpack.c.l.b16 %v346
      %v363 = vunpack.c.l.b16 %v347
      %v364 = vpack.c.b16 %v357, %v356
      %v365 = vpack.c.b16 %v359, %v358
      %v366 = vpack.c.b16 %v361, %v360
      %v367 = vpack.c.b16 %v363, %v362
      %v384 = vunpack.c.l.b16 %v324
      %v385 = vunpack.c.h.b16 %v324
      %v386 = vunpack.c.l.b16 %v325
      %v387 = vunpack.c.l.b16 %v326
      %v388 = vunpack.c.h.b16 %v326
      %v389 = vunpack.c.l.b16 %v327
      %v390 = vunpack.c.l.b16 %v328
      %v391 = vunpack.c.h.b16 %v328
      %v392 = vunpack.c.l.b16 %v329
      %v393 = vunpack.c.l.b16 %v330
      %v394 = vunpack.c.h.b16 %v330
      %v395 = vunpack.c.l.b16 %v331
      %v396 = vunpack.c.l.b16 %v332
      %v397 = vunpack.c.h.b16 %v332
      %v398 = vunpack.c.l.b16 %v333
      %v399 = vunpack.c.l.b16 %v334
      %v400 = vunpack.c.h.b16 %v334
      %v401 = vunpack.c.l.b16 %v335
      %v402 = vunpack.c.l.b16 %v336
      %v403 = vunpack.c.h.b16 %v336
      %v404 = vunpack.c.l.b16 %v337
      %v405 = vunpack.c.l.b16 %v338
      %v406 = vunpack.c.h.b16 %v338
      %v407 = vunpack.c.l.b16 %v339
      %v408 = vpack.c.b16 %v387, %v384
      %v409 = vpack.c.b16 %v388, %v385
      %v410 = vpack.c.b16 %v389, %v386
      %v411 = vpack.c.b16 %v393, %v390
      %v412 = vpack.c.b16 %v394, %v391
      %v413 = vpack.c.b16 %v395, %v392
      %v414 = vpack.c.b16 %v399, %v396
      %v415 = vpack.c.b16 %v400, %v397
      %v416 = vpack.c.b16 %v401, %v398
      %v417 = vpack.c.b16 %v405, %v402
      %v418 = vpack.c.b16 %v406, %v403
      %v419 = vpack.c.b16 %v407, %v404
      %vm432 = vcmask 523264
      %v434 = vsel %vm432, %v364, 0
      %v437 = vsel %vm432, %v365, 0
      %v440 = vsel %vm432, %v366, 0
      %v443 = vsel %vm432, %v367, 0
      %445 = vmatpush.bf16.msra.mxu0 0
      %446 = vmatpush.bf16.msra.mxu0 0
      %447 = vmatpush.bf16.msra.mxu0 0
      %448 = vmatpush.bf16.msra.mxu0 0
      %449 = vmatpush.bf16.msra.mxu0 %v417
      %450 = vmatpush.bf16.msra.mxu0 %v414
      %451 = vmatpush.bf16.msra.mxu0 %v411
      %452 = vmatpush.bf16.msra.mxu0 %v408
      %453 = vmatmul.bf16.gmra.mxu0 %v434
      %v454 = vpop.f32.mrf.mxu0
      %v455 = vadd.f32 0.0, %v454
      %v456 = vpop.f32.mrf.mxu0
      %v457 = vadd.f32 0.0, %v456
      %458 = vmatmul.bf16.gmra.mxu0 %v437
      %v459 = vpop.f32.mrf.mxu0
      %v460 = vadd.f32 0.0, %v459
      %v461 = vpop.f32.mrf.mxu0
      %v462 = vadd.f32 0.0, %v461
      %463 = vmatmul.bf16.gmra.mxu0 %v440
      %v464 = vpop.f32.mrf.mxu0
      %v465 = vadd.f32 0.0, %v464
      %v466 = vpop.f32.mrf.mxu0
      %v467 = vadd.f32 0.0, %v466
      %468 = vmatmul.bf16.gmra.mxu0 %v443
      %v469 = vpop.f32.mrf.mxu0
      %v470 = vadd.f32 0.0, %v469
      %v471 = vpop.f32.mrf.mxu0
      %v472 = vadd.f32 0.0, %v471
      %473 = vdwg.mxu0
      %474 = vmatpush.bf16.msra.mxu0 0
      %475 = vmatpush.bf16.msra.mxu0 0
      %476 = vmatpush.bf16.msra.mxu0 0
      %477 = vmatpush.bf16.msra.mxu0 0
      %478 = vmatpush.bf16.msra.mxu0 %v418
      %479 = vmatpush.bf16.msra.mxu0 %v415
      %480 = vmatpush.bf16.msra.mxu0 %v412
      %481 = vmatpush.bf16.msra.mxu0 %v409
      %482 = vmatmul.bf16.gmra.mxu0 %v434
      %v483 = vpop.f32.mrf.mxu0
      %v484 = vadd.f32 0.0, %v483
      %v485 = vpop.f32.mrf.mxu0
      %v486 = vadd.f32 0.0, %v485
      %487 = vmatmul.bf16.gmra.mxu0 %v437
      %v488 = vpop.f32.mrf.mxu0
      %v489 = vadd.f32 0.0, %v488
      %v490 = vpop.f32.mrf.mxu0
      %v491 = vadd.f32 0.0, %v490
      %492 = vmatmul.bf16.gmra.mxu0 %v440
      %v493 = vpop.f32.mrf.mxu0
      %v494 = vadd.f32 0.0, %v493
      %v495 = vpop.f32.mrf.mxu0
      %v496 = vadd.f32 0.0, %v495
      %497 = vmatmul.bf16.gmra.mxu0 %v443
      %v498 = vpop.f32.mrf.mxu0
      %v499 = vadd.f32 0.0, %v498
      %v500 = vpop.f32.mrf.mxu0
      %v501 = vadd.f32 0.0, %v500
      %502 = vdwg.mxu0
      %503 = vmatpush.bf16.msra.mxu0 0
      %504 = vmatpush.bf16.msra.mxu0 0
      %505 = vmatpush.bf16.msra.mxu0 0
      %506 = vmatpush.bf16.msra.mxu0 0
      %507 = vmatpush.bf16.msra.mxu0 %v419
      %508 = vmatpush.bf16.msra.mxu0 %v416
      %509 = vmatpush.bf16.msra.mxu0 %v413
      %510 = vmatpush.bf16.msra.mxu0 %v410
      %511 = vmatmul.bf16.gmra.mxu0 %v434
      %v512 = vpop.f32.mrf.mxu0
      %v513 = vadd.f32 0.0, %v512
      %v514 = vpop.f32.mrf.mxu0
      %v515 = vadd.f32 0.0, %v514
      %516 = vmatmul.bf16.gmra.mxu0 %v437
      %v517 = vpop.f32.mrf.mxu0
      %v518 = vadd.f32 0.0, %v517
      %v519 = vpop.f32.mrf.mxu0
      %v520 = vadd.f32 0.0, %v519
      %521 = vmatmul.bf16.gmra.mxu0 %v440
      %v522 = vpop.f32.mrf.mxu0
      %v523 = vadd.f32 0.0, %v522
      %v524 = vpop.f32.mrf.mxu0
      %v525 = vadd.f32 0.0, %v524
      %526 = vmatmul.bf16.gmra.mxu0 %v443
      %v527 = vpop.f32.mrf.mxu0
      %v528 = vadd.f32 0.0, %v527
      %v529 = vpop.f32.mrf.mxu0
      %v530 = vadd.f32 0.0, %v529
      %531 = vdwg.mxu0
      %v532 = vmax.f32 %v455, %v460
      %v533 = vmax.f32 %v484, %v489
      %v534 = vmax.f32 %v513, %v518
      %v535 = vmax.f32 %v457, %v462
      %v536 = vmax.f32 %v486, %v491
      %v537 = vmax.f32 %v515, %v520
      %v538 = vmax.f32 %v465, %v470
      %v539 = vmax.f32 %v494, %v499
      %v540 = vmax.f32 %v523, %v528
      %v541 = vmax.f32 %v467, %v472
      %v542 = vmax.f32 %v496, %v501
      %v543 = vmax.f32 %v525, %v530
      %v544 = vmax.f32 %v532, %v538
      %v545 = vmax.f32 %v533, %v539
      %v546 = vmax.f32 %v534, %v540
      %v547 = vmax.f32 %v535, %v541
      %v548 = vmax.f32 %v536, %v542
      %v549 = vmax.f32 %v537, %v543
      %551 = vset.pattern.permute.xlu0 0
      %552 = vperm.xlu0 %551, %v226
      %v553 = vpop.permute.xlu0 %552
      %556 = vset.pattern.permute.xlu0 0
      %557 = vperm.xlu0 %556, %v227
      %v558 = vpop.permute.xlu0 %557
      %v560 = vadd.f32 %v544, %v553
      %v561 = vadd.f32 %v545, %v553
      %v562 = vadd.f32 %v546, %v553
      %v563 = vadd.f32 %v547, %v558
      %v564 = vadd.f32 %v548, %v558
      %v565 = vadd.f32 %v549, %v558
      %v566 = vmax.f32 %v560, 0.0
      %v567 = vmax.f32 %v561, 0.0
      %v568 = vmax.f32 %v562, 0.0
      %v569 = vmax.f32 %v563, 0.0
      %v570 = vmax.f32 %v564, 0.0
      %v571 = vmax.f32 %v565, 0.0
      %v572 = vpack.c.bf16 %v567, %v566
      %v573 = vpack.c.bf16 %v568, %v568
      %v574 = vpack.c.bf16 %v570, %v569
      %v575 = vpack.c.bf16 %v571, %v571
      %576 = vst [vmem:[#allocation3] sm:$0xff] %v572
      %577 = vst [vmem:[#allocation3 + $0x8] sm:$0xff] %v574
      %582 = vrot.lane.b32.xlu0 %v572, 127
      %v583 = vpop.permute.xlu0 %582
      %584 = vrot.lane.b32.xlu0 %v573, 127
      %v585 = vpop.permute.xlu0 %584
      %586 = vrot.lane.b32.xlu0 %v574, 127
      %v587 = vpop.permute.xlu0 %586
      %588 = vrot.lane.b32.xlu0 %v575, 127
      %v589 = vpop.permute.xlu0 %588
      %v590 = vrot.slane %v583, 4
      %v591 = vrot.slane %v585, 4
      %v592 = vrot.slane %v587, 4
      %v593 = vrot.slane %v589, 4
      %v594 = vsel %vm254, %v590, %v591
      %v595 = vsel %vm256, %v583, %v594
      %v596 = vsel %vm254, %v592, %v593
      %v597 = vsel %vm256, %v587, %v596
      %600 = vst [vmem:[#allocation3 + $0x40] sm:$0xff] %v595
      %601 = vst [vmem:[#allocation3 + $0x48] sm:$0xff] %v597
      %602 = vrot.lane.b32.xlu0 %v572, 126
      %v603 = vpop.permute.xlu0 %602
      %604 = vrot.lane.b32.xlu0 %v573, 126
      %v605 = vpop.permute.xlu0 %604
      %606 = vrot.lane.b32.xlu0 %v574, 126
      %v607 = vpop.permute.xlu0 %606
      %608 = vrot.lane.b32.xlu0 %v575, 126
      %v609 = vpop.permute.xlu0 %608
      %v610 = vrot.slane %v603, 4
      %v611 = vrot.slane %v605, 4
      %v612 = vrot.slane %v607, 4
      %v613 = vrot.slane %v609, 4
      %v614 = vsel %vm254, %v610, %v611
      %vm615 = vcmask 1031168
      %v616 = vsel %vm615, %v603, %v614
      %v617 = vsel %vm254, %v612, %v613
      %v618 = vsel %vm615, %v607, %v617
      %621 = vst [vmem:[#allocation3 + $0x80] sm:$0xff] %v616
      %622 = vst [vmem:[#allocation3 + $0x88] sm:$0xff] %v618
      %623 = vrot.lane.b32.xlu0 %v572, 112
      %v624 = vpop.permute.xlu0 %623
      %625 = vrot.lane.b32.xlu0 %v573, 112
      %v626 = vpop.permute.xlu0 %625
      %627 = vrot.lane.b32.xlu0 %v574, 112
      %v628 = vpop.permute.xlu0 %627
      %629 = vrot.lane.b32.xlu0 %v575, 112
      %v630 = vpop.permute.xlu0 %629
      %v631 = vrot.slane %v624, 4
      %v632 = vrot.slane %v626, 4
      %v633 = vrot.slane %v628, 4
      %v634 = vrot.slane %v630, 4
      %v635 = vsel %vm254, %v631, %v632
      %v636 = vsel %vm283, %v624, %v635
      %v637 = vsel %vm254, %v633, %v634
      %v638 = vsel %vm283, %v628, %v637
      %641 = vst [vmem:[#allocation3 + $0xc0] sm:$0xff] %v636
      %642 = vst [vmem:[#allocation3 + $0xc8] sm:$0xff] %v638
      %643 = vrot.lane.b32.xlu0 %v572, 111
      %v644 = vpop.permute.xlu0 %643
      %645 = vrot.lane.b32.xlu0 %v573, 111
      %v646 = vpop.permute.xlu0 %645
      %647 = vrot.lane.b32.xlu0 %v574, 111
      %v648 = vpop.permute.xlu0 %647
      %649 = vrot.lane.b32.xlu0 %v575, 111
      %v650 = vpop.permute.xlu0 %649
      %v651 = vrot.slane %v644, 4
      %v652 = vrot.slane %v646, 4
      %v653 = vrot.slane %v648, 4
      %v654 = vrot.slane %v650, 4
      %v655 = vsel %vm254, %v651, %v652
      %v656 = vsel %vm310, %v644, %v655
      %v657 = vsel %vm254, %v653, %v654
      %v658 = vsel %vm310, %v648, %v657
      %661 = vst [vmem:[#allocation3 + $0x100] sm:$0xff] %v656
      %662 = vst [vmem:[#allocation3 + $0x108] sm:$0xff] %v658
      %663 = vrot.lane.b32.xlu0 %v572, 110
      %v664 = vpop.permute.xlu0 %663
      %665 = vrot.lane.b32.xlu0 %v573, 110
      %v666 = vpop.permute.xlu0 %665
      %667 = vrot.lane.b32.xlu0 %v574, 110
      %v668 = vpop.permute.xlu0 %667
      %669 = vrot.lane.b32.xlu0 %v575, 110
      %v670 = vpop.permute.xlu0 %669
      %v671 = vrot.slane %v664, 4
      %v672 = vrot.slane %v666, 4
      %v673 = vrot.slane %v668, 4
      %v674 = vrot.slane %v670, 4
      %v675 = vsel %vm254, %v671, %v672
      %vm676 = vcmask 900096
      %v677 = vsel %vm676, %v664, %v675
      %v678 = vsel %vm254, %v673, %v674
      %v679 = vsel %vm676, %v668, %v678
      %682 = vst [vmem:[#allocation3 + $0x140] sm:$0xff] %v677
      %683 = vst [vmem:[#allocation3 + $0x148] sm:$0xff] %v679
      %684 = vrot.lane.b32.xlu0 %v572, 96
      %v685 = vpop.permute.xlu0 %684
      %686 = vrot.lane.b32.xlu0 %v573, 96
      %v687 = vpop.permute.xlu0 %686
      %688 = vrot.lane.b32.xlu0 %v574, 96
      %v689 = vpop.permute.xlu0 %688
      %690 = vrot.lane.b32.xlu0 %v575, 96
      %v691 = vpop.permute.xlu0 %690
      %v692 = vrot.slane %v685, 4
      %v693 = vrot.slane %v687, 4
      %v694 = vrot.slane %v689, 4
      %v695 = vrot.slane %v691, 4
      %v696 = vsel %vm254, %v692, %v693
      %vm697 = vcmask 785408
      %v698 = vsel %vm697, %v685, %v696
      %v699 = vsel %vm254, %v694, %v695
      %v700 = vsel %vm697, %v689, %v699
      %703 = vst [vmem:[#allocation3 + $0x180] sm:$0xff] %v698
      %704 = vst [vmem:[#allocation3 + $0x188] sm:$0xff] %v700
      %705 = vrot.lane.b32.xlu0 %v572, 95
      %v706 = vpop.permute.xlu0 %705
      %707 = vrot.lane.b32.xlu0 %v573, 95
      %v708 = vpop.permute.xlu0 %707
      %709 = vrot.lane.b32.xlu0 %v574, 95
      %v710 = vpop.permute.xlu0 %709
      %711 = vrot.lane.b32.xlu0 %v575, 95
      %v712 = vpop.permute.xlu0 %711
      %v713 = vrot.slane %v706, 4
      %v714 = vrot.slane %v708, 4
      %v715 = vrot.slane %v710, 4
      %v716 = vrot.slane %v712, 4
      %v717 = vsel %vm254, %v713, %v714
      %vm718 = vcmask 777216
      %v719 = vsel %vm718, %v706, %v717
      %v720 = vsel %vm254, %v715, %v716
      %v721 = vsel %vm718, %v710, %v720
      %724 = vst [vmem:[#allocation3 + $0x1c0] sm:$0xff] %v719
      %725 = vst [vmem:[#allocation3 + $0x1c8] sm:$0xff] %v721
      %726 = vrot.lane.b32.xlu0 %v572, 94
      %v727 = vpop.permute.xlu0 %726
      %728 = vrot.lane.b32.xlu0 %v573, 94
      %v729 = vpop.permute.xlu0 %728
      %730 = vrot.lane.b32.xlu0 %v574, 94
      %v731 = vpop.permute.xlu0 %730
      %732 = vrot.lane.b32.xlu0 %v575, 94
      %v733 = vpop.permute.xlu0 %732
      %v734 = vrot.slane %v727, 4
      %v735 = vrot.slane %v729, 4
      %v736 = vrot.slane %v731, 4
      %v737 = vrot.slane %v733, 4
      %v738 = vsel %vm254, %v734, %v735
      %vm739 = vcmask 769024
      %v740 = vsel %vm739, %v727, %v738
      %v741 = vsel %vm254, %v736, %v737
      %v742 = vsel %vm739, %v731, %v741
      %745 = vst [vmem:[#allocation3 + $0x200] sm:$0xff] %v740
      %746 = vst [vmem:[#allocation3 + $0x208] sm:$0xff] %v742
      %v747 = vld [vmem:[%s1 + $0x20] sm:$0xf]
      %v748 = vld [vmem:[%s1 + $0x24] sm:$0xf]
      %v749 = vld [vmem:[%s1 + $0x28] sm:$0xf]
      %v750 = vld [vmem:[%s1 + $0x2c] sm:$0xf]
      %v751 = vld [vmem:[%s1 + $0x30] sm:$0xf]
      %v752 = vld [vmem:[%s1 + $0x34] sm:$0xf]
      %v753 = vld [vmem:[%s1 + $0x38] sm:$0xf]
      %v754 = vld [vmem:[%s1 + $0x3c] sm:$0xf]
      %v763 = vunpack.c.l.b16 %v747
      %v764 = vunpack.c.l.b16 %v748
      %v765 = vunpack.c.l.b16 %v749
      %v766 = vunpack.c.l.b16 %v750
      %v767 = vunpack.c.l.b16 %v751
      %v768 = vunpack.c.l.b16 %v752
      %v769 = vunpack.c.l.b16 %v753
      %v770 = vunpack.c.l.b16 %v754
      %v771 = vpack.c.b16 %v764, %v763
      %v772 = vpack.c.b16 %v766, %v765
      %v773 = vpack.c.b16 %v768, %v767
      %v774 = vpack.c.b16 %v770, %v769
      %v776 = vsel %vm432, %v771, 0
      %v779 = vsel %vm432, %v772, 0
      %v782 = vsel %vm432, %v773, 0
      %v785 = vsel %vm432, %v774, 0
      %787 = vmatpush.bf16.msra.mxu0 0
      %788 = vmatpush.bf16.msra.mxu0 0
      %789 = vmatpush.bf16.msra.mxu0 0
      %790 = vmatpush.bf16.msra.mxu0 0
      %791 = vmatpush.bf16.msra.mxu0 %v417
      %792 = vmatpush.bf16.msra.mxu0 %v414
      %793 = vmatpush.bf16.msra.mxu0 %v411
      %794 = vmatpush.bf16.msra.mxu0 %v408
      %795 = vmatmul.bf16.gmra.mxu0 %v776
      %v796 = vpop.f32.mrf.mxu0
      %v797 = vadd.f32 0.0, %v796
      %v798 = vpop.f32.mrf.mxu0
      %v799 = vadd.f32 0.0, %v798
      %800 = vmatmul.bf16.gmra.mxu0 %v779
      %v801 = vpop.f32.mrf.mxu0
      %v802 = vadd.f32 0.0, %v801
      %v803 = vpop.f32.mrf.mxu0
      %v804 = vadd.f32 0.0, %v803
      %805 = vmatmul.bf16.gmra.mxu0 %v782
      %v806 = vpop.f32.mrf.mxu0
      %v807 = vadd.f32 0.0, %v806
      %v808 = vpop.f32.mrf.mxu0
      %v809 = vadd.f32 0.0, %v808
      %810 = vmatmul.bf16.gmra.mxu0 %v785
      %v811 = vpop.f32.mrf.mxu0
      %v812 = vadd.f32 0.0, %v811
      %v813 = vpop.f32.mrf.mxu0
      %v814 = vadd.f32 0.0, %v813
      %815 = vdwg.mxu0
      %816 = vmatpush.bf16.msra.mxu0 0
      %817 = vmatpush.bf16.msra.mxu0 0
      %818 = vmatpush.bf16.msra.mxu0 0
      %819 = vmatpush.bf16.msra.mxu0 0
      %820 = vmatpush.bf16.msra.mxu0 %v418
      %821 = vmatpush.bf16.msra.mxu0 %v415
      %822 = vmatpush.bf16.msra.mxu0 %v412
      %823 = vmatpush.bf16.msra.mxu0 %v409
      %824 = vmatmul.bf16.gmra.mxu0 %v776
      %v825 = vpop.f32.mrf.mxu0
      %v826 = vadd.f32 0.0, %v825
      %v827 = vpop.f32.mrf.mxu0
      %v828 = vadd.f32 0.0, %v827
      %829 = vmatmul.bf16.gmra.mxu0 %v779
      %v830 = vpop.f32.mrf.mxu0
      %v831 = vadd.f32 0.0, %v830
      %v832 = vpop.f32.mrf.mxu0
      %v833 = vadd.f32 0.0, %v832
      %834 = vmatmul.bf16.gmra.mxu0 %v782
      %v835 = vpop.f32.mrf.mxu0
      %v836 = vadd.f32 0.0, %v835
      %v837 = vpop.f32.mrf.mxu0
      %v838 = vadd.f32 0.0, %v837
      %839 = vmatmul.bf16.gmra.mxu0 %v785
      %v840 = vpop.f32.mrf.mxu0
      %v841 = vadd.f32 0.0, %v840
      %v842 = vpop.f32.mrf.mxu0
      %v843 = vadd.f32 0.0, %v842
      %844 = vdwg.mxu0
      %845 = vmatpush.bf16.msra.mxu0 0
      %846 = vmatpush.bf16.msra.mxu0 0
      %847 = vmatpush.bf16.msra.mxu0 0
      %848 = vmatpush.bf16.msra.mxu0 0
      %849 = vmatpush.bf16.msra.mxu0 %v419
      %850 = vmatpush.bf16.msra.mxu0 %v416
      %851 = vmatpush.bf16.msra.mxu0 %v413
      %852 = vmatpush.bf16.msra.mxu0 %v410
      %853 = vmatmul.bf16.gmra.mxu0 %v776
      %v854 = vpop.f32.mrf.mxu0
      %v855 = vadd.f32 0.0, %v854
      %v856 = vpop.f32.mrf.mxu0
      %v857 = vadd.f32 0.0, %v856
      %858 = vmatmul.bf16.gmra.mxu0 %v779
      %v859 = vpop.f32.mrf.mxu0
      %v860 = vadd.f32 0.0, %v859
      %v861 = vpop.f32.mrf.mxu0
      %v862 = vadd.f32 0.0, %v861
      %863 = vmatmul.bf16.gmra.mxu0 %v782
      %v864 = vpop.f32.mrf.mxu0
      %v865 = vadd.f32 0.0, %v864
      %v866 = vpop.f32.mrf.mxu0
      %v867 = vadd.f32 0.0, %v866
      %868 = vmatmul.bf16.gmra.mxu0 %v785
      %v869 = vpop.f32.mrf.mxu0
      %v870 = vadd.f32 0.0, %v869
      %v871 = vpop.f32.mrf.mxu0
      %v872 = vadd.f32 0.0, %v871
      %873 = vdwg.mxu0
      %v874 = vmax.f32 %v797, %v802
      %v875 = vmax.f32 %v826, %v831
      %v876 = vmax.f32 %v855, %v860
      %v877 = vmax.f32 %v799, %v804
      %v878 = vmax.f32 %v828, %v833
      %v879 = vmax.f32 %v857, %v862
      %v880 = vmax.f32 %v807, %v812
      %v881 = vmax.f32 %v836, %v841
      %v882 = vmax.f32 %v865, %v870
      %v883 = vmax.f32 %v809, %v814
      %v884 = vmax.f32 %v838, %v843
      %v885 = vmax.f32 %v867, %v872
      %v886 = vmax.f32 %v874, %v880
      %v887 = vmax.f32 %v875, %v881
      %v888 = vmax.f32 %v876, %v882
      %v889 = vmax.f32 %v877, %v883
      %v890 = vmax.f32 %v878, %v884
      %v891 = vmax.f32 %v879, %v885
      %v892 = vadd.f32 %v886, %v553
      %v893 = vadd.f32 %v887, %v553
      %v894 = vadd.f32 %v888, %v553
      %v895 = vadd.f32 %v889, %v558
      %v896 = vadd.f32 %v890, %v558
      %v897 = vadd.f32 %v891, %v558
      %v898 = vmax.f32 %v892, 0.0
      %v899 = vmax.f32 %v893, 0.0
      %v900 = vmax.f32 %v894, 0.0
      %v901 = vmax.f32 %v895, 0.0
      %v902 = vmax.f32 %v896, 0.0
      %v903 = vmax.f32 %v897, 0.0
      %v904 = vpack.c.bf16 %v899, %v898
      %v905 = vpack.c.bf16 %v900, %v900
      %v906 = vpack.c.bf16 %v902, %v901
      %v907 = vpack.c.bf16 %v903, %v903
      %908 = vst [vmem:[#allocation3 + $0x10] sm:$0xff] %v904
      %909 = vst [vmem:[#allocation3 + $0x18] sm:$0xff] %v906
      %914 = vrot.lane.b32.xlu0 %v904, 127
      %v915 = vpop.permute.xlu0 %914
      %916 = vrot.lane.b32.xlu0 %v905, 127
      %v917 = vpop.permute.xlu0 %916
      %918 = vrot.lane.b32.xlu0 %v906, 127
      %v919 = vpop.permute.xlu0 %918
      %920 = vrot.lane.b32.xlu0 %v907, 127
      %v921 = vpop.permute.xlu0 %920
      %v922 = vrot.slane %v915, 4
      %v923 = vrot.slane %v917, 4
      %v924 = vrot.slane %v919, 4
      %v925 = vrot.slane %v921, 4
      %v926 = vsel %vm254, %v922, %v923
      %v927 = vsel %vm256, %v915, %v926
      %v928 = vsel %vm254, %v924, %v925
      %v929 = vsel %vm256, %v919, %v928
      %932 = vst [vmem:[#allocation3 + $0x50] sm:$0xff] %v927
      %933 = vst [vmem:[#allocation3 + $0x58] sm:$0xff] %v929
      %934 = vrot.lane.b32.xlu0 %v904, 126
      %v935 = vpop.permute.xlu0 %934
      %936 = vrot.lane.b32.xlu0 %v905, 126
      %v937 = vpop.permute.xlu0 %936
      %938 = vrot.lane.b32.xlu0 %v906, 126
      %v939 = vpop.permute.xlu0 %938
      %940 = vrot.lane.b32.xlu0 %v907, 126
      %v941 = vpop.permute.xlu0 %940
      %v942 = vrot.slane %v935, 4
      %v943 = vrot.slane %v937, 4
      %v944 = vrot.slane %v939, 4
      %v945 = vrot.slane %v941, 4
      %v946 = vsel %vm254, %v942, %v943
      %v947 = vsel %vm615, %v935, %v946
      %v948 = vsel %vm254, %v944, %v945
      %v949 = vsel %vm615, %v939, %v948
      %952 = vst [vmem:[#allocation3 + $0x90] sm:$0xff] %v947
      %953 = vst [vmem:[#allocation3 + $0x98] sm:$0xff] %v949
      %954 = vrot.lane.b32.xlu0 %v904, 112
      %v955 = vpop.permute.xlu0 %954
      %956 = vrot.lane.b32.xlu0 %v905, 112
      %v957 = vpop.permute.xlu0 %956
      %958 = vrot.lane.b32.xlu0 %v906, 112
      %v959 = vpop.permute.xlu0 %958
      %960 = vrot.lane.b32.xlu0 %v907, 112
      %v961 = vpop.permute.xlu0 %960
      %v962 = vrot.slane %v955, 4
      %v963 = vrot.slane %v957, 4
      %v964 = vrot.slane %v959, 4
      %v965 = vrot.slane %v961, 4
      %v966 = vsel %vm254, %v962, %v963
      %v967 = vsel %vm283, %v955, %v966
      %v968 = vsel %vm254, %v964, %v965
      %v969 = vsel %vm283, %v959, %v968
      %972 = vst [vmem:[#allocation3 + $0xd0] sm:$0xff] %v967
      %973 = vst [vmem:[#allocation3 + $0xd8] sm:$0xff] %v969
      %974 = vrot.lane.b32.xlu0 %v904, 111
      %v975 = vpop.permute.xlu0 %974
      %976 = vrot.lane.b32.xlu0 %v905, 111
      %v977 = vpop.permute.xlu0 %976
      %978 = vrot.lane.b32.xlu0 %v906, 111
      %v979 = vpop.permute.xlu0 %978
      %980 = vrot.lane.b32.xlu0 %v907, 111
      %v981 = vpop.permute.xlu0 %980
      %v982 = vrot.slane %v975, 4
      %v983 = vrot.slane %v977, 4
      %v984 = vrot.slane %v979, 4
      %v985 = vrot.slane %v981, 4
      %v986 = vsel %vm254, %v982, %v983
      %v987 = vsel %vm310, %v975, %v986
      %v988 = vsel %vm254, %v984, %v985
      %v989 = vsel %vm310, %v979, %v988
      %992 = vst [vmem:[#allocation3 + $0x110] sm:$0xff] %v987
      %993 = vst [vmem:[#allocation3 + $0x118] sm:$0xff] %v989
      %994 = vrot.lane.b32.xlu0 %v904, 110
      %v995 = vpop.permute.xlu0 %994
      %996 = vrot.lane.b32.xlu0 %v905, 110
      %v997 = vpop.permute.xlu0 %996
      %998 = vrot.lane.b32.xlu0 %v906, 110
      %v999 = vpop.permute.xlu0 %998
      %1000 = vrot.lane.b32.xlu0 %v907, 110
      %v1001 = vpop.permute.xlu0 %1000
      %v1002 = vrot.slane %v995, 4
      %v1003 = vrot.slane %v997, 4
      %v1004 = vrot.slane %v999, 4
      %v1005 = vrot.slane %v1001, 4
      %v1006 = vsel %vm254, %v1002, %v1003
      %v1007 = vsel %vm676, %v995, %v1006
      %v1008 = vsel %vm254, %v1004, %v1005
      %v1009 = vsel %vm676, %v999, %v1008
      %1012 = vst [vmem:[#allocation3 + $0x150] sm:$0xff] %v1007
      %1013 = vst [vmem:[#allocation3 + $0x158] sm:$0xff] %v1009
      %1014 = vrot.lane.b32.xlu0 %v904, 96
      %v1015 = vpop.permute.xlu0 %1014
      %1016 = vrot.lane.b32.xlu0 %v905, 96
      %v1017 = vpop.permute.xlu0 %1016
      %1018 = vrot.lane.b32.xlu0 %v906, 96
      %v1019 = vpop.permute.xlu0 %1018
      %1020 = vrot.lane.b32.xlu0 %v907, 96
      %v1021 = vpop.permute.xlu0 %1020
      %v1022 = vrot.slane %v1015, 4
      %v1023 = vrot.slane %v1017, 4
      %v1024 = vrot.slane %v1019, 4
      %v1025 = vrot.slane %v1021, 4
      %v1026 = vsel %vm254, %v1022, %v1023
      %v1027 = vsel %vm697, %v1015, %v1026
      %v1028 = vsel %vm254, %v1024, %v1025
      %v1029 = vsel %vm697, %v1019, %v1028
      %1032 = vst [vmem:[#allocation3 + $0x190] sm:$0xff] %v1027
      %1033 = vst [vmem:[#allocation3 + $0x198] sm:$0xff] %v1029
      %1034 = vrot.lane.b32.xlu0 %v904, 95
      %v1035 = vpop.permute.xlu0 %1034
      %1036 = vrot.lane.b32.xlu0 %v905, 95
      %v1037 = vpop.permute.xlu0 %1036
      %1038 = vrot.lane.b32.xlu0 %v906, 95
      %v1039 = vpop.permute.xlu0 %1038
      %1040 = vrot.lane.b32.xlu0 %v907, 95
      %v1041 = vpop.permute.xlu0 %1040
      %v1042 = vrot.slane %v1035, 4
      %v1043 = vrot.slane %v1037, 4
      %v1044 = vrot.slane %v1039, 4
      %v1045 = vrot.slane %v1041, 4
      %v1046 = vsel %vm254, %v1042, %v1043
      %v1047 = vsel %vm718, %v1035, %v1046
      %v1048 = vsel %vm254, %v1044, %v1045
      %v1049 = vsel %vm718, %v1039, %v1048
      %1052 = vst [vmem:[#allocation3 + $0x1d0] sm:$0xff] %v1047
      %1053 = vst [vmem:[#allocation3 + $0x1d8] sm:$0xff] %v1049
      %1054 = vrot.lane.b32.xlu0 %v904, 94
      %v1055 = vpop.permute.xlu0 %1054
      %1056 = vrot.lane.b32.xlu0 %v905, 94
      %v1057 = vpop.permute.xlu0 %1056
      %1058 = vrot.lane.b32.xlu0 %v906, 94
      %v1059 = vpop.permute.xlu0 %1058
      %1060 = vrot.lane.b32.xlu0 %v907, 94
      %v1061 = vpop.permute.xlu0 %1060
      %v1062 = vrot.slane %v1055, 4
      %v1063 = vrot.slane %v1057, 4
      %v1064 = vrot.slane %v1059, 4
      %v1065 = vrot.slane %v1061, 4
      %v1066 = vsel %vm254, %v1062, %v1063
      %v1067 = vsel %vm739, %v1055, %v1066
      %v1068 = vsel %vm254, %v1064, %v1065
      %v1069 = vsel %vm739, %v1059, %v1068
      %1072 = vst [vmem:[#allocation3 + $0x210] sm:$0xff] %v1067
      %1073 = vst [vmem:[#allocation3 + $0x218] sm:$0xff] %v1069
      %v1074 = vld [vmem:[%s1 + $0x40] sm:$0xf]
      %v1075 = vld [vmem:[%s1 + $0x44] sm:$0xf]
      %v1076 = vld [vmem:[%s1 + $0x48] sm:$0xf]
      %v1077 = vld [vmem:[%s1 + $0x4c] sm:$0xf]
      %v1078 = vld [vmem:[%s1 + $0x50] sm:$0xf]
      %v1079 = vld [vmem:[%s1 + $0x54] sm:$0xf]
      %v1080 = vld [vmem:[%s1 + $0x58] sm:$0xf]
      %v1081 = vld [vmem:[%s1 + $0x5c] sm:$0xf]
      %v1090 = vunpack.c.l.b16 %v1074
      %v1091 = vunpack.c.l.b16 %v1075
      %v1092 = vunpack.c.l.b16 %v1076
      %v1093 = vunpack.c.l.b16 %v1077
      %v1094 = vunpack.c.l.b16 %v1078
      %v1095 = vunpack.c.l.b16 %v1079
      %v1096 = vunpack.c.l.b16 %v1080
      %v1097 = vunpack.c.l.b16 %v1081
      %v1098 = vpack.c.b16 %v1091, %v1090
      %v1099 = vpack.c.b16 %v1093, %v1092
      %v1100 = vpack.c.b16 %v1095, %v1094
      %v1101 = vpack.c.b16 %v1097, %v1096
      %v1103 = vsel %vm432, %v1098, 0
      %v1106 = vsel %vm432, %v1099, 0
      %v1109 = vsel %vm432, %v1100, 0
      %v1112 = vsel %vm432, %v1101, 0
      %1114 = vmatpush.bf16.msra.mxu0 0
      %1115 = vmatpush.bf16.msra.mxu0 0
      %1116 = vmatpush.bf16.msra.mxu0 0
      %1117 = vmatpush.bf16.msra.mxu0 0
      %1118 = vmatpush.bf16.msra.mxu0 %v417
      %1119 = vmatpush.bf16.msra.mxu0 %v414
      %1120 = vmatpush.bf16.msra.mxu0 %v411
      %1121 = vmatpush.bf16.msra.mxu0 %v408
      %1122 = vmatmul.bf16.gmra.mxu0 %v1103
      %v1123 = vpop.f32.mrf.mxu0
      %v1124 = vadd.f32 0.0, %v1123
      %v1125 = vpop.f32.mrf.mxu0
      %v1126 = vadd.f32 0.0, %v1125
      %1127 = vmatmul.bf16.gmra.mxu0 %v1106
      %v1128 = vpop.f32.mrf.mxu0
      %v1129 = vadd.f32 0.0, %v1128
      %v1130 = vpop.f32.mrf.mxu0
      %v1131 = vadd.f32 0.0, %v1130
      %1132 = vmatmul.bf16.gmra.mxu0 %v1109
      %v1133 = vpop.f32.mrf.mxu0
      %v1134 = vadd.f32 0.0, %v1133
      %v1135 = vpop.f32.mrf.mxu0
      %v1136 = vadd.f32 0.0, %v1135
      %1137 = vmatmul.bf16.gmra.mxu0 %v1112
      %v1138 = vpop.f32.mrf.mxu0
      %v1139 = vadd.f32 0.0, %v1138
      %v1140 = vpop.f32.mrf.mxu0
      %v1141 = vadd.f32 0.0, %v1140
      %1142 = vdwg.mxu0
      %1143 = vmatpush.bf16.msra.mxu0 0
      %1144 = vmatpush.bf16.msra.mxu0 0
      %1145 = vmatpush.bf16.msra.mxu0 0
      %1146 = vmatpush.bf16.msra.mxu0 0
      %1147 = vmatpush.bf16.msra.mxu0 %v418
      %1148 = vmatpush.bf16.msra.mxu0 %v415
      %1149 = vmatpush.bf16.msra.mxu0 %v412
      %1150 = vmatpush.bf16.msra.mxu0 %v409
      %1151 = vmatmul.bf16.gmra.mxu0 %v1103
      %v1152 = vpop.f32.mrf.mxu0
      %v1153 = vadd.f32 0.0, %v1152
      %v1154 = vpop.f32.mrf.mxu0
      %v1155 = vadd.f32 0.0, %v1154
      %1156 = vmatmul.bf16.gmra.mxu0 %v1106
      %v1157 = vpop.f32.mrf.mxu0
      %v1158 = vadd.f32 0.0, %v1157
      %v1159 = vpop.f32.mrf.mxu0
      %v1160 = vadd.f32 0.0, %v1159
      %1161 = vmatmul.bf16.gmra.mxu0 %v1109
      %v1162 = vpop.f32.mrf.mxu0
      %v1163 = vadd.f32 0.0, %v1162
      %v1164 = vpop.f32.mrf.mxu0
      %v1165 = vadd.f32 0.0, %v1164
      %1166 = vmatmul.bf16.gmra.mxu0 %v1112
      %v1167 = vpop.f32.mrf.mxu0
      %v1168 = vadd.f32 0.0, %v1167
      %v1169 = vpop.f32.mrf.mxu0
      %v1170 = vadd.f32 0.0, %v1169
      %1171 = vdwg.mxu0
      %1172 = vmatpush.bf16.msra.mxu0 0
      %1173 = vmatpush.bf16.msra.mxu0 0
      %1174 = vmatpush.bf16.msra.mxu0 0
      %1175 = vmatpush.bf16.msra.mxu0 0
      %1176 = vmatpush.bf16.msra.mxu0 %v419
      %1177 = vmatpush.bf16.msra.mxu0 %v416
      %1178 = vmatpush.bf16.msra.mxu0 %v413
      %1179 = vmatpush.bf16.msra.mxu0 %v410
      %1180 = vmatmul.bf16.gmra.mxu0 %v1103
      %v1181 = vpop.f32.mrf.mxu0
      %v1182 = vadd.f32 0.0, %v1181
      %v1183 = vpop.f32.mrf.mxu0
      %v1184 = vadd.f32 0.0, %v1183
      %1185 = vmatmul.bf16.gmra.mxu0 %v1106
      %v1186 = vpop.f32.mrf.mxu0
      %v1187 = vadd.f32 0.0, %v1186
      %v1188 = vpop.f32.mrf.mxu0
      %v1189 = vadd.f32 0.0, %v1188
      %1190 = vmatmul.bf16.gmra.mxu0 %v1109
      %v1191 = vpop.f32.mrf.mxu0
      %v1192 = vadd.f32 0.0, %v1191
      %v1193 = vpop.f32.mrf.mxu0
      %v1194 = vadd.f32 0.0, %v1193
      %1195 = vmatmul.bf16.gmra.mxu0 %v1112
      %v1196 = vpop.f32.mrf.mxu0
      %v1197 = vadd.f32 0.0, %v1196
      %v1198 = vpop.f32.mrf.mxu0
      %v1199 = vadd.f32 0.0, %v1198
      %1200 = vdwg.mxu0
      %v1201 = vmax.f32 %v1124, %v1129
      %v1202 = vmax.f32 %v1153, %v1158
      %v1203 = vmax.f32 %v1182, %v1187
      %v1204 = vmax.f32 %v1126, %v1131
      %v1205 = vmax.f32 %v1155, %v1160
      %v1206 = vmax.f32 %v1184, %v1189
      %v1207 = vmax.f32 %v1134, %v1139
      %v1208 = vmax.f32 %v1163, %v1168
      %v1209 = vmax.f32 %v1192, %v1197
      %v1210 = vmax.f32 %v1136, %v1141
      %v1211 = vmax.f32 %v1165, %v1170
      %v1212 = vmax.f32 %v1194, %v1199
      %v1213 = vmax.f32 %v1201, %v1207
      %v1214 = vmax.f32 %v1202, %v1208
      %v1215 = vmax.f32 %v1203, %v1209
      %v1216 = vmax.f32 %v1204, %v1210
      %v1217 = vmax.f32 %v1205, %v1211
      %v1218 = vmax.f32 %v1206, %v1212
      %v1219 = vadd.f32 %v1213, %v553
      %v1220 = vadd.f32 %v1214, %v553
      %v1221 = vadd.f32 %v1215, %v553
      %v1222 = vadd.f32 %v1216, %v558
      %v1223 = vadd.f32 %v1217, %v558
      %v1224 = vadd.f32 %v1218, %v558
      %v1225 = vmax.f32 %v1219, 0.0
      %v1226 = vmax.f32 %v1220, 0.0
      %v1227 = vmax.f32 %v1221, 0.0
      %v1228 = vmax.f32 %v1222, 0.0
      %v1229 = vmax.f32 %v1223, 0.0
      %v1230 = vmax.f32 %v1224, 0.0
      %v1231 = vpack.c.bf16 %v1226, %v1225
      %v1232 = vpack.c.bf16 %v1227, %v1227
      %v1233 = vpack.c.bf16 %v1229, %v1228
      %v1234 = vpack.c.bf16 %v1230, %v1230
      %1235 = vst [vmem:[#allocation3 + $0x20] sm:$0xff] %v1231
      %1236 = vst [vmem:[#allocation3 + $0x28] sm:$0xff] %v1233
      %1241 = vrot.lane.b32.xlu0 %v1231, 127
      %v1242 = vpop.permute.xlu0 %1241
      %1243 = vrot.lane.b32.xlu0 %v1232, 127
      %v1244 = vpop.permute.xlu0 %1243
      %1245 = vrot.lane.b32.xlu0 %v1233, 127
      %v1246 = vpop.permute.xlu0 %1245
      %1247 = vrot.lane.b32.xlu0 %v1234, 127
      %v1248 = vpop.permute.xlu0 %1247
      %v1249 = vrot.slane %v1242, 4
      %v1250 = vrot.slane %v1244, 4
      %v1251 = vrot.slane %v1246, 4
      %v1252 = vrot.slane %v1248, 4
      %v1253 = vsel %vm254, %v1249, %v1250
      %v1254 = vsel %vm256, %v1242, %v1253
      %v1255 = vsel %vm254, %v1251, %v1252
      %v1256 = vsel %vm256, %v1246, %v1255
      %1259 = vst [vmem:[#allocation3 + $0x60] sm:$0xff] %v1254
      %1260 = vst [vmem:[#allocation3 + $0x68] sm:$0xff] %v1256
      %1261 = vrot.lane.b32.xlu0 %v1231, 126
      %v1262 = vpop.permute.xlu0 %1261
      %1263 = vrot.lane.b32.xlu0 %v1232, 126
      %v1264 = vpop.permute.xlu0 %1263
      %1265 = vrot.lane.b32.xlu0 %v1233, 126
      %v1266 = vpop.permute.xlu0 %1265
      %1267 = vrot.lane.b32.xlu0 %v1234, 126
      %v1268 = vpop.permute.xlu0 %1267
      %v1269 = vrot.slane %v1262, 4
      %v1270 = vrot.slane %v1264, 4
      %v1271 = vrot.slane %v1266, 4
      %v1272 = vrot.slane %v1268, 4
      %v1273 = vsel %vm254, %v1269, %v1270
      %v1274 = vsel %vm615, %v1262, %v1273
      %v1275 = vsel %vm254, %v1271, %v1272
      %v1276 = vsel %vm615, %v1266, %v1275
      %1279 = vst [vmem:[#allocation3 + $0xa0] sm:$0xff] %v1274
      %1280 = vst [vmem:[#allocation3 + $0xa8] sm:$0xff] %v1276
      %1281 = vrot.lane.b32.xlu0 %v1231, 112
      %v1282 = vpop.permute.xlu0 %1281
      %1283 = vrot.lane.b32.xlu0 %v1232, 112
      %v1284 = vpop.permute.xlu0 %1283
      %1285 = vrot.lane.b32.xlu0 %v1233, 112
      %v1286 = vpop.permute.xlu0 %1285
      %1287 = vrot.lane.b32.xlu0 %v1234, 112
      %v1288 = vpop.permute.xlu0 %1287
      %v1289 = vrot.slane %v1282, 4
      %v1290 = vrot.slane %v1284, 4
      %v1291 = vrot.slane %v1286, 4
      %v1292 = vrot.slane %v1288, 4
      %v1293 = vsel %vm254, %v1289, %v1290
      %v1294 = vsel %vm283, %v1282, %v1293
      %v1295 = vsel %vm254, %v1291, %v1292
      %v1296 = vsel %vm283, %v1286, %v1295
      %1299 = vst [vmem:[#allocation3 + $0xe0] sm:$0xff] %v1294
      %1300 = vst [vmem:[#allocation3 + $0xe8] sm:$0xff] %v1296
      %1301 = vrot.lane.b32.xlu0 %v1231, 111
      %v1302 = vpop.permute.xlu0 %1301
      %1303 = vrot.lane.b32.xlu0 %v1232, 111
      %v1304 = vpop.permute.xlu0 %1303
      %1305 = vrot.lane.b32.xlu0 %v1233, 111
      %v1306 = vpop.permute.xlu0 %1305
      %1307 = vrot.lane.b32.xlu0 %v1234, 111
      %v1308 = vpop.permute.xlu0 %1307
      %v1309 = vrot.slane %v1302, 4
      %v1310 = vrot.slane %v1304, 4
      %v1311 = vrot.slane %v1306, 4
      %v1312 = vrot.slane %v1308, 4
      %v1313 = vsel %vm254, %v1309, %v1310
      %v1314 = vsel %vm310, %v1302, %v1313
      %v1315 = vsel %vm254, %v1311, %v1312
      %v1316 = vsel %vm310, %v1306, %v1315
      %1319 = vst [vmem:[#allocation3 + $0x120] sm:$0xff] %v1314
      %1320 = vst [vmem:[#allocation3 + $0x128] sm:$0xff] %v1316
      %1321 = vrot.lane.b32.xlu0 %v1231, 110
      %v1322 = vpop.permute.xlu0 %1321
      %1323 = vrot.lane.b32.xlu0 %v1232, 110
      %v1324 = vpop.permute.xlu0 %1323
      %1325 = vrot.lane.b32.xlu0 %v1233, 110
      %v1326 = vpop.permute.xlu0 %1325
      %1327 = vrot.lane.b32.xlu0 %v1234, 110
      %v1328 = vpop.permute.xlu0 %1327
      %v1329 = vrot.slane %v1322, 4
      %v1330 = vrot.slane %v1324, 4
      %v1331 = vrot.slane %v1326, 4
      %v1332 = vrot.slane %v1328, 4
      %v1333 = vsel %vm254, %v1329, %v1330
      %v1334 = vsel %vm676, %v1322, %v1333
      %v1335 = vsel %vm254, %v1331, %v1332
      %v1336 = vsel %vm676, %v1326, %v1335
      %1339 = vst [vmem:[#allocation3 + $0x160] sm:$0xff] %v1334
      %1340 = vst [vmem:[#allocation3 + $0x168] sm:$0xff] %v1336
      %1341 = vrot.lane.b32.xlu0 %v1231, 96
      %v1342 = vpop.permute.xlu0 %1341
      %1343 = vrot.lane.b32.xlu0 %v1232, 96
      %v1344 = vpop.permute.xlu0 %1343
      %1345 = vrot.lane.b32.xlu0 %v1233, 96
      %v1346 = vpop.permute.xlu0 %1345
      %1347 = vrot.lane.b32.xlu0 %v1234, 96
      %v1348 = vpop.permute.xlu0 %1347
      %v1349 = vrot.slane %v1342, 4
      %v1350 = vrot.slane %v1344, 4
      %v1351 = vrot.slane %v1346, 4
      %v1352 = vrot.slane %v1348, 4
      %v1353 = vsel %vm254, %v1349, %v1350
      %v1354 = vsel %vm697, %v1342, %v1353
      %v1355 = vsel %vm254, %v1351, %v1352
      %v1356 = vsel %vm697, %v1346, %v1355
      %1359 = vst [vmem:[#allocation3 + $0x1a0] sm:$0xff] %v1354
      %1360 = vst [vmem:[#allocation3 + $0x1a8] sm:$0xff] %v1356
      %1361 = vrot.lane.b32.xlu0 %v1231, 95
      %v1362 = vpop.permute.xlu0 %1361
      %1363 = vrot.lane.b32.xlu0 %v1232, 95
      %v1364 = vpop.permute.xlu0 %1363
      %1365 = vrot.lane.b32.xlu0 %v1233, 95
      %v1366 = vpop.permute.xlu0 %1365
      %1367 = vrot.lane.b32.xlu0 %v1234, 95
      %v1368 = vpop.permute.xlu0 %1367
      %v1369 = vrot.slane %v1362, 4
      %v1370 = vrot.slane %v1364, 4
      %v1371 = vrot.slane %v1366, 4
      %v1372 = vrot.slane %v1368, 4
      %v1373 = vsel %vm254, %v1369, %v1370
      %v1374 = vsel %vm718, %v1362, %v1373
      %v1375 = vsel %vm254, %v1371, %v1372
      %v1376 = vsel %vm718, %v1366, %v1375
      %1379 = vst [vmem:[#allocation3 + $0x1e0] sm:$0xff] %v1374
      %1380 = vst [vmem:[#allocation3 + $0x1e8] sm:$0xff] %v1376
      %1381 = vrot.lane.b32.xlu0 %v1231, 94
      %v1382 = vpop.permute.xlu0 %1381
      %1383 = vrot.lane.b32.xlu0 %v1232, 94
      %v1384 = vpop.permute.xlu0 %1383
      %1385 = vrot.lane.b32.xlu0 %v1233, 94
      %v1386 = vpop.permute.xlu0 %1385
      %1387 = vrot.lane.b32.xlu0 %v1234, 94
      %v1388 = vpop.permute.xlu0 %1387
      %v1389 = vrot.slane %v1382, 4
      %v1390 = vrot.slane %v1384, 4
      %v1391 = vrot.slane %v1386, 4
      %v1392 = vrot.slane %v1388, 4
      %v1393 = vsel %vm254, %v1389, %v1390
      %v1394 = vsel %vm739, %v1382, %v1393
      %v1395 = vsel %vm254, %v1391, %v1392
      %v1396 = vsel %vm739, %v1386, %v1395
      %1399 = vst [vmem:[#allocation3 + $0x220] sm:$0xff] %v1394
      %1400 = vst [vmem:[#allocation3 + $0x228] sm:$0xff] %v1396
      %v1401 = vld [vmem:[%s1 + $0x60] sm:$0xf]
      %v1402 = vld [vmem:[%s1 + $0x64] sm:$0xf]
      %v1403 = vld [vmem:[%s1 + $0x68] sm:$0xf]
      %v1404 = vld [vmem:[%s1 + $0x6c] sm:$0xf]
      %v1405 = vld [vmem:[%s1 + $0x70] sm:$0xf]
      %v1406 = vld [vmem:[%s1 + $0x74] sm:$0xf]
      %v1407 = vld [vmem:[%s1 + $0x78] sm:$0xf]
      %v1408 = vld [vmem:[%s1 + $0x7c] sm:$0xf]
      %v1417 = vunpack.c.l.b16 %v1401
      %v1418 = vunpack.c.l.b16 %v1402
      %v1419 = vunpack.c.l.b16 %v1403
      %v1420 = vunpack.c.l.b16 %v1404
      %v1421 = vunpack.c.l.b16 %v1405
      %v1422 = vunpack.c.l.b16 %v1406
      %v1423 = vunpack.c.l.b16 %v1407
      %v1424 = vunpack.c.l.b16 %v1408
      %v1425 = vpack.c.b16 %v1418, %v1417
      %v1426 = vpack.c.b16 %v1420, %v1419
      %v1427 = vpack.c.b16 %v1422, %v1421
      %v1428 = vpack.c.b16 %v1424, %v1423
      %v1430 = vsel %vm432, %v1425, 0
      %v1433 = vsel %vm432, %v1426, 0
      %v1436 = vsel %vm432, %v1427, 0
      %v1439 = vsel %vm432, %v1428, 0
      %1441 = vmatpush.bf16.msra.mxu0 0
      %1442 = vmatpush.bf16.msra.mxu0 0
      %1443 = vmatpush.bf16.msra.mxu0 0
      %1444 = vmatpush.bf16.msra.mxu0 0
      %1445 = vmatpush.bf16.msra.mxu0 %v417
      %1446 = vmatpush.bf16.msra.mxu0 %v414
      %1447 = vmatpush.bf16.msra.mxu0 %v411
      %1448 = vmatpush.bf16.msra.mxu0 %v408
      %1449 = vmatmul.bf16.gmra.mxu0 %v1430
      %v1450 = vpop.f32.mrf.mxu0
      %v1451 = vadd.f32 0.0, %v1450
      %v1452 = vpop.f32.mrf.mxu0
      %v1453 = vadd.f32 0.0, %v1452
      %1454 = vmatmul.bf16.gmra.mxu0 %v1433
      %v1455 = vpop.f32.mrf.mxu0
      %v1456 = vadd.f32 0.0, %v1455
      %v1457 = vpop.f32.mrf.mxu0
      %v1458 = vadd.f32 0.0, %v1457
      %1459 = vmatmul.bf16.gmra.mxu0 %v1436
      %v1460 = vpop.f32.mrf.mxu0
      %v1461 = vadd.f32 0.0, %v1460
      %v1462 = vpop.f32.mrf.mxu0
      %v1463 = vadd.f32 0.0, %v1462
      %1464 = vmatmul.bf16.gmra.mxu0 %v1439
      %v1465 = vpop.f32.mrf.mxu0
      %v1466 = vadd.f32 0.0, %v1465
      %v1467 = vpop.f32.mrf.mxu0
      %v1468 = vadd.f32 0.0, %v1467
      %1469 = vdwg.mxu0
      %1470 = vmatpush.bf16.msra.mxu0 0
      %1471 = vmatpush.bf16.msra.mxu0 0
      %1472 = vmatpush.bf16.msra.mxu0 0
      %1473 = vmatpush.bf16.msra.mxu0 0
      %1474 = vmatpush.bf16.msra.mxu0 %v418
      %1475 = vmatpush.bf16.msra.mxu0 %v415
      %1476 = vmatpush.bf16.msra.mxu0 %v412
      %1477 = vmatpush.bf16.msra.mxu0 %v409
      %1478 = vmatmul.bf16.gmra.mxu0 %v1430
      %v1479 = vpop.f32.mrf.mxu0
      %v1480 = vadd.f32 0.0, %v1479
      %v1481 = vpop.f32.mrf.mxu0
      %v1482 = vadd.f32 0.0, %v1481
      %1483 = vmatmul.bf16.gmra.mxu0 %v1433
      %v1484 = vpop.f32.mrf.mxu0
      %v1485 = vadd.f32 0.0, %v1484
      %v1486 = vpop.f32.mrf.mxu0
      %v1487 = vadd.f32 0.0, %v1486
      %1488 = vmatmul.bf16.gmra.mxu0 %v1436
      %v1489 = vpop.f32.mrf.mxu0
      %v1490 = vadd.f32 0.0, %v1489
      %v1491 = vpop.f32.mrf.mxu0
      %v1492 = vadd.f32 0.0, %v1491
      %1493 = vmatmul.bf16.gmra.mxu0 %v1439
      %v1494 = vpop.f32.mrf.mxu0
      %v1495 = vadd.f32 0.0, %v1494
      %v1496 = vpop.f32.mrf.mxu0
      %v1497 = vadd.f32 0.0, %v1496
      %1498 = vdwg.mxu0
      %1499 = vmatpush.bf16.msra.mxu0 0
      %1500 = vmatpush.bf16.msra.mxu0 0
      %1501 = vmatpush.bf16.msra.mxu0 0
      %1502 = vmatpush.bf16.msra.mxu0 0
      %1503 = vmatpush.bf16.msra.mxu0 %v419
      %1504 = vmatpush.bf16.msra.mxu0 %v416
      %1505 = vmatpush.bf16.msra.mxu0 %v413
      %1506 = vmatpush.bf16.msra.mxu0 %v410
      %1507 = vmatmul.bf16.gmra.mxu0 %v1430
      %v1508 = vpop.f32.mrf.mxu0
      %v1509 = vadd.f32 0.0, %v1508
      %v1510 = vpop.f32.mrf.mxu0
      %v1511 = vadd.f32 0.0, %v1510
      %1512 = vmatmul.bf16.gmra.mxu0 %v1433
      %v1513 = vpop.f32.mrf.mxu0
      %v1514 = vadd.f32 0.0, %v1513
      %v1515 = vpop.f32.mrf.mxu0
      %v1516 = vadd.f32 0.0, %v1515
      %1517 = vmatmul.bf16.gmra.mxu0 %v1436
      %v1518 = vpop.f32.mrf.mxu0
      %v1519 = vadd.f32 0.0, %v1518
      %v1520 = vpop.f32.mrf.mxu0
      %v1521 = vadd.f32 0.0, %v1520
      %1522 = vmatmul.bf16.gmra.mxu0 %v1439
      %v1523 = vpop.f32.mrf.mxu0
      %v1524 = vadd.f32 0.0, %v1523
      %v1525 = vpop.f32.mrf.mxu0
      %v1526 = vadd.f32 0.0, %v1525
      %1527 = vdwg.mxu0
      %v1528 = vmax.f32 %v1451, %v1456
      %v1529 = vmax.f32 %v1480, %v1485
      %v1530 = vmax.f32 %v1509, %v1514
      %v1531 = vmax.f32 %v1453, %v1458
      %v1532 = vmax.f32 %v1482, %v1487
      %v1533 = vmax.f32 %v1511, %v1516
      %v1534 = vmax.f32 %v1461, %v1466
      %v1535 = vmax.f32 %v1490, %v1495
      %v1536 = vmax.f32 %v1519, %v1524
      %v1537 = vmax.f32 %v1463, %v1468
      %v1538 = vmax.f32 %v1492, %v1497
      %v1539 = vmax.f32 %v1521, %v1526
      %v1540 = vmax.f32 %v1528, %v1534
      %v1541 = vmax.f32 %v1529, %v1535
      %v1542 = vmax.f32 %v1530, %v1536
      %v1543 = vmax.f32 %v1531, %v1537
      %v1544 = vmax.f32 %v1532, %v1538
      %v1545 = vmax.f32 %v1533, %v1539
      %v1546 = vadd.f32 %v1540, %v553
      %v1547 = vadd.f32 %v1541, %v553
      %v1548 = vadd.f32 %v1542, %v553
      %v1549 = vadd.f32 %v1543, %v558
      %v1550 = vadd.f32 %v1544, %v558
      %v1551 = vadd.f32 %v1545, %v558
      %v1552 = vmax.f32 %v1546, 0.0
      %v1553 = vmax.f32 %v1547, 0.0
      %v1554 = vmax.f32 %v1548, 0.0
      %v1555 = vmax.f32 %v1549, 0.0
      %v1556 = vmax.f32 %v1550, 0.0
      %v1557 = vmax.f32 %v1551, 0.0
      %v1558 = vpack.c.bf16 %v1553, %v1552
      %v1559 = vpack.c.bf16 %v1554, %v1554
      %v1560 = vpack.c.bf16 %v1556, %v1555
      %v1561 = vpack.c.bf16 %v1557, %v1557
      %1562 = vst [vmem:[#allocation3 + $0x30] sm:$0xff] %v1558
      %1563 = vst [vmem:[#allocation3 + $0x38] sm:$0xff] %v1560
      %1568 = vrot.lane.b32.xlu0 %v1558, 127
      %v1569 = vpop.permute.xlu0 %1568
      %1570 = vrot.lane.b32.xlu0 %v1559, 127
      %v1571 = vpop.permute.xlu0 %1570
      %1572 = vrot.lane.b32.xlu0 %v1560, 127
      %v1573 = vpop.permute.xlu0 %1572
      %1574 = vrot.lane.b32.xlu0 %v1561, 127
      %v1575 = vpop.permute.xlu0 %1574
      %v1576 = vrot.slane %v1569, 4
      %v1577 = vrot.slane %v1571, 4
      %v1578 = vrot.slane %v1573, 4
      %v1579 = vrot.slane %v1575, 4
      %v1580 = vsel %vm254, %v1576, %v1577
      %v1581 = vsel %vm256, %v1569, %v1580
      %v1582 = vsel %vm254, %v1578, %v1579
      %v1583 = vsel %vm256, %v1573, %v1582
      %1586 = vst [vmem:[#allocation3 + $0x70] sm:$0xff] %v1581
      %1587 = vst [vmem:[#allocation3 + $0x78] sm:$0xff] %v1583
      %1588 = vrot.lane.b32.xlu0 %v1558, 126
      %v1589 = vpop.permute.xlu0 %1588
      %1590 = vrot.lane.b32.xlu0 %v1559, 126
      %v1591 = vpop.permute.xlu0 %1590
      %1592 = vrot.lane.b32.xlu0 %v1560, 126
      %v1593 = vpop.permute.xlu0 %1592
      %1594 = vrot.lane.b32.xlu0 %v1561, 126
      %v1595 = vpop.permute.xlu0 %1594
      %v1596 = vrot.slane %v1589, 4
      %v1597 = vrot.slane %v1591, 4
      %v1598 = vrot.slane %v1593, 4
      %v1599 = vrot.slane %v1595, 4
      %v1600 = vsel %vm254, %v1596, %v1597
      %v1601 = vsel %vm615, %v1589, %v1600
      %v1602 = vsel %vm254, %v1598, %v1599
      %v1603 = vsel %vm615, %v1593, %v1602
      %1606 = vst [vmem:[#allocation3 + $0xb0] sm:$0xff] %v1601
      %1607 = vst [vmem:[#allocation3 + $0xb8] sm:$0xff] %v1603
      %1608 = vrot.lane.b32.xlu0 %v1558, 112
      %v1609 = vpop.permute.xlu0 %1608
      %1610 = vrot.lane.b32.xlu0 %v1559, 112
      %v1611 = vpop.permute.xlu0 %1610
      %1612 = vrot.lane.b32.xlu0 %v1560, 112
      %v1613 = vpop.permute.xlu0 %1612
      %1614 = vrot.lane.b32.xlu0 %v1561, 112
      %v1615 = vpop.permute.xlu0 %1614
      %v1616 = vrot.slane %v1609, 4
      %v1617 = vrot.slane %v1611, 4
      %v1618 = vrot.slane %v1613, 4
      %v1619 = vrot.slane %v1615, 4
      %v1620 = vsel %vm254, %v1616, %v1617
      %v1621 = vsel %vm283, %v1609, %v1620
      %v1622 = vsel %vm254, %v1618, %v1619
      %v1623 = vsel %vm283, %v1613, %v1622
      %1626 = vst [vmem:[#allocation3 + $0xf0] sm:$0xff] %v1621
      %1627 = vst [vmem:[#allocation3 + $0xf8] sm:$0xff] %v1623
      %1628 = vrot.lane.b32.xlu0 %v1558, 111
      %v1629 = vpop.permute.xlu0 %1628
      %1630 = vrot.lane.b32.xlu0 %v1559, 111
      %v1631 = vpop.permute.xlu0 %1630
      %1632 = vrot.lane.b32.xlu0 %v1560, 111
      %v1633 = vpop.permute.xlu0 %1632
      %1634 = vrot.lane.b32.xlu0 %v1561, 111
      %v1635 = vpop.permute.xlu0 %1634
      %v1636 = vrot.slane %v1629, 4
      %v1637 = vrot.slane %v1631, 4
      %v1638 = vrot.slane %v1633, 4
      %v1639 = vrot.slane %v1635, 4
      %v1640 = vsel %vm254, %v1636, %v1637
      %v1641 = vsel %vm310, %v1629, %v1640
      %v1642 = vsel %vm254, %v1638, %v1639
      %v1643 = vsel %vm310, %v1633, %v1642
      %1646 = vst [vmem:[#allocation3 + $0x130] sm:$0xff] %v1641
      %1647 = vst [vmem:[#allocation3 + $0x138] sm:$0xff] %v1643
      %1648 = vrot.lane.b32.xlu0 %v1558, 110
      %v1649 = vpop.permute.xlu0 %1648
      %1650 = vrot.lane.b32.xlu0 %v1559, 110
      %v1651 = vpop.permute.xlu0 %1650
      %1652 = vrot.lane.b32.xlu0 %v1560, 110
      %v1653 = vpop.permute.xlu0 %1652
      %1654 = vrot.lane.b32.xlu0 %v1561, 110
      %v1655 = vpop.permute.xlu0 %1654
      %v1656 = vrot.slane %v1649, 4
      %v1657 = vrot.slane %v1651, 4
      %v1658 = vrot.slane %v1653, 4
      %v1659 = vrot.slane %v1655, 4
      %v1660 = vsel %vm254, %v1656, %v1657
      %v1661 = vsel %vm676, %v1649, %v1660
      %v1662 = vsel %vm254, %v1658, %v1659
      %v1663 = vsel %vm676, %v1653, %v1662
      %1666 = vst [vmem:[#allocation3 + $0x170] sm:$0xff] %v1661
      %1667 = vst [vmem:[#allocation3 + $0x178] sm:$0xff] %v1663
      %1668 = vrot.lane.b32.xlu0 %v1558, 96
      %v1669 = vpop.permute.xlu0 %1668
      %1670 = vrot.lane.b32.xlu0 %v1559, 96
      %v1671 = vpop.permute.xlu0 %1670
      %1672 = vrot.lane.b32.xlu0 %v1560, 96
      %v1673 = vpop.permute.xlu0 %1672
      %1674 = vrot.lane.b32.xlu0 %v1561, 96
      %v1675 = vpop.permute.xlu0 %1674
      %v1676 = vrot.slane %v1669, 4
      %v1677 = vrot.slane %v1671, 4
      %v1678 = vrot.slane %v1673, 4
      %v1679 = vrot.slane %v1675, 4
      %v1680 = vsel %vm254, %v1676, %v1677
      %v1681 = vsel %vm697, %v1669, %v1680
      %v1682 = vsel %vm254, %v1678, %v1679
      %v1683 = vsel %vm697, %v1673, %v1682
      %1686 = vst [vmem:[#allocation3 + $0x1b0] sm:$0xff] %v1681
      %1687 = vst [vmem:[#allocation3 + $0x1b8] sm:$0xff] %v1683
      %1688 = vrot.lane.b32.xlu0 %v1558, 95
      %v1689 = vpop.permute.xlu0 %1688
      %1690 = vrot.lane.b32.xlu0 %v1559, 95
      %v1691 = vpop.permute.xlu0 %1690
      %1692 = vrot.lane.b32.xlu0 %v1560, 95
      %v1693 = vpop.permute.xlu0 %1692
      %1694 = vrot.lane.b32.xlu0 %v1561, 95
      %v1695 = vpop.permute.xlu0 %1694
      %v1696 = vrot.slane %v1689, 4
      %v1697 = vrot.slane %v1691, 4
      %v1698 = vrot.slane %v1693, 4
      %v1699 = vrot.slane %v1695, 4
      %v1700 = vsel %vm254, %v1696, %v1697
      %v1701 = vsel %vm718, %v1689, %v1700
      %v1702 = vsel %vm254, %v1698, %v1699
      %v1703 = vsel %vm718, %v1693, %v1702
      %1706 = vst [vmem:[#allocation3 + $0x1f0] sm:$0xff] %v1701
      %1707 = vst [vmem:[#allocation3 + $0x1f8] sm:$0xff] %v1703
      %1708 = vrot.lane.b32.xlu0 %v1558, 94
      %v1709 = vpop.permute.xlu0 %1708
      %1710 = vrot.lane.b32.xlu0 %v1559, 94
      %v1711 = vpop.permute.xlu0 %1710
      %1712 = vrot.lane.b32.xlu0 %v1560, 94
      %v1713 = vpop.permute.xlu0 %1712
      %1714 = vrot.lane.b32.xlu0 %v1561, 94
      %v1715 = vpop.permute.xlu0 %1714
      %v1716 = vrot.slane %v1709, 4
      %v1717 = vrot.slane %v1711, 4
      %v1718 = vrot.slane %v1713, 4
      %v1719 = vrot.slane %v1715, 4
      %v1720 = vsel %vm254, %v1716, %v1717
      %v1721 = vsel %vm739, %v1709, %v1720
      %v1722 = vsel %vm254, %v1718, %v1719
      %v1723 = vsel %vm739, %v1713, %v1722
      %1726 = vst [vmem:[#allocation3 + $0x230] sm:$0xff] %v1721
      %1727 = vst [vmem:[#allocation3 + $0x238] sm:$0xff] %v1723
      %v1728 = vld [vmem:[%s3] sm:$0xff]
      %v1729 = vld [vmem:[%s3 + $0x8] sm:$0xff]
      %v1730 = vld [vmem:[%s3 + $0x10] sm:$0xf]
      %v1731 = vld [vmem:[%s3 + $0x14] sm:$0xff]
      %v1732 = vld [vmem:[%s3 + $0x1c] sm:$0xff]
      %v1733 = vld [vmem:[%s3 + $0x24] sm:$0xf]
      %v1734 = vld [vmem:[%s3 + $0x28] sm:$0xff]
      %v1735 = vld [vmem:[%s3 + $0x30] sm:$0xff]
      %v1736 = vld [vmem:[%s3 + $0x38] sm:$0xf]
      %v1737 = vld [vmem:[%s3 + $0x3c] sm:$0xff]
      %v1738 = vld [vmem:[%s3 + $0x44] sm:$0xff]
      %v1739 = vld [vmem:[%s3 + $0x4c] sm:$0xf]
      %v1740 = vld [vmem:[%s3 + $0x50] sm:$0xff]
      %v1741 = vld [vmem:[%s3 + $0x58] sm:$0xff]
      %v1742 = vld [vmem:[%s3 + $0x60] sm:$0xf]
      %v1743 = vld [vmem:[%s3 + $0x64] sm:$0xff]
      %v1744 = vld [vmem:[%s3 + $0x6c] sm:$0xff]
      %v1745 = vld [vmem:[%s3 + $0x74] sm:$0xf]
      %v1746 = vld [vmem:[%s3 + $0x78] sm:$0xff]
      %v1747 = vld [vmem:[%s3 + $0x80] sm:$0xff]
      %v1748 = vld [vmem:[%s3 + $0x88] sm:$0xf]
      %v1749 = vld [vmem:[%s3 + $0x8c] sm:$0xff]
      %v1750 = vld [vmem:[%s3 + $0x94] sm:$0xff]
      %v1751 = vld [vmem:[%s3 + $0x9c] sm:$0xf]
      %v1752 = vld [vmem:[#allocation3] sm:$0xff]
      %v1753 = vld [vmem:[#allocation3 + $0x8] sm:$0xff]
      %v1754 = vld [vmem:[#allocation3 + $0x10] sm:$0xff]
      %v1755 = vld [vmem:[#allocation3 + $0x18] sm:$0xff]
      %v1756 = vld [vmem:[#allocation3 + $0x20] sm:$0xff]
      %v1757 = vld [vmem:[#allocation3 + $0x28] sm:$0xff]
      %v1758 = vld [vmem:[#allocation3 + $0x30] sm:$0xff]
      %v1759 = vld [vmem:[#allocation3 + $0x38] sm:$0xff]
      %v1760 = vld [vmem:[#allocation3 + $0x40] sm:$0xff]
      %v1761 = vld [vmem:[#allocation3 + $0x48] sm:$0xff]
      %v1762 = vld [vmem:[#allocation3 + $0x50] sm:$0xff]
      %v1763 = vld [vmem:[#allocation3 + $0x58] sm:$0xff]
      %v1764 = vld [vmem:[#allocation3 + $0x60] sm:$0xff]
      %v1765 = vld [vmem:[#allocation3 + $0x68] sm:$0xff]
      %v1766 = vld [vmem:[#allocation3 + $0x70] sm:$0xff]
      %v1767 = vld [vmem:[#allocation3 + $0x78] sm:$0xff]
      %v1768 = vld [vmem:[#allocation3 + $0x80] sm:$0xff]
      %v1769 = vld [vmem:[#allocation3 + $0x88] sm:$0xff]
      %v1770 = vld [vmem:[#allocation3 + $0x90] sm:$0xff]
      %v1771 = vld [vmem:[#allocation3 + $0x98] sm:$0xff]
      %v1772 = vld [vmem:[#allocation3 + $0xa0] sm:$0xff]
      %v1773 = vld [vmem:[#allocation3 + $0xa8] sm:$0xff]
      %v1774 = vld [vmem:[#allocation3 + $0xb0] sm:$0xff]
      %v1775 = vld [vmem:[#allocation3 + $0xb8] sm:$0xff]
      %v1776 = vld [vmem:[#allocation3 + $0xc0] sm:$0xff]
      %v1777 = vld [vmem:[#allocation3 + $0xc8] sm:$0xff]
      %v1778 = vld [vmem:[#allocation3 + $0xd0] sm:$0xff]
      %v1779 = vld [vmem:[#allocation3 + $0xd8] sm:$0xff]
      %v1780 = vld [vmem:[#allocation3 + $0xe0] sm:$0xff]
      %v1781 = vld [vmem:[#allocation3 + $0xe8] sm:$0xff]
      %v1782 = vld [vmem:[#allocation3 + $0xf0] sm:$0xff]
      %v1783 = vld [vmem:[#allocation3 + $0xf8] sm:$0xff]
      %v1784 = vld [vmem:[#allocation3 + $0x100] sm:$0xff]
      %v1785 = vld [vmem:[#allocation3 + $0x108] sm:$0xff]
      %v1786 = vld [vmem:[#allocation3 + $0x110] sm:$0xff]
      %v1787 = vld [vmem:[#allocation3 + $0x118] sm:$0xff]
      %v1788 = vld [vmem:[#allocation3 + $0x120] sm:$0xff]
      %v1789 = vld [vmem:[#allocation3 + $0x128] sm:$0xff]
      %v1790 = vld [vmem:[#allocation3 + $0x130] sm:$0xff]
      %v1791 = vld [vmem:[#allocation3 + $0x138] sm:$0xff]
      %v1792 = vld [vmem:[#allocation3 + $0x140] sm:$0xff]
      %v1793 = vld [vmem:[#allocation3 + $0x148] sm:$0xff]
      %v1794 = vld [vmem:[#allocation3 + $0x150] sm:$0xff]
      %v1795 = vld [vmem:[#allocation3 + $0x158] sm:$0xff]
      %v1796 = vld [vmem:[#allocation3 + $0x160] sm:$0xff]
      %v1797 = vld [vmem:[#allocation3 + $0x168] sm:$0xff]
      %v1798 = vld [vmem:[#allocation3 + $0x170] sm:$0xff]
      %v1799 = vld [vmem:[#allocation3 + $0x178] sm:$0xff]
      %v1800 = vld [vmem:[#allocation3 + $0x180] sm:$0xff]
      %v1801 = vld [vmem:[#allocation3 + $0x188] sm:$0xff]
      %v1802 = vld [vmem:[#allocation3 + $0x190] sm:$0xff]
      %v1803 = vld [vmem:[#allocation3 + $0x198] sm:$0xff]
      %v1804 = vld [vmem:[#allocation3 + $0x1a0] sm:$0xff]
      %v1805 = vld [vmem:[#allocation3 + $0x1a8] sm:$0xff]
      %v1806 = vld [vmem:[#allocation3 + $0x1b0] sm:$0xff]
      %v1807 = vld [vmem:[#allocation3 + $0x1b8] sm:$0xff]
      %v1808 = vld [vmem:[#allocation3 + $0x1c0] sm:$0xff]
      %v1809 = vld [vmem:[#allocation3 + $0x1c8] sm:$0xff]
      %v1810 = vld [vmem:[#allocation3 + $0x1d0] sm:$0xff]
      %v1811 = vld [vmem:[#allocation3 + $0x1d8] sm:$0xff]
      %v1812 = vld [vmem:[#allocation3 + $0x1e0] sm:$0xff]
      %v1813 = vld [vmem:[#allocation3 + $0x1e8] sm:$0xff]
      %v1814 = vld [vmem:[#allocation3 + $0x1f0] sm:$0xff]
      %v1815 = vld [vmem:[#allocation3 + $0x1f8] sm:$0xff]
      %v1816 = vld [vmem:[#allocation3 + $0x200] sm:$0xff]
      %v1817 = vld [vmem:[#allocation3 + $0x208] sm:$0xff]
      %v1818 = vld [vmem:[#allocation3 + $0x210] sm:$0xff]
      %v1819 = vld [vmem:[#allocation3 + $0x218] sm:$0xff]
      %v1820 = vld [vmem:[#allocation3 + $0x220] sm:$0xff]
      %v1821 = vld [vmem:[#allocation3 + $0x228] sm:$0xff]
      %v1822 = vld [vmem:[#allocation3 + $0x230] sm:$0xff]
      %v1823 = vld [vmem:[#allocation3 + $0x238] sm:$0xff]
      %v1848 = vunpack.c.l.b16 %v1728
      %v1849 = vunpack.c.h.b16 %v1728
      %v1850 = vunpack.c.l.b16 %v1729
      %v1851 = vunpack.c.h.b16 %v1729
      %v1852 = vunpack.c.l.b16 %v1730
      %v1853 = vunpack.c.l.b16 %v1731
      %v1854 = vunpack.c.h.b16 %v1731
      %v1855 = vunpack.c.l.b16 %v1732
      %v1856 = vunpack.c.h.b16 %v1732
      %v1857 = vunpack.c.l.b16 %v1733
      %v1858 = vunpack.c.l.b16 %v1734
      %v1859 = vunpack.c.h.b16 %v1734
      %v1860 = vunpack.c.l.b16 %v1735
      %v1861 = vunpack.c.h.b16 %v1735
      %v1862 = vunpack.c.l.b16 %v1736
      %v1863 = vunpack.c.l.b16 %v1737
      %v1864 = vunpack.c.h.b16 %v1737
      %v1865 = vunpack.c.l.b16 %v1738
      %v1866 = vunpack.c.h.b16 %v1738
      %v1867 = vunpack.c.l.b16 %v1739
      %v1868 = vunpack.c.l.b16 %v1740
      %v1869 = vunpack.c.h.b16 %v1740
      %v1870 = vunpack.c.l.b16 %v1741
      %v1871 = vunpack.c.h.b16 %v1741
      %v1872 = vunpack.c.l.b16 %v1742
      %v1873 = vunpack.c.l.b16 %v1743
      %v1874 = vunpack.c.h.b16 %v1743
      %v1875 = vunpack.c.l.b16 %v1744
      %v1876 = vunpack.c.h.b16 %v1744
      %v1877 = vunpack.c.l.b16 %v1745
      %v1878 = vunpack.c.l.b16 %v1746
      %v1879 = vunpack.c.h.b16 %v1746
      %v1880 = vunpack.c.l.b16 %v1747
      %v1881 = vunpack.c.h.b16 %v1747
      %v1882 = vunpack.c.l.b16 %v1748
      %v1883 = vunpack.c.l.b16 %v1749
      %v1884 = vunpack.c.h.b16 %v1749
      %v1885 = vunpack.c.l.b16 %v1750
      %v1886 = vunpack.c.h.b16 %v1750
      %v1887 = vunpack.c.l.b16 %v1751
      %v1888 = vpack.c.b16 %v1853, %v1848
      %v1889 = vpack.c.b16 %v1854, %v1849
      %v1890 = vpack.c.b16 %v1855, %v1850
      %v1891 = vpack.c.b16 %v1856, %v1851
      %v1892 = vpack.c.b16 %v1857, %v1852
      %v1893 = vpack.c.b16 %v1863, %v1858
      %v1894 = vpack.c.b16 %v1864, %v1859
      %v1895 = vpack.c.b16 %v1865, %v1860
      %v1896 = vpack.c.b16 %v1866, %v1861
      %v1897 = vpack.c.b16 %v1867, %v1862
      %v1898 = vpack.c.b16 %v1873, %v1868
      %v1899 = vpack.c.b16 %v1874, %v1869
      %v1900 = vpack.c.b16 %v1875, %v1870
      %v1901 = vpack.c.b16 %v1876, %v1871
      %v1902 = vpack.c.b16 %v1877, %v1872
      %v1903 = vpack.c.b16 %v1883, %v1878
      %v1904 = vpack.c.b16 %v1884, %v1879
      %v1905 = vpack.c.b16 %v1885, %v1880
      %v1906 = vpack.c.b16 %v1886, %v1881
      %v1907 = vpack.c.b16 %v1887, %v1882
      %v1996 = vunpack.c.l.b16 %v1752
      %v1997 = vunpack.c.h.b16 %v1752
      %v1998 = vunpack.c.l.b16 %v1753
      %v1999 = vunpack.c.h.b16 %v1753
      %v2000 = vunpack.c.l.b16 %v1754
      %v2001 = vunpack.c.h.b16 %v1754
      %v2002 = vunpack.c.l.b16 %v1755
      %v2003 = vunpack.c.h.b16 %v1755
      %v2004 = vunpack.c.l.b16 %v1756
      %v2005 = vunpack.c.h.b16 %v1756
      %v2006 = vunpack.c.l.b16 %v1757
      %v2007 = vunpack.c.h.b16 %v1757
      %v2008 = vunpack.c.l.b16 %v1758
      %v2009 = vunpack.c.h.b16 %v1758
      %v2010 = vunpack.c.l.b16 %v1759
      %v2011 = vunpack.c.h.b16 %v1759
      %v2012 = vunpack.c.l.b16 %v1760
      %v2013 = vunpack.c.h.b16 %v1760
      %v2014 = vunpack.c.l.b16 %v1761
      %v2015 = vunpack.c.h.b16 %v1761
      %v2016 = vunpack.c.l.b16 %v1762
      %v2017 = vunpack.c.h.b16 %v1762
      %v2018 = vunpack.c.l.b16 %v1763
      %v2019 = vunpack.c.h.b16 %v1763
      %v2020 = vunpack.c.l.b16 %v1764
      %v2021 = vunpack.c.h.b16 %v1764
      %v2022 = vunpack.c.l.b16 %v1765
      %v2023 = vunpack.c.h.b16 %v1765
      %v2024 = vunpack.c.l.b16 %v1766
      %v2025 = vunpack.c.h.b16 %v1766
      %v2026 = vunpack.c.l.b16 %v1767
      %v2027 = vunpack.c.h.b16 %v1767
      %v2028 = vunpack.c.l.b16 %v1768
      %v2029 = vunpack.c.h.b16 %v1768
      %v2030 = vunpack.c.l.b16 %v1769
      %v2031 = vunpack.c.h.b16 %v1769
      %v2032 = vunpack.c.l.b16 %v1770
      %v2033 = vunpack.c.h.b16 %v1770
      %v2034 = vunpack.c.l.b16 %v1771
      %v2035 = vunpack.c.h.b16 %v1771
      %v2036 = vunpack.c.l.b16 %v1772
      %v2037 = vunpack.c.h.b16 %v1772
      %v2038 = vunpack.c.l.b16 %v1773
      %v2039 = vunpack.c.h.b16 %v1773
      %v2040 = vunpack.c.l.b16 %v1774
      %v2041 = vunpack.c.h.b16 %v1774
      %v2042 = vunpack.c.l.b16 %v1775
      %v2043 = vunpack.c.h.b16 %v1775
      %v2044 = vunpack.c.l.b16 %v1776
      %v2045 = vunpack.c.h.b16 %v1776
      %v2046 = vunpack.c.l.b16 %v1777
      %v2047 = vunpack.c.h.b16 %v1777
      %v2048 = vunpack.c.l.b16 %v1778
      %v2049 = vunpack.c.h.b16 %v1778
      %v2050 = vunpack.c.l.b16 %v1779
      %v2051 = vunpack.c.h.b16 %v1779
      %v2052 = vunpack.c.l.b16 %v1780
      %v2053 = vunpack.c.h.b16 %v1780
      %v2054 = vunpack.c.l.b16 %v1781
      %v2055 = vunpack.c.h.b16 %v1781
      %v2056 = vunpack.c.l.b16 %v1782
      %v2057 = vunpack.c.h.b16 %v1782
      %v2058 = vunpack.c.l.b16 %v1783
      %v2059 = vunpack.c.h.b16 %v1783
      %v2060 = vunpack.c.l.b16 %v1784
      %v2061 = vunpack.c.h.b16 %v1784
      %v2062 = vunpack.c.l.b16 %v1785
      %v2063 = vunpack.c.h.b16 %v1785
      %v2064 = vunpack.c.l.b16 %v1786
      %v2065 = vunpack.c.h.b16 %v1786
      %v2066 = vunpack.c.l.b16 %v1787
      %v2067 = vunpack.c.h.b16 %v1787
      %v2068 = vunpack.c.l.b16 %v1788
      %v2069 = vunpack.c.h.b16 %v1788
      %v2070 = vunpack.c.l.b16 %v1789
      %v2071 = vunpack.c.h.b16 %v1789
      %v2072 = vunpack.c.l.b16 %v1790
      %v2073 = vunpack.c.h.b16 %v1790
      %v2074 = vunpack.c.l.b16 %v1791
      %v2075 = vunpack.c.h.b16 %v1791
      %v2076 = vunpack.c.l.b16 %v1792
      %v2077 = vunpack.c.h.b16 %v1792
      %v2078 = vunpack.c.l.b16 %v1793
      %v2079 = vunpack.c.h.b16 %v1793
      %v2080 = vunpack.c.l.b16 %v1794
      %v2081 = vunpack.c.h.b16 %v1794
      %v2082 = vunpack.c.l.b16 %v1795
      %v2083 = vunpack.c.h.b16 %v1795
      %v2084 = vunpack.c.l.b16 %v1796
      %v2085 = vunpack.c.h.b16 %v1796
      %v2086 = vunpack.c.l.b16 %v1797
      %v2087 = vunpack.c.h.b16 %v1797
      %v2088 = vunpack.c.l.b16 %v1798
      %v2089 = vunpack.c.h.b16 %v1798
      %v2090 = vunpack.c.l.b16 %v1799
      %v2091 = vunpack.c.h.b16 %v1799
      %v2092 = vunpack.c.l.b16 %v1800
      %v2093 = vunpack.c.h.b16 %v1800
      %v2094 = vunpack.c.l.b16 %v1801
      %v2095 = vunpack.c.h.b16 %v1801
      %v2096 = vunpack.c.l.b16 %v1802
      %v2097 = vunpack.c.h.b16 %v1802
      %v2098 = vunpack.c.l.b16 %v1803
      %v2099 = vunpack.c.h.b16 %v1803
      %v2100 = vunpack.c.l.b16 %v1804
      %v2101 = vunpack.c.h.b16 %v1804
      %v2102 = vunpack.c.l.b16 %v1805
      %v2103 = vunpack.c.h.b16 %v1805
      %v2104 = vunpack.c.l.b16 %v1806
      %v2105 = vunpack.c.h.b16 %v1806
      %v2106 = vunpack.c.l.b16 %v1807
      %v2107 = vunpack.c.h.b16 %v1807
      %v2108 = vunpack.c.l.b16 %v1808
      %v2109 = vunpack.c.h.b16 %v1808
      %v2110 = vunpack.c.l.b16 %v1809
      %v2111 = vunpack.c.h.b16 %v1809
      %v2112 = vunpack.c.l.b16 %v1810
      %v2113 = vunpack.c.h.b16 %v1810
      %v2114 = vunpack.c.l.b16 %v1811
      %v2115 = vunpack.c.h.b16 %v1811
      %v2116 = vunpack.c.l.b16 %v1812
      %v2117 = vunpack.c.h.b16 %v1812
      %v2118 = vunpack.c.l.b16 %v1813
      %v2119 = vunpack.c.h.b16 %v1813
      %v2120 = vunpack.c.l.b16 %v1814
      %v2121 = vunpack.c.h.b16 %v1814
      %v2122 = vunpack.c.l.b16 %v1815
      %v2123 = vunpack.c.h.b16 %v1815
      %v2124 = vunpack.c.l.b16 %v1816
      %v2125 = vunpack.c.h.b16 %v1816
      %v2126 = vunpack.c.l.b16 %v1817
      %v2127 = vunpack.c.h.b16 %v1817
      %v2128 = vunpack.c.l.b16 %v1818
      %v2129 = vunpack.c.h.b16 %v1818
      %v2130 = vunpack.c.l.b16 %v1819
      %v2131 = vunpack.c.h.b16 %v1819
      %v2132 = vunpack.c.l.b16 %v1820
      %v2133 = vunpack.c.h.b16 %v1820
      %v2134 = vunpack.c.l.b16 %v1821
      %v2135 = vunpack.c.h.b16 %v1821
      %v2136 = vunpack.c.l.b16 %v1822
      %v2137 = vunpack.c.h.b16 %v1822
      %v2138 = vunpack.c.l.b16 %v1823
      %v2139 = vunpack.c.h.b16 %v1823
      %v2140 = vpack.c.b16 %v1998, %v1996
      %v2141 = vpack.c.b16 %v1999, %v1997
      %v2142 = vpack.c.b16 %v2002, %v2000
      %v2143 = vpack.c.b16 %v2003, %v2001
      %v2144 = vpack.c.b16 %v2006, %v2004
      %v2145 = vpack.c.b16 %v2007, %v2005
      %v2146 = vpack.c.b16 %v2010, %v2008
      %v2147 = vpack.c.b16 %v2011, %v2009
      %v2148 = vpack.c.b16 %v2014, %v2012
      %v2149 = vpack.c.b16 %v2015, %v2013
      %v2150 = vpack.c.b16 %v2018, %v2016
      %v2151 = vpack.c.b16 %v2019, %v2017
      %v2152 = vpack.c.b16 %v2022, %v2020
      %v2153 = vpack.c.b16 %v2023, %v2021
      %v2154 = vpack.c.b16 %v2026, %v2024
      %v2155 = vpack.c.b16 %v2027, %v2025
      %v2156 = vpack.c.b16 %v2030, %v2028
      %v2157 = vpack.c.b16 %v2031, %v2029
      %v2158 = vpack.c.b16 %v2034, %v2032
      %v2159 = vpack.c.b16 %v2035, %v2033
      %v2160 = vpack.c.b16 %v2038, %v2036
      %v2161 = vpack.c.b16 %v2039, %v2037
      %v2162 = vpack.c.b16 %v2042, %v2040
      %v2163 = vpack.c.b16 %v2043, %v2041
      %v2164 = vpack.c.b16 %v2046, %v2044
      %v2165 = vpack.c.b16 %v2047, %v2045
      %v2166 = vpack.c.b16 %v2050, %v2048
      %v2167 = vpack.c.b16 %v2051, %v2049
      %v2168 = vpack.c.b16 %v2054, %v2052
      %v2169 = vpack.c.b16 %v2055, %v2053
      %v2170 = vpack.c.b16 %v2058, %v2056
      %v2171 = vpack.c.b16 %v2059, %v2057
      %v2172 = vpack.c.b16 %v2062, %v2060
      %v2173 = vpack.c.b16 %v2063, %v2061
      %v2174 = vpack.c.b16 %v2066, %v2064
      %v2175 = vpack.c.b16 %v2067, %v2065
      %v2176 = vpack.c.b16 %v2070, %v2068
      %v2177 = vpack.c.b16 %v2071, %v2069
      %v2178 = vpack.c.b16 %v2074, %v2072
      %v2179 = vpack.c.b16 %v2075, %v2073
      %v2180 = vpack.c.b16 %v2078, %v2076
      %v2181 = vpack.c.b16 %v2079, %v2077
      %v2182 = vpack.c.b16 %v2082, %v2080
      %v2183 = vpack.c.b16 %v2083, %v2081
      %v2184 = vpack.c.b16 %v2086, %v2084
      %v2185 = vpack.c.b16 %v2087, %v2085
      %v2186 = vpack.c.b16 %v2090, %v2088
      %v2187 = vpack.c.b16 %v2091, %v2089
      %v2188 = vpack.c.b16 %v2094, %v2092
      %v2189 = vpack.c.b16 %v2095, %v2093
      %v2190 = vpack.c.b16 %v2098, %v2096
      %v2191 = vpack.c.b16 %v2099, %v2097
      %v2192 = vpack.c.b16 %v2102, %v2100
      %v2193 = vpack.c.b16 %v2103, %v2101
      %v2194 = vpack.c.b16 %v2106, %v2104
      %v2195 = vpack.c.b16 %v2107, %v2105
      %v2196 = vpack.c.b16 %v2110, %v2108
      %v2197 = vpack.c.b16 %v2111, %v2109
      %v2198 = vpack.c.b16 %v2114, %v2112
      %v2199 = vpack.c.b16 %v2115, %v2113
      %v2200 = vpack.c.b16 %v2118, %v2116
      %v2201 = vpack.c.b16 %v2119, %v2117
      %v2202 = vpack.c.b16 %v2122, %v2120
      %v2203 = vpack.c.b16 %v2123, %v2121
      %v2204 = vpack.c.b16 %v2126, %v2124
      %v2205 = vpack.c.b16 %v2127, %v2125
      %v2206 = vpack.c.b16 %v2130, %v2128
      %v2207 = vpack.c.b16 %v2131, %v2129
      %v2208 = vpack.c.b16 %v2134, %v2132
      %v2209 = vpack.c.b16 %v2135, %v2133
      %v2210 = vpack.c.b16 %v2138, %v2136
      %v2211 = vpack.c.b16 %v2139, %v2137
      %v2285 = vsel %vm432, %v1892, 0
      %v2288 = vsel %vm432, %v1897, 0
      %v2291 = vsel %vm432, %v1902, 0
      %v2294 = vsel %vm432, %v1907, 0
      %2296 = vmatpush.bf16.msra.mxu0 %v2154
      %2297 = vmatpush.bf16.msra.mxu0 %v2152
      %2298 = vmatpush.bf16.msra.mxu0 %v2150
      %2299 = vmatpush.bf16.msra.mxu0 %v2148
      %2300 = vmatpush.bf16.msra.mxu0 %v2146
      %2301 = vmatpush.bf16.msra.mxu0 %v2144
      %2302 = vmatpush.bf16.msra.mxu0 %v2142
      %2303 = vmatpush.bf16.msra.mxu0 %v2140
      %2304 = vmatmul.bf16.gmra.mxu0 %v1888
      %v2305 = vpop.f32.mrf.mxu0
      %v2306 = vadd.f32 0.0, %v2305
      %v2307 = vpop.f32.mrf.mxu0
      %v2308 = vadd.f32 0.0, %v2307
      %2309 = vmatmul.bf16.gmra.mxu0 %v1893
      %v2310 = vpop.f32.mrf.mxu0
      %v2311 = vadd.f32 0.0, %v2310
      %v2312 = vpop.f32.mrf.mxu0
      %v2313 = vadd.f32 0.0, %v2312
      %2314 = vmatmul.bf16.gmra.mxu0 %v1898
      %v2315 = vpop.f32.mrf.mxu0
      %v2316 = vadd.f32 0.0, %v2315
      %v2317 = vpop.f32.mrf.mxu0
      %v2318 = vadd.f32 0.0, %v2317
      %2319 = vmatmul.bf16.gmra.mxu0 %v1903
      %v2320 = vpop.f32.mrf.mxu0
      %v2321 = vadd.f32 0.0, %v2320
      %v2322 = vpop.f32.mrf.mxu0
      %v2323 = vadd.f32 0.0, %v2322
      %2324 = vdwg.mxu0
      %2325 = vmatpush.bf16.msra.mxu0 %v2170
      %2326 = vmatpush.bf16.msra.mxu0 %v2168
      %2327 = vmatpush.bf16.msra.mxu0 %v2166
      %2328 = vmatpush.bf16.msra.mxu0 %v2164
      %2329 = vmatpush.bf16.msra.mxu0 %v2162
      %2330 = vmatpush.bf16.msra.mxu0 %v2160
      %2331 = vmatpush.bf16.msra.mxu0 %v2158
      %2332 = vmatpush.bf16.msra.mxu0 %v2156
      %2333 = vmatmul.bf16.gmra.mxu0 %v1889
      %v2334 = vpop.f32.mrf.mxu0
      %v2335 = vadd.f32 %v2306, %v2334
      %v2336 = vpop.f32.mrf.mxu0
      %v2337 = vadd.f32 %v2308, %v2336
      %2338 = vmatmul.bf16.gmra.mxu0 %v1894
      %v2339 = vpop.f32.mrf.mxu0
      %v2340 = vadd.f32 %v2311, %v2339
      %v2341 = vpop.f32.mrf.mxu0
      %v2342 = vadd.f32 %v2313, %v2341
      %2343 = vmatmul.bf16.gmra.mxu0 %v1899
      %v2344 = vpop.f32.mrf.mxu0
      %v2345 = vadd.f32 %v2316, %v2344
      %v2346 = vpop.f32.mrf.mxu0
      %v2347 = vadd.f32 %v2318, %v2346
      %2348 = vmatmul.bf16.gmra.mxu0 %v1904
      %v2349 = vpop.f32.mrf.mxu0
      %v2350 = vadd.f32 %v2321, %v2349
      %v2351 = vpop.f32.mrf.mxu0
      %v2352 = vadd.f32 %v2323, %v2351
      %2353 = vdwg.mxu0
      %2354 = vmatpush.bf16.msra.mxu0 %v2186
      %2355 = vmatpush.bf16.msra.mxu0 %v2184
      %2356 = vmatpush.bf16.msra.mxu0 %v2182
      %2357 = vmatpush.bf16.msra.mxu0 %v2180
      %2358 = vmatpush.bf16.msra.mxu0 %v2178
      %2359 = vmatpush.bf16.msra.mxu0 %v2176
      %2360 = vmatpush.bf16.msra.mxu0 %v2174
      %2361 = vmatpush.bf16.msra.mxu0 %v2172
      %2362 = vmatmul.bf16.gmra.mxu0 %v1890
      %v2363 = vpop.f32.mrf.mxu0
      %v2364 = vadd.f32 %v2335, %v2363
      %v2365 = vpop.f32.mrf.mxu0
      %v2366 = vadd.f32 %v2337, %v2365
      %2367 = vmatmul.bf16.gmra.mxu0 %v1895
      %v2368 = vpop.f32.mrf.mxu0
      %v2369 = vadd.f32 %v2340, %v2368
      %v2370 = vpop.f32.mrf.mxu0
      %v2371 = vadd.f32 %v2342, %v2370
      %2372 = vmatmul.bf16.gmra.mxu0 %v1900
      %v2373 = vpop.f32.mrf.mxu0
      %v2374 = vadd.f32 %v2345, %v2373
      %v2375 = vpop.f32.mrf.mxu0
      %v2376 = vadd.f32 %v2347, %v2375
      %2377 = vmatmul.bf16.gmra.mxu0 %v1905
      %v2378 = vpop.f32.mrf.mxu0
      %v2379 = vadd.f32 %v2350, %v2378
      %v2380 = vpop.f32.mrf.mxu0
      %v2381 = vadd.f32 %v2352, %v2380
      %2382 = vdwg.mxu0
      %2383 = vmatpush.bf16.msra.mxu0 %v2202
      %2384 = vmatpush.bf16.msra.mxu0 %v2200
      %2385 = vmatpush.bf16.msra.mxu0 %v2198
      %2386 = vmatpush.bf16.msra.mxu0 %v2196
      %2387 = vmatpush.bf16.msra.mxu0 %v2194
      %2388 = vmatpush.bf16.msra.mxu0 %v2192
      %2389 = vmatpush.bf16.msra.mxu0 %v2190
      %2390 = vmatpush.bf16.msra.mxu0 %v2188
      %2391 = vmatmul.bf16.gmra.mxu0 %v1891
      %v2392 = vpop.f32.mrf.mxu0
      %v2393 = vadd.f32 %v2364, %v2392
      %v2394 = vpop.f32.mrf.mxu0
      %v2395 = vadd.f32 %v2366, %v2394
      %2396 = vmatmul.bf16.gmra.mxu0 %v1896
      %v2397 = vpop.f32.mrf.mxu0
      %v2398 = vadd.f32 %v2369, %v2397
      %v2399 = vpop.f32.mrf.mxu0
      %v2400 = vadd.f32 %v2371, %v2399
      %2401 = vmatmul.bf16.gmra.mxu0 %v1901
      %v2402 = vpop.f32.mrf.mxu0
      %v2403 = vadd.f32 %v2374, %v2402
      %v2404 = vpop.f32.mrf.mxu0
      %v2405 = vadd.f32 %v2376, %v2404
      %2406 = vmatmul.bf16.gmra.mxu0 %v1906
      %v2407 = vpop.f32.mrf.mxu0
      %v2408 = vadd.f32 %v2379, %v2407
      %v2409 = vpop.f32.mrf.mxu0
      %v2410 = vadd.f32 %v2381, %v2409
      %2411 = vdwg.mxu0
      %2412 = vmatpush.bf16.msra.mxu0 0
      %2413 = vmatpush.bf16.msra.mxu0 0
      %2414 = vmatpush.bf16.msra.mxu0 0
      %2415 = vmatpush.bf16.msra.mxu0 0
      %2416 = vmatpush.bf16.msra.mxu0 %v2210
      %2417 = vmatpush.bf16.msra.mxu0 %v2208
      %2418 = vmatpush.bf16.msra.mxu0 %v2206
      %2419 = vmatpush.bf16.msra.mxu0 %v2204
      %2420 = vmatmul.bf16.gmra.mxu0 %v2285
      %v2421 = vpop.f32.mrf.mxu0
      %v2422 = vadd.f32 %v2393, %v2421
      %v2423 = vpop.f32.mrf.mxu0
      %v2424 = vadd.f32 %v2395, %v2423
      %2425 = vmatmul.bf16.gmra.mxu0 %v2288
      %v2426 = vpop.f32.mrf.mxu0
      %v2427 = vadd.f32 %v2398, %v2426
      %v2428 = vpop.f32.mrf.mxu0
      %v2429 = vadd.f32 %v2400, %v2428
      %2430 = vmatmul.bf16.gmra.mxu0 %v2291
      %v2431 = vpop.f32.mrf.mxu0
      %v2432 = vadd.f32 %v2403, %v2431
      %v2433 = vpop.f32.mrf.mxu0
      %v2434 = vadd.f32 %v2405, %v2433
      %2435 = vmatmul.bf16.gmra.mxu0 %v2294
      %v2436 = vpop.f32.mrf.mxu0
      %v2437 = vadd.f32 %v2408, %v2436
      %v2438 = vpop.f32.mrf.mxu0
      %v2439 = vadd.f32 %v2410, %v2438
      %2440 = vdwg.mxu0
      %2441 = vmatpush.bf16.msra.mxu0 %v2155
      %2442 = vmatpush.bf16.msra.mxu0 %v2153
      %2443 = vmatpush.bf16.msra.mxu0 %v2151
      %2444 = vmatpush.bf16.msra.mxu0 %v2149
      %2445 = vmatpush.bf16.msra.mxu0 %v2147
      %2446 = vmatpush.bf16.msra.mxu0 %v2145
      %2447 = vmatpush.bf16.msra.mxu0 %v2143
      %2448 = vmatpush.bf16.msra.mxu0 %v2141
      %2449 = vmatmul.bf16.gmra.mxu0 %v1888
      %v2450 = vpop.f32.mrf.mxu0
      %v2451 = vadd.f32 0.0, %v2450
      %v2452 = vpop.f32.mrf.mxu0
      %v2453 = vadd.f32 0.0, %v2452
      %2454 = vmatmul.bf16.gmra.mxu0 %v1893
      %v2455 = vpop.f32.mrf.mxu0
      %v2456 = vadd.f32 0.0, %v2455
      %v2457 = vpop.f32.mrf.mxu0
      %v2458 = vadd.f32 0.0, %v2457
      %2459 = vmatmul.bf16.gmra.mxu0 %v1898
      %v2460 = vpop.f32.mrf.mxu0
      %v2461 = vadd.f32 0.0, %v2460
      %v2462 = vpop.f32.mrf.mxu0
      %v2463 = vadd.f32 0.0, %v2462
      %2464 = vmatmul.bf16.gmra.mxu0 %v1903
      %v2465 = vpop.f32.mrf.mxu0
      %v2466 = vadd.f32 0.0, %v2465
      %v2467 = vpop.f32.mrf.mxu0
      %v2468 = vadd.f32 0.0, %v2467
      %2469 = vdwg.mxu0
      %2470 = vmatpush.bf16.msra.mxu0 %v2171
      %2471 = vmatpush.bf16.msra.mxu0 %v2169
      %2472 = vmatpush.bf16.msra.mxu0 %v2167
      %2473 = vmatpush.bf16.msra.mxu0 %v2165
      %2474 = vmatpush.bf16.msra.mxu0 %v2163
      %2475 = vmatpush.bf16.msra.mxu0 %v2161
      %2476 = vmatpush.bf16.msra.mxu0 %v2159
      %2477 = vmatpush.bf16.msra.mxu0 %v2157
      %2478 = vmatmul.bf16.gmra.mxu0 %v1889
      %v2479 = vpop.f32.mrf.mxu0
      %v2480 = vadd.f32 %v2451, %v2479
      %v2481 = vpop.f32.mrf.mxu0
      %v2482 = vadd.f32 %v2453, %v2481
      %2483 = vmatmul.bf16.gmra.mxu0 %v1894
      %v2484 = vpop.f32.mrf.mxu0
      %v2485 = vadd.f32 %v2456, %v2484
      %v2486 = vpop.f32.mrf.mxu0
      %v2487 = vadd.f32 %v2458, %v2486
      %2488 = vmatmul.bf16.gmra.mxu0 %v1899
      %v2489 = vpop.f32.mrf.mxu0
      %v2490 = vadd.f32 %v2461, %v2489
      %v2491 = vpop.f32.mrf.mxu0
      %v2492 = vadd.f32 %v2463, %v2491
      %2493 = vmatmul.bf16.gmra.mxu0 %v1904
      %v2494 = vpop.f32.mrf.mxu0
      %v2495 = vadd.f32 %v2466, %v2494
      %v2496 = vpop.f32.mrf.mxu0
      %v2497 = vadd.f32 %v2468, %v2496
      %2498 = vdwg.mxu0
      %2499 = vmatpush.bf16.msra.mxu0 %v2187
      %2500 = vmatpush.bf16.msra.mxu0 %v2185
      %2501 = vmatpush.bf16.msra.mxu0 %v2183
      %2502 = vmatpush.bf16.msra.mxu0 %v2181
      %2503 = vmatpush.bf16.msra.mxu0 %v2179
      %2504 = vmatpush.bf16.msra.mxu0 %v2177
      %2505 = vmatpush.bf16.msra.mxu0 %v2175
      %2506 = vmatpush.bf16.msra.mxu0 %v2173
      %2507 = vmatmul.bf16.gmra.mxu0 %v1890
      %v2508 = vpop.f32.mrf.mxu0
      %v2509 = vadd.f32 %v2480, %v2508
      %v2510 = vpop.f32.mrf.mxu0
      %v2511 = vadd.f32 %v2482, %v2510
      %2512 = vmatmul.bf16.gmra.mxu0 %v1895
      %v2513 = vpop.f32.mrf.mxu0
      %v2514 = vadd.f32 %v2485, %v2513
      %v2515 = vpop.f32.mrf.mxu0
      %v2516 = vadd.f32 %v2487, %v2515
      %2517 = vmatmul.bf16.gmra.mxu0 %v1900
      %v2518 = vpop.f32.mrf.mxu0
      %v2519 = vadd.f32 %v2490, %v2518
      %v2520 = vpop.f32.mrf.mxu0
      %v2521 = vadd.f32 %v2492, %v2520
      %2522 = vmatmul.bf16.gmra.mxu0 %v1905
      %v2523 = vpop.f32.mrf.mxu0
      %v2524 = vadd.f32 %v2495, %v2523
      %v2525 = vpop.f32.mrf.mxu0
      %v2526 = vadd.f32 %v2497, %v2525
      %2527 = vdwg.mxu0
      %2528 = vmatpush.bf16.msra.mxu0 %v2203
      %2529 = vmatpush.bf16.msra.mxu0 %v2201
      %2530 = vmatpush.bf16.msra.mxu0 %v2199
      %2531 = vmatpush.bf16.msra.mxu0 %v2197
      %2532 = vmatpush.bf16.msra.mxu0 %v2195
      %2533 = vmatpush.bf16.msra.mxu0 %v2193
      %2534 = vmatpush.bf16.msra.mxu0 %v2191
      %2535 = vmatpush.bf16.msra.mxu0 %v2189
      %2536 = vmatmul.bf16.gmra.mxu0 %v1891
      %v2537 = vpop.f32.mrf.mxu0
      %v2538 = vadd.f32 %v2509, %v2537
      %v2539 = vpop.f32.mrf.mxu0
      %v2540 = vadd.f32 %v2511, %v2539
      %2541 = vmatmul.bf16.gmra.mxu0 %v1896
      %v2542 = vpop.f32.mrf.mxu0
      %v2543 = vadd.f32 %v2514, %v2542
      %v2544 = vpop.f32.mrf.mxu0
      %v2545 = vadd.f32 %v2516, %v2544
      %2546 = vmatmul.bf16.gmra.mxu0 %v1901
      %v2547 = vpop.f32.mrf.mxu0
      %v2548 = vadd.f32 %v2519, %v2547
      %v2549 = vpop.f32.mrf.mxu0
      %v2550 = vadd.f32 %v2521, %v2549
      %2551 = vmatmul.bf16.gmra.mxu0 %v1906
      %v2552 = vpop.f32.mrf.mxu0
      %v2553 = vadd.f32 %v2524, %v2552
      %v2554 = vpop.f32.mrf.mxu0
      %v2555 = vadd.f32 %v2526, %v2554
      %2556 = vdwg.mxu0
      %2557 = vmatpush.bf16.msra.mxu0 0
      %2558 = vmatpush.bf16.msra.mxu0 0
      %2559 = vmatpush.bf16.msra.mxu0 0
      %2560 = vmatpush.bf16.msra.mxu0 0
      %2561 = vmatpush.bf16.msra.mxu0 %v2211
      %2562 = vmatpush.bf16.msra.mxu0 %v2209
      %2563 = vmatpush.bf16.msra.mxu0 %v2207
      %2564 = vmatpush.bf16.msra.mxu0 %v2205
      %2565 = vmatmul.bf16.gmra.mxu0 %v2285
      %v2566 = vpop.f32.mrf.mxu0
      %v2567 = vadd.f32 %v2538, %v2566
      %v2568 = vpop.f32.mrf.mxu0
      %v2569 = vadd.f32 %v2540, %v2568
      %2570 = vmatmul.bf16.gmra.mxu0 %v2288
      %v2571 = vpop.f32.mrf.mxu0
      %v2572 = vadd.f32 %v2543, %v2571
      %v2573 = vpop.f32.mrf.mxu0
      %v2574 = vadd.f32 %v2545, %v2573
      %2575 = vmatmul.bf16.gmra.mxu0 %v2291
      %v2576 = vpop.f32.mrf.mxu0
      %v2577 = vadd.f32 %v2548, %v2576
      %v2578 = vpop.f32.mrf.mxu0
      %v2579 = vadd.f32 %v2550, %v2578
      %2580 = vmatmul.bf16.gmra.mxu0 %v2294
      %v2581 = vpop.f32.mrf.mxu0
      %v2582 = vadd.f32 %v2553, %v2581
      %v2583 = vpop.f32.mrf.mxu0
      %v2584 = vadd.f32 %v2555, %v2583
      %2585 = vdwg.mxu0
      %v2586 = vmax.f32 %v2422, %v2427
      %v2587 = vmax.f32 %v2567, %v2572
      %v2588 = vmax.f32 %v2424, %v2429
      %v2589 = vmax.f32 %v2569, %v2574
      %v2590 = vmax.f32 %v2432, %v2437
      %v2591 = vmax.f32 %v2577, %v2582
      %v2592 = vmax.f32 %v2434, %v2439
      %v2593 = vmax.f32 %v2579, %v2584
      %v2594 = vmax.f32 %v2586, %v2590
      %v2595 = vmax.f32 %v2587, %v2591
      %v2596 = vmax.f32 %v2588, %v2592
      %v2597 = vmax.f32 %v2589, %v2593
      %2599 = vset.pattern.permute.xlu0 0
      %2600 = vperm.xlu0 %2599, %v228
      %v2601 = vpop.permute.xlu0 %2600
      %2604 = vset.pattern.permute.xlu0 0
      %2605 = vperm.xlu0 %2604, %v229
      %v2606 = vpop.permute.xlu0 %2605
      %v2608 = vadd.f32 %v2594, %v2601
      %v2609 = vadd.f32 %v2595, %v2601
      %v2610 = vadd.f32 %v2596, %v2606
      %v2611 = vadd.f32 %v2597, %v2606
      %v2612 = vmax.f32 %v2608, 0.0
      %v2613 = vmax.f32 %v2609, 0.0
      %v2614 = vmax.f32 %v2610, 0.0
      %v2615 = vmax.f32 %v2611, 0.0
      %v2616 = vpack.c.bf16 %v2613, %v2612
      %v2617 = vpack.c.bf16 %v2615, %v2614
      %2618 = vst [vmem:[%s224] sm:$0xff] %v2616
      %2619 = vst [vmem:[%s224 + $0x8] sm:$0xff] %v2617
      %p2620 = scmp.lt.s32.totalorder %s16, 1
      %s2621 = scalar_select %p2620, %s16, 1
      %s2622 = smul.addr %s2621, 4
      %s2623 = smul.addr %s2622, 4
      %s2624 = scalar_lea.vmem %s5, %s2623
      // Predicated region
      $region41: #{net_forward.2} parent=39 // pred_check
        %p2625 = pneg %p144
      $region42: #{net_forward.2} parent=39 // pred_check_branch
        %2627 = sbr.rel (%p2625) target = $region44
      $region43: #{net_forward.2} parent=39 // pred_region
        _
      $region44: #{net_forward.2} parent=39 // pred_fallthru
        _
    $region40: #{net_forward.2} parent=5 // pred_fallthru
      _
    %p2628 = scmp.le.s32.totalorder 2, %s11
    // Predicated region
    $region45: #{net_forward.2} parent=5 // pred_check
      %p2629 = pneg %p2628
    $region46: #{net_forward.2} parent=5 // pred_check_branch
      %2631 = sbr.rel (%p2629) target = $region48
    $region47: #{net_forward.2} parent=5 // pred_region
      %s2632 = ssub.s32 %s11, 2
      // Predicated region
      $region49: #{net_forward.2} parent=47 // pred_check
        %p2633 = pneg %p150
      $region50: #{net_forward.2} parent=47 // pred_check_branch
        %2635 = sbr.rel (%p2633) target = $region52
      $region51: #{net_forward.2} parent=47 // pred_region
        %p2636 = scmp.lt.s32.totalorder %s17, 1
        %s2637 = scalar_select %p2636, %s17, 1
        %s2638 = smul.addr %s2637, 4
        %s2639 = smul.addr %s2638, 4
        %s2640 = scalar_lea.vmem %s5, %s2639
      $region52: #{net_forward.2} parent=47 // pred_fallthru
        _
    $region48: #{net_forward.2} parent=5 // pred_fallthru
      _
  $region6: #{net_forward.2} parent=0 // loop_footer
    %s15 = sadd.s32 1, %s11
  $region7: #{net_forward.2} parent=0 // loop_footer_branch
    %10 = sbr.rel target = $region3
  $region8: #{net_forward.2} parent=0 // loop_exit
    _

// kernel: net_forward.3
$region0: #{net_forward.3}
  #allocation0 [shape = 'u32[]', space=smem, size = 0x4, offset = 0x4, fixed_abs, tag = 'smem constant byte address 0x4 - core index']
  #allocation1 [shape = 'u32[72,128]{1,0:T(1,128)}', space=vmem, size = 0x9000, scoped, tag = 'internal scratch']
  %s0 = inlined_call_operand.vmem [shape: bf16[2,4096], index: 0, kind: input, shape index: {}]
  %s1 = inlined_call_operand.vmem [shape: bf16[4096,128], index: 1, kind: input, shape index: {}]
  %s2 = inlined_call_operand.vmem [shape: f32[1,128], index: 2, kind: input, shape index: {}]
  %s3 = inlined_call_operand.vmem [shape: bf16[128,128], index: 3, kind: input, shape index: {}]
  %s4 = inlined_call_operand.vmem [shape: f32[1,128], index: 4, kind: input, shape index: {}]
  %s5 = inlined_call_operand.hbm [shape: f32[2,128], index: 5, kind: output, shape index: {}]
  %s6 = sld [smem:[#allocation0]]
  $region30: #{net_forward.3} parent=0
    _
  %s8 = ssub.s32 1, %s6
  %s9 = scalar_select 0, %s8, %s6
  $region1: #{net_forward.3} parent=0
    #allocation2 [shape = 'u8[1024]{0}', space=vmem, size = 0x400, scoped, tag = 'output window, operand 0, single buffered']
    #allocation3 [shape = 's32[1]{0}', space=sflag, size = 0x4, scoped, tag = 'scoped memory for net_forward.3']
    %10 = vsyncpa [#allocation3], 0
    // Predicated region
    $region2: #{net_forward.3} parent=1 // pred_check
      _
    $region3: #{net_forward.3} parent=1 // pred_check_branch
      %12 = sbr.rel (0) target = $region5
    $region4: #{net_forward.3} parent=1 // pred_region
      _
    $region5: #{net_forward.3} parent=1 // pred_fallthru
      _
    // Predicated region
    $region6: #{net_forward.3} parent=1 // pred_check
      _
    $region7: #{net_forward.3} parent=1 // pred_check_branch
      %14 = sbr.rel (0) target = $region9
    $region8: #{net_forward.3} parent=1 // pred_region
      _
    $region9: #{net_forward.3} parent=1 // pred_fallthru
      _
    // Predicated region
    $region10: #{net_forward.3} parent=1 // pred_check
      _
    $region11: #{net_forward.3} parent=1 // pred_check_branch
      %16 = sbr.rel (0) target = $region13
    $region12: #{net_forward.3} parent=1 // pred_region
      _
    $region13: #{net_forward.3} parent=1 // pred_fallthru
      _
    // Predicated region
    $region14: #{net_forward.3} parent=1 // pred_check
      _
    $region15: #{net_forward.3} parent=1 // pred_check_branch
      %18 = sbr.rel (0) target = $region17
    $region16: #{net_forward.3} parent=1 // pred_region
      _
    $region17: #{net_forward.3} parent=1 // pred_fallthru
      _
    // Predicated region
    $region18: #{net_forward.3} parent=1 // pred_check
      _
    $region19: #{net_forward.3} parent=1 // pred_check_branch
      %20 = sbr.rel (0) target = $region21
    $region20: #{net_forward.3} parent=1 // pred_region
      _
    $region21: #{net_forward.3} parent=1 // pred_fallthru
      _
    %v21 = vld [vmem:[%s0] sm:$0xff]
    %v22 = vld [vmem:[%s0 + $0x8] sm:$0xff]
    %v23 = vld [vmem:[%s0 + $0x10] sm:$0xff]
    %v24 = vld [vmem:[%s0 + $0x18] sm:$0xff]
    %v25 = vld [vmem:[%s1] sm:$0xf]
    %v26 = vld [vmem:[%s1 + $0x4] sm:$0xf]
    %v27 = vld [vmem:[%s1 + $0x8] sm:$0xf]
    %v28 = vld [vmem:[%s1 + $0xc] sm:$0xf]
    %v29 = vld [vmem:[%s1 + $0x10] sm:$0xf]
    %v30 = vld [vmem:[%s1 + $0x14] sm:$0xf]
    %v31 = vld [vmem:[%s1 + $0x18] sm:$0xf]
    %v32 = vld [vmem:[%s1 + $0x1c] sm:$0xf]
    %v33 = vld [vmem:[%s1 + $0x20] sm:$0xf]
    %v34 = vld [vmem:[%s1 + $0x24] sm:$0xf]
    %v35 = vld [vmem:[%s1 + $0x28] sm:$0xf]
    %v36 = vld [vmem:[%s1 + $0x2c] sm:$0xf]
    %v37 = vld [vmem:[%s1 + $0x30] sm:$0xf]
    %v38 = vld [vmem:[%s1 + $0x34] sm:$0xf]
    %v39 = vld [vmem:[%s1 + $0x38] sm:$0xf]
    %v40 = vld [vmem:[%s1 + $0x3c] sm:$0xf]
    %v41 = vld [vmem:[%s1 + $0x40] sm:$0xf]
    %v42 = vld [vmem:[%s1 + $0x44] sm:$0xf]
    %v43 = vld [vmem:[%s1 + $0x48] sm:$0xf]
    %v44 = vld [vmem:[%s1 + $0x4c] sm:$0xf]
    %v45 = vld [vmem:[%s1 + $0x50] sm:$0xf]
    %v46 = vld [vmem:[%s1 + $0x54] sm:$0xf]
    %v47 = vld [vmem:[%s1 + $0x58] sm:$0xf]
    %v48 = vld [vmem:[%s1 + $0x5c] sm:$0xf]
    %v49 = vld [vmem:[%s1 + $0x60] sm:$0xf]
    %v50 = vld [vmem:[%s1 + $0x64] sm:$0xf]
    %v51 = vld [vmem:[%s1 + $0x68] sm:$0xf]
    %v52 = vld [vmem:[%s1 + $0x6c] sm:$0xf]
    %v53 = vld [vmem:[%s1 + $0x70] sm:$0xf]
    %v54 = vld [vmem:[%s1 + $0x74] sm:$0xf]
    %v55 = vld [vmem:[%s1 + $0x78] sm:$0xf]
    %v56 = vld [vmem:[%s1 + $0x7c] sm:$0xf]
    %v57 = vld [vmem:[%s1 + $0x80] sm:$0xf]
    %v58 = vld [vmem:[%s1 + $0x84] sm:$0xf]
    %v59 = vld [vmem:[%s1 + $0x88] sm:$0xf]
    %v60 = vld [vmem:[%s1 + $0x8c] sm:$0xf]
    %v61 = vld [vmem:[%s1 + $0x90] sm:$0xf]
    %v62 = vld [vmem:[%s1 + $0x94] sm:$0xf]
    %v63 = vld [vmem:[%s1 + $0x98] sm:$0xf]
    %v64 = vld [vmem:[%s1 + $0x9c] sm:$0xf]
    %v65 = vld [vmem:[%s1 + $0xa0] sm:$0xf]
    %v66 = vld [vmem:[%s1 + $0xa4] sm:$0xf]
    %v67 = vld [vmem:[%s1 + $0xa8] sm:$0xf]
    %v68 = vld [vmem:[%s1 + $0xac] sm:$0xf]
    %v69 = vld [vmem:[%s1 + $0xb0] sm:$0xf]
    %v70 = vld [vmem:[%s1 + $0xb4] sm:$0xf]
    %v71 = vld [vmem:[%s1 + $0xb8] sm:$0xf]
    %v72 = vld [vmem:[%s1 + $0xbc] sm:$0xf]
    %v73 = vld [vmem:[%s1 + $0xc0] sm:$0xf]
    %v74 = vld [vmem:[%s1 + $0xc4] sm:$0xf]
    %v75 = vld [vmem:[%s1 + $0xc8] sm:$0xf]
    %v76 = vld [vmem:[%s1 + $0xcc] sm:$0xf]
    %v77 = vld [vmem:[%s1 + $0xd0] sm:$0xf]
    %v78 = vld [vmem:[%s1 + $0xd4] sm:$0xf]
    %v79 = vld [vmem:[%s1 + $0xd8] sm:$0xf]
    %v80 = vld [vmem:[%s1 + $0xdc] sm:$0xf]
    %v81 = vld [vmem:[%s1 + $0xe0] sm:$0xf]
    %v82 = vld [vmem:[%s1 + $0xe4] sm:$0xf]
    %v83 = vld [vmem:[%s1 + $0xe8] sm:$0xf]
    %v84 = vld [vmem:[%s1 + $0xec] sm:$0xf]
    %v85 = vld [vmem:[%s1 + $0xf0] sm:$0xf]
    %v86 = vld [vmem:[%s1 + $0xf4] sm:$0xf]
    %v87 = vld [vmem:[%s1 + $0xf8] sm:$0xf]
    %v88 = vld [vmem:[%s1 + $0xfc] sm:$0xf]
    %v89 = vld [vmem:[%s1 + $0x100] sm:$0xf]
    %v90 = vld [vmem:[%s1 + $0x104] sm:$0xf]
    %v91 = vld [vmem:[%s1 + $0x108] sm:$0xf]
    %v92 = vld [vmem:[%s1 + $0x10c] sm:$0xf]
    %v93 = vld [vmem:[%s1 + $0x110] sm:$0xf]
    %v94 = vld [vmem:[%s1 + $0x114] sm:$0xf]
    %v95 = vld [vmem:[%s1 + $0x118] sm:$0xf]
    %v96 = vld [vmem:[%s1 + $0x11c] sm:$0xf]
    %v97 = vld [vmem:[%s1 + $0x120] sm:$0xf]
    %v98 = vld [vmem:[%s1 + $0x124] sm:$0xf]
    %v99 = vld [vmem:[%s1 + $0x128] sm:$0xf]
    %v100 = vld [vmem:[%s1 + $0x12c] sm:$0xf]
    %v101 = vld [vmem:[%s1 + $0x130] sm:$0xf]
    %v102 = vld [vmem:[%s1 + $0x134] sm:$0xf]
    %v103 = vld [vmem:[%s1 + $0x138] sm:$0xf]
    %v104 = vld [vmem:[%s1 + $0x13c] sm:$0xf]
    %v105 = vld [vmem:[%s1 + $0x140] sm:$0xf]
    %v106 = vld [vmem:[%s1 + $0x144] sm:$0xf]
    %v107 = vld [vmem:[%s1 + $0x148] sm:$0xf]
    %v108 = vld [vmem:[%s1 + $0x14c] sm:$0xf]
    %v109 = vld [vmem:[%s1 + $0x150] sm:$0xf]
    %v110 = vld [vmem:[%s1 + $0x154] sm:$0xf]
    %v111 = vld [vmem:[%s1 + $0x158] sm:$0xf]
    %v112 = vld [vmem:[%s1 + $0x15c] sm:$0xf]
    %v113 = vld [vmem:[%s1 + $0x160] sm:$0xf]
    %v114 = vld [vmem:[%s1 + $0x164] sm:$0xf]
    %v115 = vld [vmem:[%s1 + $0x168] sm:$0xf]
    %v116 = vld [vmem:[%s1 + $0x16c] sm:$0xf]
    %v117 = vld [vmem:[%s1 + $0x170] sm:$0xf]
    %v118 = vld [vmem:[%s1 + $0x174] sm:$0xf]
    %v119 = vld [vmem:[%s1 + $0x178] sm:$0xf]
    %v120 = vld [vmem:[%s1 + $0x17c] sm:$0xf]
    %v121 = vld [vmem:[%s1 + $0x180] sm:$0xf]
    %v122 = vld [vmem:[%s1 + $0x184] sm:$0xf]
    %v123 = vld [vmem:[%s1 + $0x188] sm:$0xf]
    %v124 = vld [vmem:[%s1 + $0x18c] sm:$0xf]
    %v125 = vld [vmem:[%s1 + $0x190] sm:$0xf]
    %v126 = vld [vmem:[%s1 + $0x194] sm:$0xf]
    %v127 = vld [vmem:[%s1 + $0x198] sm:$0xf]
    %v128 = vld [vmem:[%s1 + $0x19c] sm:$0xf]
    %v129 = vld [vmem:[%s1 + $0x1a0] sm:$0xf]
    %v130 = vld [vmem:[%s1 + $0x1a4] sm:$0xf]
    %v131 = vld [vmem:[%s1 + $0x1a8] sm:$0xf]
    %v132 = vld [vmem:[%s1 + $0x1ac] sm:$0xf]
    %v133 = vld [vmem:[%s1 + $0x1b0] sm:$0xf]
    %v134 = vld [vmem:[%s1 + $0x1b4] sm:$0xf]
    %v135 = vld [vmem:[%s1 + $0x1b8] sm:$0xf]
    %v136 = vld [vmem:[%s1 + $0x1bc] sm:$0xf]
    %v137 = vld [vmem:[%s1 + $0x1c0] sm:$0xf]
    %v138 = vld [vmem:[%s1 + $0x1c4] sm:$0xf]
    %v139 = vld [vmem:[%s1 + $0x1c8] sm:$0xf]
    %v140 = vld [vmem:[%s1 + $0x1cc] sm:$0xf]
    %v141 = vld [vmem:[%s1 + $0x1d0] sm:$0xf]
    %v142 = vld [vmem:[%s1 + $0x1d4] sm:$0xf]
    %v143 = vld [vmem:[%s1 + $0x1d8] sm:$0xf]
    %v144 = vld [vmem:[%s1 + $0x1dc] sm:$0xf]
    %v145 = vld [vmem:[%s1 + $0x1e0] sm:$0xf]
    %v146 = vld [vmem:[%s1 + $0x1e4] sm:$0xf]
    %v147 = vld [vmem:[%s1 + $0x1e8] sm:$0xf]
    %v148 = vld [vmem:[%s1 + $0x1ec] sm:$0xf]
    %v149 = vld [vmem:[%s1 + $0x1f0] sm:$0xf]
    %v150 = vld [vmem:[%s1 + $0x1f4] sm:$0xf]
    %v151 = vld [vmem:[%s1 + $0x1f8] sm:$0xf]
    %v152 = vld [vmem:[%s1 + $0x1fc] sm:$0xf]
    %v153 = vld [vmem:[%s1 + $0x200] sm:$0xf]
    %v154 = vld [vmem:[%s1 + $0x204] sm:$0xf]
    %v155 = vld [vmem:[%s1 + $0x208] sm:$0xf]
    %v156 = vld [vmem:[%s1 + $0x20c] sm:$0xf]
    %v157 = vld [vmem:[%s1 + $0x210] sm:$0xf]
    %v158 = vld [vmem:[%s1 + $0x214] sm:$0xf]
    %v159 = vld [vmem:[%s1 + $0x218] sm:$0xf]
    %v160 = vld [vmem:[%s1 + $0x21c] sm:$0xf]
    %v161 = vld [vmem:[%s1 + $0x220] sm:$0xf]
    %v162 = vld [vmem:[%s1 + $0x224] sm:$0xf]
    %v163 = vld [vmem:[%s1 + $0x228] sm:$0xf]
    %v164 = vld [vmem:[%s1 + $0x22c] sm:$0xf]
    %v165 = vld [vmem:[%s1 + $0x230] sm:$0xf]
    %v166 = vld [vmem:[%s1 + $0x234] sm:$0xf]
    %v167 = vld [vmem:[%s1 + $0x238] sm:$0xf]
    %v168 = vld [vmem:[%s1 + $0x23c] sm:$0xf]
    %v169 = vld [vmem:[%s1 + $0x240] sm:$0xf]
    %v170 = vld [vmem:[%s1 + $0x244] sm:$0xf]
    %v171 = vld [vmem:[%s1 + $0x248] sm:$0xf]
    %v172 = vld [vmem:[%s1 + $0x24c] sm:$0xf]
    %v173 = vld [vmem:[%s1 + $0x250] sm:$0xf]
    %v174 = vld [vmem:[%s1 + $0x254] sm:$0xf]
    %v175 = vld [vmem:[%s1 + $0x258] sm:$0xf]
    %v176 = vld [vmem:[%s1 + $0x25c] sm:$0xf]
    %v177 = vld [vmem:[%s1 + $0x260] sm:$0xf]
    %v178 = vld [vmem:[%s1 + $0x264] sm:$0xf]
    %v179 = vld [vmem:[%s1 + $0x268] sm:$0xf]
    %v180 = vld [vmem:[%s1 + $0x26c] sm:$0xf]
    %v181 = vld [vmem:[%s1 + $0x270] sm:$0xf]
    %v182 = vld [vmem:[%s1 + $0x274] sm:$0xf]
    %v183 = vld [vmem:[%s1 + $0x278] sm:$0xf]
    %v184 = vld [vmem:[%s1 + $0x27c] sm:$0xf]
    %v185 = vld [vmem:[%s1 + $0x280] sm:$0xf]
    %v186 = vld [vmem:[%s1 + $0x284] sm:$0xf]
    %v187 = vld [vmem:[%s1 + $0x288] sm:$0xf]
    %v188 = vld [vmem:[%s1 + $0x28c] sm:$0xf]
    %v189 = vld [vmem:[%s1 + $0x290] sm:$0xf]
    %v190 = vld [vmem:[%s1 + $0x294] sm:$0xf]
    %v191 = vld [vmem:[%s1 + $0x298] sm:$0xf]
    %v192 = vld [vmem:[%s1 + $0x29c] sm:$0xf]
    %v193 = vld [vmem:[%s1 + $0x2a0] sm:$0xf]
    %v194 = vld [vmem:[%s1 + $0x2a4] sm:$0xf]
    %v195 = vld [vmem:[%s1 + $0x2a8] sm:$0xf]
    %v196 = vld [vmem:[%s1 + $0x2ac] sm:$0xf]
    %v197 = vld [vmem:[%s1 + $0x2b0] sm:$0xf]
    %v198 = vld [vmem:[%s1 + $0x2b4] sm:$0xf]
    %v199 = vld [vmem:[%s1 + $0x2b8] sm:$0xf]
    %v200 = vld [vmem:[%s1 + $0x2bc] sm:$0xf]
    %v201 = vld [vmem:[%s1 + $0x2c0] sm:$0xf]
    %v202 = vld [vmem:[%s1 + $0x2c4] sm:$0xf]
    %v203 = vld [vmem:[%s1 + $0x2c8] sm:$0xf]
    %v204 = vld [vmem:[%s1 + $0x2cc] sm:$0xf]
    %v205 = vld [vmem:[%s1 + $0x2d0] sm:$0xf]
    %v206 = vld [vmem:[%s1 + $0x2d4] sm:$0xf]
    %v207 = vld [vmem:[%s1 + $0x2d8] sm:$0xf]
    %v208 = vld [vmem:[%s1 + $0x2dc] sm:$0xf]
    %v209 = vld [vmem:[%s1 + $0x2e0] sm:$0xf]
    %v210 = vld [vmem:[%s1 + $0x2e4] sm:$0xf]
    %v211 = vld [vmem:[%s1 + $0x2e8] sm:$0xf]
    %v212 = vld [vmem:[%s1 + $0x2ec] sm:$0xf]
    %v213 = vld [vmem:[%s1 + $0x2f0] sm:$0xf]
    %v214 = vld [vmem:[%s1 + $0x2f4] sm:$0xf]
    %v215 = vld [vmem:[%s1 + $0x2f8] sm:$0xf]
    %v216 = vld [vmem:[%s1 + $0x2fc] sm:$0xf]
    %v217 = vld [vmem:[%s1 + $0x300] sm:$0xf]
    %v218 = vld [vmem:[%s1 + $0x304] sm:$0xf]
    %v219 = vld [vmem:[%s1 + $0x308] sm:$0xf]
    %v220 = vld [vmem:[%s1 + $0x30c] sm:$0xf]
    %v221 = vld [vmem:[%s1 + $0x310] sm:$0xf]
    %v222 = vld [vmem:[%s1 + $0x314] sm:$0xf]
    %v223 = vld [vmem:[%s1 + $0x318] sm:$0xf]
    %v224 = vld [vmem:[%s1 + $0x31c] sm:$0xf]
    %v225 = vld [vmem:[%s1 + $0x320] sm:$0xf]
    %v226 = vld [vmem:[%s1 + $0x324] sm:$0xf]
    %v227 = vld [vmem:[%s1 + $0x328] sm:$0xf]
    %v228 = vld [vmem:[%s1 + $0x32c] sm:$0xf]
    %v229 = vld [vmem:[%s1 + $0x330] sm:$0xf]
    %v230 = vld [vmem:[%s1 + $0x334] sm:$0xf]
    %v231 = vld [vmem:[%s1 + $0x338] sm:$0xf]
    %v232 = vld [vmem:[%s1 + $0x33c] sm:$0xf]
    %v233 = vld [vmem:[%s1 + $0x340] sm:$0xf]
    %v234 = vld [vmem:[%s1 + $0x344] sm:$0xf]
    %v235 = vld [vmem:[%s1 + $0x348] sm:$0xf]
    %v236 = vld [vmem:[%s1 + $0x34c] sm:$0xf]
    %v237 = vld [vmem:[%s1 + $0x350] sm:$0xf]
    %v238 = vld [vmem:[%s1 + $0x354] sm:$0xf]
    %v239 = vld [vmem:[%s1 + $0x358] sm:$0xf]
    %v240 = vld [vmem:[%s1 + $0x35c] sm:$0xf]
    %v241 = vld [vmem:[%s1 + $0x360] sm:$0xf]
    %v242 = vld [vmem:[%s1 + $0x364] sm:$0xf]
    %v243 = vld [vmem:[%s1 + $0x368] sm:$0xf]
    %v244 = vld [vmem:[%s1 + $0x36c] sm:$0xf]
    %v245 = vld [vmem:[%s1 + $0x370] sm:$0xf]
    %v246 = vld [vmem:[%s1 + $0x374] sm:$0xf]
    %v247 = vld [vmem:[%s1 + $0x378] sm:$0xf]
    %v248 = vld [vmem:[%s1 + $0x37c] sm:$0xf]
    %v249 = vld [vmem:[%s1 + $0x380] sm:$0xf]
    %v250 = vld [vmem:[%s1 + $0x384] sm:$0xf]
    %v251 = vld [vmem:[%s1 + $0x388] sm:$0xf]
    %v252 = vld [vmem:[%s1 + $0x38c] sm:$0xf]
    %v253 = vld [vmem:[%s1 + $0x390] sm:$0xf]
    %v254 = vld [vmem:[%s1 + $0x394] sm:$0xf]
    %v255 = vld [vmem:[%s1 + $0x398] sm:$0xf]
    %v256 = vld [vmem:[%s1 + $0x39c] sm:$0xf]
    %v257 = vld [vmem:[%s1 + $0x3a0] sm:$0xf]
    %v258 = vld [vmem:[%s1 + $0x3a4] sm:$0xf]
    %v259 = vld [vmem:[%s1 + $0x3a8] sm:$0xf]
    %v260 = vld [vmem:[%s1 + $0x3ac] sm:$0xf]
    %v261 = vld [vmem:[%s1 + $0x3b0] sm:$0xf]
    %v262 = vld [vmem:[%s1 + $0x3b4] sm:$0xf]
    %v263 = vld [vmem:[%s1 + $0x3b8] sm:$0xf]
    %v264 = vld [vmem:[%s1 + $0x3bc] sm:$0xf]
    %v265 = vld [vmem:[%s1 + $0x3c0] sm:$0xf]
    %v266 = vld [vmem:[%s1 + $0x3c4] sm:$0xf]
    %v267 = vld [vmem:[%s1 + $0x3c8] sm:$0xf]
    %v268 = vld [vmem:[%s1 + $0x3cc] sm:$0xf]
    %v269 = vld [vmem:[%s1 + $0x3d0] sm:$0xf]
    %v270 = vld [vmem:[%s1 + $0x3d4] sm:$0xf]
    %v271 = vld [vmem:[%s1 + $0x3d8] sm:$0xf]
    %v272 = vld [vmem:[%s1 + $0x3dc] sm:$0xf]
    %v273 = vld [vmem:[%s1 + $0x3e0] sm:$0xf]
    %v274 = vld [vmem:[%s1 + $0x3e4] sm:$0xf]
    %v275 = vld [vmem:[%s1 + $0x3e8] sm:$0xf]
    %v276 = vld [vmem:[%s1 + $0x3ec] sm:$0xf]
    %v277 = vld [vmem:[%s1 + $0x3f0] sm:$0xf]
    %v278 = vld [vmem:[%s1 + $0x3f4] sm:$0xf]
    %v279 = vld [vmem:[%s1 + $0x3f8] sm:$0xf]
    %v280 = vld [vmem:[%s1 + $0x3fc] sm:$0xf]
    %v281 = vld [vmem:[%s1 + $0x400] sm:$0xf]
    %v282 = vld [vmem:[%s1 + $0x404] sm:$0xf]
    %v283 = vld [vmem:[%s1 + $0x408] sm:$0xf]
    %v284 = vld [vmem:[%s1 + $0x40c] sm:$0xf]
    %v285 = vld [vmem:[%s1 + $0x410] sm:$0xf]
    %v286 = vld [vmem:[%s1 + $0x414] sm:$0xf]
    %v287 = vld [vmem:[%s1 + $0x418] sm:$0xf]
    %v288 = vld [vmem:[%s1 + $0x41c] sm:$0xf]
    %v289 = vld [vmem:[%s1 + $0x420] sm:$0xf]
    %v290 = vld [vmem:[%s1 + $0x424] sm:$0xf]
    %v291 = vld [vmem:[%s1 + $0x428] sm:$0xf]
    %v292 = vld [vmem:[%s1 + $0x42c] sm:$0xf]
    %v293 = vld [vmem:[%s1 + $0x430] sm:$0xf]
    %v294 = vld [vmem:[%s1 + $0x434] sm:$0xf]
    %v295 = vld [vmem:[%s1 + $0x438] sm:$0xf]
    %v296 = vld [vmem:[%s1 + $0x43c] sm:$0xf]
    %v297 = vld [vmem:[%s1 + $0x440] sm:$0xf]
    %v298 = vld [vmem:[%s1 + $0x444] sm:$0xf]
    %v299 = vld [vmem:[%s1 + $0x448] sm:$0xf]
    %v300 = vld [vmem:[%s1 + $0x44c] sm:$0xf]
    %v301 = vld [vmem:[%s1 + $0x450] sm:$0xf]
    %v302 = vld [vmem:[%s1 + $0x454] sm:$0xf]
    %v303 = vld [vmem:[%s1 + $0x458] sm:$0xf]
    %v304 = vld [vmem:[%s1 + $0x45c] sm:$0xf]
    %v305 = vld [vmem:[%s1 + $0x460] sm:$0xf]
    %v306 = vld [vmem:[%s1 + $0x464] sm:$0xf]
    %v307 = vld [vmem:[%s1 + $0x468] sm:$0xf]
    %v308 = vld [vmem:[%s1 + $0x46c] sm:$0xf]
    %v309 = vld [vmem:[%s1 + $0x470] sm:$0xf]
    %v310 = vld [vmem:[%s1 + $0x474] sm:$0xf]
    %v311 = vld [vmem:[%s1 + $0x478] sm:$0xf]
    %v312 = vld [vmem:[%s1 + $0x47c] sm:$0xf]
    %v313 = vld [vmem:[%s1 + $0x480] sm:$0xf]
    %v314 = vld [vmem:[%s1 + $0x484] sm:$0xf]
    %v315 = vld [vmem:[%s1 + $0x488] sm:$0xf]
    %v316 = vld [vmem:[%s1 + $0x48c] sm:$0xf]
    %v317 = vld [vmem:[%s1 + $0x490] sm:$0xf]
    %v318 = vld [vmem:[%s1 + $0x494] sm:$0xf]
    %v319 = vld [vmem:[%s1 + $0x498] sm:$0xf]
    %v320 = vld [vmem:[%s1 + $0x49c] sm:$0xf]
    %v321 = vld [vmem:[%s1 + $0x4a0] sm:$0xf]
    %v322 = vld [vmem:[%s1 + $0x4a4] sm:$0xf]
    %v323 = vld [vmem:[%s1 + $0x4a8] sm:$0xf]
    %v324 = vld [vmem:[%s1 + $0x4ac] sm:$0xf]
    %v325 = vld [vmem:[%s1 + $0x4b0] sm:$0xf]
    %v326 = vld [vmem:[%s1 + $0x4b4] sm:$0xf]
    %v327 = vld [vmem:[%s1 + $0x4b8] sm:$0xf]
    %v328 = vld [vmem:[%s1 + $0x4bc] sm:$0xf]
    %v329 = vld [vmem:[%s1 + $0x4c0] sm:$0xf]
    %v330 = vld [vmem:[%s1 + $0x4c4] sm:$0xf]
    %v331 = vld [vmem:[%s1 + $0x4c8] sm:$0xf]
    %v332 = vld [vmem:[%s1 + $0x4cc] sm:$0xf]
    %v333 = vld [vmem:[%s1 + $0x4d0] sm:$0xf]
    %v334 = vld [vmem:[%s1 + $0x4d4] sm:$0xf]
    %v335 = vld [vmem:[%s1 + $0x4d8] sm:$0xf]
    %v336 = vld [vmem:[%s1 + $0x4dc] sm:$0xf]
    %v337 = vld [vmem:[%s1 + $0x4e0] sm:$0xf]
    %v338 = vld [vmem:[%s1 + $0x4e4] sm:$0xf]
    %v339 = vld [vmem:[%s1 + $0x4e8] sm:$0xf]
    %v340 = vld [vmem:[%s1 + $0x4ec] sm:$0xf]
    %v341 = vld [vmem:[%s1 + $0x4f0] sm:$0xf]
    %v342 = vld [vmem:[%s1 + $0x4f4] sm:$0xf]
    %v343 = vld [vmem:[%s1 + $0x4f8] sm:$0xf]
    %v344 = vld [vmem:[%s1 + $0x4fc] sm:$0xf]
    %v345 = vld [vmem:[%s1 + $0x500] sm:$0xf]
    %v346 = vld [vmem:[%s1 + $0x504] sm:$0xf]
    %v347 = vld [vmem:[%s1 + $0x508] sm:$0xf]
    %v348 = vld [vmem:[%s1 + $0x50c] sm:$0xf]
    %v349 = vld [vmem:[%s1 + $0x510] sm:$0xf]
    %v350 = vld [vmem:[%s1 + $0x514] sm:$0xf]
    %v351 = vld [vmem:[%s1 + $0x518] sm:$0xf]
    %v352 = vld [vmem:[%s1 + $0x51c] sm:$0xf]
    %v353 = vld [vmem:[%s1 + $0x520] sm:$0xf]
    %v354 = vld [vmem:[%s1 + $0x524] sm:$0xf]
    %v355 = vld [vmem:[%s1 + $0x528] sm:$0xf]
    %v356 = vld [vmem:[%s1 + $0x52c] sm:$0xf]
    %v357 = vld [vmem:[%s1 + $0x530] sm:$0xf]
    %v358 = vld [vmem:[%s1 + $0x534] sm:$0xf]
    %v359 = vld [vmem:[%s1 + $0x538] sm:$0xf]
    %v360 = vld [vmem:[%s1 + $0x53c] sm:$0xf]
    %v361 = vld [vmem:[%s1 + $0x540] sm:$0xf]
    %v362 = vld [vmem:[%s1 + $0x544] sm:$0xf]
    %v363 = vld [vmem:[%s1 + $0x548] sm:$0xf]
    %v364 = vld [vmem:[%s1 + $0x54c] sm:$0xf]
    %v365 = vld [vmem:[%s1 + $0x550] sm:$0xf]
    %v366 = vld [vmem:[%s1 + $0x554] sm:$0xf]
    %v367 = vld [vmem:[%s1 + $0x558] sm:$0xf]
    %v368 = vld [vmem:[%s1 + $0x55c] sm:$0xf]
    %v369 = vld [vmem:[%s1 + $0x560] sm:$0xf]
    %v370 = vld [vmem:[%s1 + $0x564] sm:$0xf]
    %v371 = vld [vmem:[%s1 + $0x568] sm:$0xf]
    %v372 = vld [vmem:[%s1 + $0x56c] sm:$0xf]
    %v373 = vld [vmem:[%s1 + $0x570] sm:$0xf]
    %v374 = vld [vmem:[%s1 + $0x574] sm:$0xf]
    %v375 = vld [vmem:[%s1 + $0x578] sm:$0xf]
    %v376 = vld [vmem:[%s1 + $0x57c] sm:$0xf]
    %v377 = vld [vmem:[%s1 + $0x580] sm:$0xf]
    %v378 = vld [vmem:[%s1 + $0x584] sm:$0xf]
    %v379 = vld [vmem:[%s1 + $0x588] sm:$0xf]
    %v380 = vld [vmem:[%s1 + $0x58c] sm:$0xf]
    %v381 = vld [vmem:[%s1 + $0x590] sm:$0xf]
    %v382 = vld [vmem:[%s1 + $0x594] sm:$0xf]
    %v383 = vld [vmem:[%s1 + $0x598] sm:$0xf]
    %v384 = vld [vmem:[%s1 + $0x59c] sm:$0xf]
    %v385 = vld [vmem:[%s1 + $0x5a0] sm:$0xf]
    %v386 = vld [vmem:[%s1 + $0x5a4] sm:$0xf]
    %v387 = vld [vmem:[%s1 + $0x5a8] sm:$0xf]
    %v388 = vld [vmem:[%s1 + $0x5ac] sm:$0xf]
    %v389 = vld [vmem:[%s1 + $0x5b0] sm:$0xf]
    %v390 = vld [vmem:[%s1 + $0x5b4] sm:$0xf]
    %v391 = vld [vmem:[%s1 + $0x5b8] sm:$0xf]
    %v392 = vld [vmem:[%s1 + $0x5bc] sm:$0xf]
    %v393 = vld [vmem:[%s1 + $0x5c0] sm:$0xf]
    %v394 = vld [vmem:[%s1 + $0x5c4] sm:$0xf]
    %v395 = vld [vmem:[%s1 + $0x5c8] sm:$0xf]
    %v396 = vld [vmem:[%s1 + $0x5cc] sm:$0xf]
    %v397 = vld [vmem:[%s1 + $0x5d0] sm:$0xf]
    %v398 = vld [vmem:[%s1 + $0x5d4] sm:$0xf]
    %v399 = vld [vmem:[%s1 + $0x5d8] sm:$0xf]
    %v400 = vld [vmem:[%s1 + $0x5dc] sm:$0xf]
    %v401 = vld [vmem:[%s1 + $0x5e0] sm:$0xf]
    %v402 = vld [vmem:[%s1 + $0x5e4] sm:$0xf]
    %v403 = vld [vmem:[%s1 + $0x5e8] sm:$0xf]
    %v404 = vld [vmem:[%s1 + $0x5ec] sm:$0xf]
    %v405 = vld [vmem:[%s1 + $0x5f0] sm:$0xf]
    %v406 = vld [vmem:[%s1 + $0x5f4] sm:$0xf]
    %v407 = vld [vmem:[%s1 + $0x5f8] sm:$0xf]
    %v408 = vld [vmem:[%s1 + $0x5fc] sm:$0xf]
    %v409 = vld [vmem:[%s1 + $0x600] sm:$0xf]
    %v410 = vld [vmem:[%s1 + $0x604] sm:$0xf]
    %v411 = vld [vmem:[%s1 + $0x608] sm:$0xf]
    %v412 = vld [vmem:[%s1 + $0x60c] sm:$0xf]
    %v413 = vld [vmem:[%s1 + $0x610] sm:$0xf]
    %v414 = vld [vmem:[%s1 + $0x614] sm:$0xf]
    %v415 = vld [vmem:[%s1 + $0x618] sm:$0xf]
    %v416 = vld [vmem:[%s1 + $0x61c] sm:$0xf]
    %v417 = vld [vmem:[%s1 + $0x620] sm:$0xf]
    %v418 = vld [vmem:[%s1 + $0x624] sm:$0xf]
    %v419 = vld [vmem:[%s1 + $0x628] sm:$0xf]
    %v420 = vld [vmem:[%s1 + $0x62c] sm:$0xf]
    %v421 = vld [vmem:[%s1 + $0x630] sm:$0xf]
    %v422 = vld [vmem:[%s1 + $0x634] sm:$0xf]
    %v423 = vld [vmem:[%s1 + $0x638] sm:$0xf]
    %v424 = vld [vmem:[%s1 + $0x63c] sm:$0xf]
    %v425 = vld [vmem:[%s1 + $0x640] sm:$0xf]
    %v426 = vld [vmem:[%s1 + $0x644] sm:$0xf]
    %v427 = vld [vmem:[%s1 + $0x648] sm:$0xf]
    %v428 = vld [vmem:[%s1 + $0x64c] sm:$0xf]
    %v429 = vld [vmem:[%s1 + $0x650] sm:$0xf]
    %v430 = vld [vmem:[%s1 + $0x654] sm:$0xf]
    %v431 = vld [vmem:[%s1 + $0x658] sm:$0xf]
    %v432 = vld [vmem:[%s1 + $0x65c] sm:$0xf]
    %v433 = vld [vmem:[%s1 + $0x660] sm:$0xf]
    %v434 = vld [vmem:[%s1 + $0x664] sm:$0xf]
    %v435 = vld [vmem:[%s1 + $0x668] sm:$0xf]
    %v436 = vld [vmem:[%s1 + $0x66c] sm:$0xf]
    %v437 = vld [vmem:[%s1 + $0x670] sm:$0xf]
    %v438 = vld [vmem:[%s1 + $0x674] sm:$0xf]
    %v439 = vld [vmem:[%s1 + $0x678] sm:$0xf]
    %v440 = vld [vmem:[%s1 + $0x67c] sm:$0xf]
    %v441 = vld [vmem:[%s1 + $0x680] sm:$0xf]
    %v442 = vld [vmem:[%s1 + $0x684] sm:$0xf]
    %v443 = vld [vmem:[%s1 + $0x688] sm:$0xf]
    %v444 = vld [vmem:[%s1 + $0x68c] sm:$0xf]
    %v445 = vld [vmem:[%s1 + $0x690] sm:$0xf]
    %v446 = vld [vmem:[%s1 + $0x694] sm:$0xf]
    %v447 = vld [vmem:[%s1 + $0x698] sm:$0xf]
    %v448 = vld [vmem:[%s1 + $0x69c] sm:$0xf]
    %v449 = vld [vmem:[%s1 + $0x6a0] sm:$0xf]
    %v450 = vld [vmem:[%s1 + $0x6a4] sm:$0xf]
    %v451 = vld [vmem:[%s1 + $0x6a8] sm:$0xf]
    %v452 = vld [vmem:[%s1 + $0x6ac] sm:$0xf]
    %v453 = vld [vmem:[%s1 + $0x6b0] sm:$0xf]
    %v454 = vld [vmem:[%s1 + $0x6b4] sm:$0xf]
    %v455 = vld [vmem:[%s1 + $0x6b8] sm:$0xf]
    %v456 = vld [vmem:[%s1 + $0x6bc] sm:$0xf]
    %v457 = vld [vmem:[%s1 + $0x6c0] sm:$0xf]
    %v458 = vld [vmem:[%s1 + $0x6c4] sm:$0xf]
    %v459 = vld [vmem:[%s1 + $0x6c8] sm:$0xf]
    %v460 = vld [vmem:[%s1 + $0x6cc] sm:$0xf]
    %v461 = vld [vmem:[%s1 + $0x6d0] sm:$0xf]
    %v462 = vld [vmem:[%s1 + $0x6d4] sm:$0xf]
    %v463 = vld [vmem:[%s1 + $0x6d8] sm:$0xf]
    %v464 = vld [vmem:[%s1 + $0x6dc] sm:$0xf]
    %v465 = vld [vmem:[%s1 + $0x6e0] sm:$0xf]
    %v466 = vld [vmem:[%s1 + $0x6e4] sm:$0xf]
    %v467 = vld [vmem:[%s1 + $0x6e8] sm:$0xf]
    %v468 = vld [vmem:[%s1 + $0x6ec] sm:$0xf]
    %v469 = vld [vmem:[%s1 + $0x6f0] sm:$0xf]
    %v470 = vld [vmem:[%s1 + $0x6f4] sm:$0xf]
    %v471 = vld [vmem:[%s1 + $0x6f8] sm:$0xf]
    %v472 = vld [vmem:[%s1 + $0x6fc] sm:$0xf]
    %v473 = vld [vmem:[%s1 + $0x700] sm:$0xf]
    %v474 = vld [vmem:[%s1 + $0x704] sm:$0xf]
    %v475 = vld [vmem:[%s1 + $0x708] sm:$0xf]
    %v476 = vld [vmem:[%s1 + $0x70c] sm:$0xf]
    %v477 = vld [vmem:[%s1 + $0x710] sm:$0xf]
    %v478 = vld [vmem:[%s1 + $0x714] sm:$0xf]
    %v479 = vld [vmem:[%s1 + $0x718] sm:$0xf]
    %v480 = vld [vmem:[%s1 + $0x71c] sm:$0xf]
    %v481 = vld [vmem:[%s1 + $0x720] sm:$0xf]
    %v482 = vld [vmem:[%s1 + $0x724] sm:$0xf]
    %v483 = vld [vmem:[%s1 + $0x728] sm:$0xf]
    %v484 = vld [vmem:[%s1 + $0x72c] sm:$0xf]
    %v485 = vld [vmem:[%s1 + $0x730] sm:$0xf]
    %v486 = vld [vmem:[%s1 + $0x734] sm:$0xf]
    %v487 = vld [vmem:[%s1 + $0x738] sm:$0xf]
    %v488 = vld [vmem:[%s1 + $0x73c] sm:$0xf]
    %v489 = vld [vmem:[%s1 + $0x740] sm:$0xf]
    %v490 = vld [vmem:[%s1 + $0x744] sm:$0xf]
    %v491 = vld [vmem:[%s1 + $0x748] sm:$0xf]
    %v492 = vld [vmem:[%s1 + $0x74c] sm:$0xf]
    %v493 = vld [vmem:[%s1 + $0x750] sm:$0xf]
    %v494 = vld [vmem:[%s1 + $0x754] sm:$0xf]
    %v495 = vld [vmem:[%s1 + $0x758] sm:$0xf]
    %v496 = vld [vmem:[%s1 + $0x75c] sm:$0xf]
    %v497 = vld [vmem:[%s1 + $0x760] sm:$0xf]
    %v498 = vld [vmem:[%s1 + $0x764] sm:$0xf]
    %v499 = vld [vmem:[%s1 + $0x768] sm:$0xf]
    %v500 = vld [vmem:[%s1 + $0x76c] sm:$0xf]
    %v501 = vld [vmem:[%s1 + $0x770] sm:$0xf]
    %v502 = vld [vmem:[%s1 + $0x774] sm:$0xf]
    %v503 = vld [vmem:[%s1 + $0x778] sm:$0xf]
    %v504 = vld [vmem:[%s1 + $0x77c] sm:$0xf]
    %v505 = vld [vmem:[%s1 + $0x780] sm:$0xf]
    %v506 = vld [vmem:[%s1 + $0x784] sm:$0xf]
    %v507 = vld [vmem:[%s1 + $0x788] sm:$0xf]
    %v508 = vld [vmem:[%s1 + $0x78c] sm:$0xf]
    %v509 = vld [vmem:[%s1 + $0x790] sm:$0xf]
    %v510 = vld [vmem:[%s1 + $0x794] sm:$0xf]
    %v511 = vld [vmem:[%s1 + $0x798] sm:$0xf]
    %v512 = vld [vmem:[%s1 + $0x79c] sm:$0xf]
    %v513 = vld [vmem:[%s1 + $0x7a0] sm:$0xf]
    %v514 = vld [vmem:[%s1 + $0x7a4] sm:$0xf]
    %v515 = vld [vmem:[%s1 + $0x7a8] sm:$0xf]
    %v516 = vld [vmem:[%s1 + $0x7ac] sm:$0xf]
    %v517 = vld [vmem:[%s1 + $0x7b0] sm:$0xf]
    %v518 = vld [vmem:[%s1 + $0x7b4] sm:$0xf]
    %v519 = vld [vmem:[%s1 + $0x7b8] sm:$0xf]
    %v520 = vld [vmem:[%s1 + $0x7bc] sm:$0xf]
    %v521 = vld [vmem:[%s1 + $0x7c0] sm:$0xf]
    %v522 = vld [vmem:[%s1 + $0x7c4] sm:$0xf]
    %v523 = vld [vmem:[%s1 + $0x7c8] sm:$0xf]
    %v524 = vld [vmem:[%s1 + $0x7cc] sm:$0xf]
    %v525 = vld [vmem:[%s1 + $0x7d0] sm:$0xf]
    %v526 = vld [vmem:[%s1 + $0x7d4] sm:$0xf]
    %v527 = vld [vmem:[%s1 + $0x7d8] sm:$0xf]
    %v528 = vld [vmem:[%s1 + $0x7dc] sm:$0xf]
    %v529 = vld [vmem:[%s1 + $0x7e0] sm:$0xf]
    %v530 = vld [vmem:[%s1 + $0x7e4] sm:$0xf]
    %v531 = vld [vmem:[%s1 + $0x7e8] sm:$0xf]
    %v532 = vld [vmem:[%s1 + $0x7ec] sm:$0xf]
    %v533 = vld [vmem:[%s1 + $0x7f0] sm:$0xf]
    %v534 = vld [vmem:[%s1 + $0x7f4] sm:$0xf]
    %v535 = vld [vmem:[%s1 + $0x7f8] sm:$0xf]
    %v536 = vld [vmem:[%s1 + $0x7fc] sm:$0xf]
    %v537 = vld [vmem:[%s2] sm:$0x1]
    %v539 = vperm.slane %v537, 0
    %542 = vst [vmem:[#allocation1] ss:$9 sm:$0xff] %v21
    %v543 = vld [vmem:[#allocation1] sm:$0xff]
    %v544 = vld [vmem:[#allocation1 + $0x9] sm:$0xff]
    %v545 = vld [vmem:[#allocation1 + $0x12] sm:$0xff]
    %v546 = vld [vmem:[#allocation1 + $0x1b] sm:$0xff]
    %v547 = vld [vmem:[#allocation1 + $0x24] sm:$0xff]
    %v548 = vld [vmem:[#allocation1 + $0x2d] sm:$0xff]
    %v549 = vld [vmem:[#allocation1 + $0x36] sm:$0xff]
    %v550 = vld [vmem:[#allocation1 + $0x3f] sm:$0xff]
    %552 = vst [vmem:[#allocation1] ss:$9 sm:$0xff] %v22
    %v553 = vld [vmem:[#allocation1] sm:$0xff]
    %v554 = vld [vmem:[#allocation1 + $0x9] sm:$0xff]
    %v555 = vld [vmem:[#allocation1 + $0x12] sm:$0xff]
    %v556 = vld [vmem:[#allocation1 + $0x1b] sm:$0xff]
    %v557 = vld [vmem:[#allocation1 + $0x24] sm:$0xff]
    %v558 = vld [vmem:[#allocation1 + $0x2d] sm:$0xff]
    %v559 = vld [vmem:[#allocation1 + $0x36] sm:$0xff]
    %v560 = vld [vmem:[#allocation1 + $0x3f] sm:$0xff]
    %562 = vst [vmem:[#allocation1] ss:$9 sm:$0xff] %v23
    %v563 = vld [vmem:[#allocation1] sm:$0xff]
    %v564 = vld [vmem:[#allocation1 + $0x9] sm:$0xff]
    %v565 = vld [vmem:[#allocation1 + $0x12] sm:$0xff]
    %v566 = vld [vmem:[#allocation1 + $0x1b] sm:$0xff]
    %v567 = vld [vmem:[#allocation1 + $0x24] sm:$0xff]
    %v568 = vld [vmem:[#allocation1 + $0x2d] sm:$0xff]
    %v569 = vld [vmem:[#allocation1 + $0x36] sm:$0xff]
    %v570 = vld [vmem:[#allocation1 + $0x3f] sm:$0xff]
    %572 = vst [vmem:[#allocation1] ss:$9 sm:$0xff] %v24
    %v573 = vld [vmem:[#allocation1] sm:$0xff]
    %v574 = vld [vmem:[#allocation1 + $0x9] sm:$0xff]
    %v575 = vld [vmem:[#allocation1 + $0x12] sm:$0xff]
    %v576 = vld [vmem:[#allocation1 + $0x1b] sm:$0xff]
    %v577 = vld [vmem:[#allocation1 + $0x24] sm:$0xff]
    %v578 = vld [vmem:[#allocation1 + $0x2d] sm:$0xff]
    %v579 = vld [vmem:[#allocation1 + $0x36] sm:$0xff]
    %v580 = vld [vmem:[#allocation1 + $0x3f] sm:$0xff]
    %v1125 = vunpack.c.l.b16 %v25
    %v1126 = vunpack.c.l.b16 %v26
    %v1127 = vunpack.c.l.b16 %v27
    %v1128 = vunpack.c.l.b16 %v28
    %v1129 = vunpack.c.l.b16 %v29
    %v1130 = vunpack.c.l.b16 %v30
    %v1131 = vunpack.c.l.b16 %v31
    %v1132 = vunpack.c.l.b16 %v32
    %v1133 = vunpack.c.l.b16 %v33
    %v1134 = vunpack.c.l.b16 %v34
    %v1135 = vunpack.c.l.b16 %v35
    %v1136 = vunpack.c.l.b16 %v36
    %v1137 = vunpack.c.l.b16 %v37
    %v1138 = vunpack.c.l.b16 %v38
    %v1139 = vunpack.c.l.b16 %v39
    %v1140 = vunpack.c.l.b16 %v40
    %v1141 = vunpack.c.l.b16 %v41
    %v1142 = vunpack.c.l.b16 %v42
    %v1143 = vunpack.c.l.b16 %v43
    %v1144 = vunpack.c.l.b16 %v44
    %v1145 = vunpack.c.l.b16 %v45
    %v1146 = vunpack.c.l.b16 %v46
    %v1147 = vunpack.c.l.b16 %v47
    %v1148 = vunpack.c.l.b16 %v48
    %v1149 = vunpack.c.l.b16 %v49
    %v1150 = vunpack.c.l.b16 %v50
    %v1151 = vunpack.c.l.b16 %v51
    %v1152 = vunpack.c.l.b16 %v52
    %v1153 = vunpack.c.l.b16 %v53
    %v1154 = vunpack.c.l.b16 %v54
    %v1155 = vunpack.c.l.b16 %v55
    %v1156 = vunpack.c.l.b16 %v56
    %v1157 = vunpack.c.l.b16 %v57
    %v1158 = vunpack.c.l.b16 %v58
    %v1159 = vunpack.c.l.b16 %v59
    %v1160 = vunpack.c.l.b16 %v60
    %v1161 = vunpack.c.l.b16 %v61
    %v1162 = vunpack.c.l.b16 %v62
    %v1163 = vunpack.c.l.b16 %v63
    %v1164 = vunpack.c.l.b16 %v64
    %v1165 = vunpack.c.l.b16 %v65
    %v1166 = vunpack.c.l.b16 %v66
    %v1167 = vunpack.c.l.b16 %v67
    %v1168 = vunpack.c.l.b16 %v68
    %v1169 = vunpack.c.l.b16 %v69
    %v1170 = vunpack.c.l.b16 %v70
    %v1171 = vunpack.c.l.b16 %v71
    %v1172 = vunpack.c.l.b16 %v72
    %v1173 = vunpack.c.l.b16 %v73
    %v1174 = vunpack.c.l.b16 %v74
    %v1175 = vunpack.c.l.b16 %v75
    %v1176 = vunpack.c.l.b16 %v76
    %v1177 = vunpack.c.l.b16 %v77
    %v1178 = vunpack.c.l.b16 %v78
    %v1179 = vunpack.c.l.b16 %v79
    %v1180 = vunpack.c.l.b16 %v80
    %v1181 = vunpack.c.l.b16 %v81
    %v1182 = vunpack.c.l.b16 %v82
    %v1183 = vunpack.c.l.b16 %v83
    %v1184 = vunpack.c.l.b16 %v84
    %v1185 = vunpack.c.l.b16 %v85
    %v1186 = vunpack.c.l.b16 %v86
    %v1187 = vunpack.c.l.b16 %v87
    %v1188 = vunpack.c.l.b16 %v88
    %v1189 = vunpack.c.l.b16 %v89
    %v1190 = vunpack.c.l.b16 %v90
    %v1191 = vunpack.c.l.b16 %v91
    %v1192 = vunpack.c.l.b16 %v92
    %v1193 = vunpack.c.l.b16 %v93
    %v1194 = vunpack.c.l.b16 %v94
    %v1195 = vunpack.c.l.b16 %v95
    %v1196 = vunpack.c.l.b16 %v96
    %v1197 = vunpack.c.l.b16 %v97
    %v1198 = vunpack.c.l.b16 %v98
    %v1199 = vunpack.c.l.b16 %v99
    %v1200 = vunpack.c.l.b16 %v100
    %v1201 = vunpack.c.l.b16 %v101
    %v1202 = vunpack.c.l.b16 %v102
    %v1203 = vunpack.c.l.b16 %v103
    %v1204 = vunpack.c.l.b16 %v104
    %v1205 = vunpack.c.l.b16 %v105
    %v1206 = vunpack.c.l.b16 %v106
    %v1207 = vunpack.c.l.b16 %v107
    %v1208 = vunpack.c.l.b16 %v108
    %v1209 = vunpack.c.l.b16 %v109
    %v1210 = vunpack.c.l.b16 %v110
    %v1211 = vunpack.c.l.b16 %v111
    %v1212 = vunpack.c.l.b16 %v112
    %v1213 = vunpack.c.l.b16 %v113
    %v1214 = vunpack.c.l.b16 %v114
    %v1215 = vunpack.c.l.b16 %v115
    %v1216 = vunpack.c.l.b16 %v116
    %v1217 = vunpack.c.l.b16 %v117
    %v1218 = vunpack.c.l.b16 %v118
    %v1219 = vunpack.c.l.b16 %v119
    %v1220 = vunpack.c.l.b16 %v120
    %v1221 = vunpack.c.l.b16 %v121
    %v1222 = vunpack.c.l.b16 %v122
    %v1223 = vunpack.c.l.b16 %v123
    %v1224 = vunpack.c.l.b16 %v124
    %v1225 = vunpack.c.l.b16 %v125
    %v1226 = vunpack.c.l.b16 %v126
    %v1227 = vunpack.c.l.b16 %v127
    %v1228 = vunpack.c.l.b16 %v128
    %v1229 = vunpack.c.l.b16 %v129
    %v1230 = vunpack.c.l.b16 %v130
    %v1231 = vunpack.c.l.b16 %v131
    %v1232 = vunpack.c.l.b16 %v132
    %v1233 = vunpack.c.l.b16 %v133
    %v1234 = vunpack.c.l.b16 %v134
    %v1235 = vunpack.c.l.b16 %v135
    %v1236 = vunpack.c.l.b16 %v136
    %v1237 = vunpack.c.l.b16 %v137
    %v1238 = vunpack.c.l.b16 %v138
    %v1239 = vunpack.c.l.b16 %v139
    %v1240 = vunpack.c.l.b16 %v140
    %v1241 = vunpack.c.l.b16 %v141
    %v1242 = vunpack.c.l.b16 %v142
    %v1243 = vunpack.c.l.b16 %v143
    %v1244 = vunpack.c.l.b16 %v144
    %v1245 = vunpack.c.l.b16 %v145
    %v1246 = vunpack.c.l.b16 %v146
    %v1247 = vunpack.c.l.b16 %v147
    %v1248 = vunpack.c.l.b16 %v148
    %v1249 = vunpack.c.l.b16 %v149
    %v1250 = vunpack.c.l.b16 %v150
    %v1251 = vunpack.c.l.b16 %v151
    %v1252 = vunpack.c.l.b16 %v152
    %v1253 = vunpack.c.l.b16 %v153
    %v1254 = vunpack.c.l.b16 %v154
    %v1255 = vunpack.c.l.b16 %v155
    %v1256 = vunpack.c.l.b16 %v156
    %v1257 = vunpack.c.l.b16 %v157
    %v1258 = vunpack.c.l.b16 %v158
    %v1259 = vunpack.c.l.b16 %v159
    %v1260 = vunpack.c.l.b16 %v160
    %v1261 = vunpack.c.l.b16 %v161
    %v1262 = vunpack.c.l.b16 %v162
    %v1263 = vunpack.c.l.b16 %v163
    %v1264 = vunpack.c.l.b16 %v164
    %v1265 = vunpack.c.l.b16 %v165
    %v1266 = vunpack.c.l.b16 %v166
    %v1267 = vunpack.c.l.b16 %v167
    %v1268 = vunpack.c.l.b16 %v168
    %v1269 = vunpack.c.l.b16 %v169
    %v1270 = vunpack.c.l.b16 %v170
    %v1271 = vunpack.c.l.b16 %v171
    %v1272 = vunpack.c.l.b16 %v172
    %v1273 = vunpack.c.l.b16 %v173
    %v1274 = vunpack.c.l.b16 %v174
    %v1275 = vunpack.c.l.b16 %v175
    %v1276 = vunpack.c.l.b16 %v176
    %v1277 = vunpack.c.l.b16 %v177
    %v1278 = vunpack.c.l.b16 %v178
    %v1279 = vunpack.c.l.b16 %v179
    %v1280 = vunpack.c.l.b16 %v180
    %v1281 = vunpack.c.l.b16 %v181
    %v1282 = vunpack.c.l.b16 %v182
    %v1283 = vunpack.c.l.b16 %v183
    %v1284 = vunpack.c.l.b16 %v184
    %v1285 = vunpack.c.l.b16 %v185
    %v1286 = vunpack.c.l.b16 %v186
    %v1287 = vunpack.c.l.b16 %v187
    %v1288 = vunpack.c.l.b16 %v188
    %v1289 = vunpack.c.l.b16 %v189
    %v1290 = vunpack.c.l.b16 %v190
    %v1291 = vunpack.c.l.b16 %v191
    %v1292 = vunpack.c.l.b16 %v192
    %v1293 = vunpack.c.l.b16 %v193
    %v1294 = vunpack.c.l.b16 %v194
    %v1295 = vunpack.c.l.b16 %v195
    %v1296 = vunpack.c.l.b16 %v196
    %v1297 = vunpack.c.l.b16 %v197
    %v1298 = vunpack.c.l.b16 %v198
    %v1299 = vunpack.c.l.b16 %v199
    %v1300 = vunpack.c.l.b16 %v200
    %v1301 = vunpack.c.l.b16 %v201
    %v1302 = vunpack.c.l.b16 %v202
    %v1303 = vunpack.c.l.b16 %v203
    %v1304 = vunpack.c.l.b16 %v204
    %v1305 = vunpack.c.l.b16 %v205
    %v1306 = vunpack.c.l.b16 %v206
    %v1307 = vunpack.c.l.b16 %v207
    %v1308 = vunpack.c.l.b16 %v208
    %v1309 = vunpack.c.l.b16 %v209
    %v1310 = vunpack.c.l.b16 %v210
    %v1311 = vunpack.c.l.b16 %v211
    %v1312 = vunpack.c.l.b16 %v212
    %v1313 = vunpack.c.l.b16 %v213
    %v1314 = vunpack.c.l.b16 %v214
    %v1315 = vunpack.c.l.b16 %v215
    %v1316 = vunpack.c.l.b16 %v216
    %v1317 = vunpack.c.l.b16 %v217
    %v1318 = vunpack.c.l.b16 %v218
    %v1319 = vunpack.c.l.b16 %v219
    %v1320 = vunpack.c.l.b16 %v220
    %v1321 = vunpack.c.l.b16 %v221
    %v1322 = vunpack.c.l.b16 %v222
    %v1323 = vunpack.c.l.b16 %v223
    %v1324 = vunpack.c.l.b16 %v224
    %v1325 = vunpack.c.l.b16 %v225
    %v1326 = vunpack.c.l.b16 %v226
    %v1327 = vunpack.c.l.b16 %v227
    %v1328 = vunpack.c.l.b16 %v228
    %v1329 = vunpack.c.l.b16 %v229
    %v1330 = vunpack.c.l.b16 %v230
    %v1331 = vunpack.c.l.b16 %v231
    %v1332 = vunpack.c.l.b16 %v232
    %v1333 = vunpack.c.l.b16 %v233
    %v1334 = vunpack.c.l.b16 %v234
    %v1335 = vunpack.c.l.b16 %v235
    %v1336 = vunpack.c.l.b16 %v236
    %v1337 = vunpack.c.l.b16 %v237
    %v1338 = vunpack.c.l.b16 %v238
    %v1339 = vunpack.c.l.b16 %v239
    %v1340 = vunpack.c.l.b16 %v240
    %v1341 = vunpack.c.l.b16 %v241
    %v1342 = vunpack.c.l.b16 %v242
    %v1343 = vunpack.c.l.b16 %v243
    %v1344 = vunpack.c.l.b16 %v244
    %v1345 = vunpack.c.l.b16 %v245
    %v1346 = vunpack.c.l.b16 %v246
    %v1347 = vunpack.c.l.b16 %v247
    %v1348 = vunpack.c.l.b16 %v248
    %v1349 = vunpack.c.l.b16 %v249
    %v1350 = vunpack.c.l.b16 %v250
    %v1351 = vunpack.c.l.b16 %v251
    %v1352 = vunpack.c.l.b16 %v252
    %v1353 = vunpack.c.l.b16 %v253
    %v1354 = vunpack.c.l.b16 %v254
    %v1355 = vunpack.c.l.b16 %v255
    %v1356 = vunpack.c.l.b16 %v256
    %v1357 = vunpack.c.l.b16 %v257
    %v1358 = vunpack.c.l.b16 %v258
    %v1359 = vunpack.c.l.b16 %v259
    %v1360 = vunpack.c.l.b16 %v260
    %v1361 = vunpack.c.l.b16 %v261
    %v1362 = vunpack.c.l.b16 %v262
    %v1363 = vunpack.c.l.b16 %v263
    %v1364 = vunpack.c.l.b16 %v264
    %v1365 = vunpack.c.l.b16 %v265
    %v1366 = vunpack.c.l.b16 %v266
    %v1367 = vunpack.c.l.b16 %v267
    %v1368 = vunpack.c.l.b16 %v268
    %v1369 = vunpack.c.l.b16 %v269
    %v1370 = vunpack.c.l.b16 %v270
    %v1371 = vunpack.c.l.b16 %v271
    %v1372 = vunpack.c.l.b16 %v272
    %v1373 = vunpack.c.l.b16 %v273
    %v1374 = vunpack.c.l.b16 %v274
    %v1375 = vunpack.c.l.b16 %v275
    %v1376 = vunpack.c.l.b16 %v276
    %v1377 = vunpack.c.l.b16 %v277
    %v1378 = vunpack.c.l.b16 %v278
    %v1379 = vunpack.c.l.b16 %v279
    %v1380 = vunpack.c.l.b16 %v280
    %v1381 = vunpack.c.l.b16 %v281
    %v1382 = vunpack.c.l.b16 %v282
    %v1383 = vunpack.c.l.b16 %v283
    %v1384 = vunpack.c.l.b16 %v284
    %v1385 = vunpack.c.l.b16 %v285
    %v1386 = vunpack.c.l.b16 %v286
    %v1387 = vunpack.c.l.b16 %v287
    %v1388 = vunpack.c.l.b16 %v288
    %v1389 = vunpack.c.l.b16 %v289
    %v1390 = vunpack.c.l.b16 %v290
    %v1391 = vunpack.c.l.b16 %v291
    %v1392 = vunpack.c.l.b16 %v292
    %v1393 = vunpack.c.l.b16 %v293
    %v1394 = vunpack.c.l.b16 %v294
    %v1395 = vunpack.c.l.b16 %v295
    %v1396 = vunpack.c.l.b16 %v296
    %v1397 = vunpack.c.l.b16 %v297
    %v1398 = vunpack.c.l.b16 %v298
    %v1399 = vunpack.c.l.b16 %v299
    %v1400 = vunpack.c.l.b16 %v300
    %v1401 = vunpack.c.l.b16 %v301
    %v1402 = vunpack.c.l.b16 %v302
    %v1403 = vunpack.c.l.b16 %v303
    %v1404 = vunpack.c.l.b16 %v304
    %v1405 = vunpack.c.l.b16 %v305
    %v1406 = vunpack.c.l.b16 %v306
    %v1407 = vunpack.c.l.b16 %v307
    %v1408 = vunpack.c.l.b16 %v308
    %v1409 = vunpack.c.l.b16 %v309
    %v1410 = vunpack.c.l.b16 %v310
    %v1411 = vunpack.c.l.b16 %v311
    %v1412 = vunpack.c.l.b16 %v312
    %v1413 = vunpack.c.l.b16 %v313
    %v1414 = vunpack.c.l.b16 %v314
    %v1415 = vunpack.c.l.b16 %v315
    %v1416 = vunpack.c.l.b16 %v316
    %v1417 = vunpack.c.l.b16 %v317
    %v1418 = vunpack.c.l.b16 %v318
    %v1419 = vunpack.c.l.b16 %v319
    %v1420 = vunpack.c.l.b16 %v320
    %v1421 = vunpack.c.l.b16 %v321
    %v1422 = vunpack.c.l.b16 %v322
    %v1423 = vunpack.c.l.b16 %v323
    %v1424 = vunpack.c.l.b16 %v324
    %v1425 = vunpack.c.l.b16 %v325
    %v1426 = vunpack.c.l.b16 %v326
    %v1427 = vunpack.c.l.b16 %v327
    %v1428 = vunpack.c.l.b16 %v328
    %v1429 = vunpack.c.l.b16 %v329
    %v1430 = vunpack.c.l.b16 %v330
    %v1431 = vunpack.c.l.b16 %v331
    %v1432 = vunpack.c.l.b16 %v332
    %v1433 = vunpack.c.l.b16 %v333
    %v1434 = vunpack.c.l.b16 %v334
    %v1435 = vunpack.c.l.b16 %v335
    %v1436 = vunpack.c.l.b16 %v336
    %v1437 = vunpack.c.l.b16 %v337
    %v1438 = vunpack.c.l.b16 %v338
    %v1439 = vunpack.c.l.b16 %v339
    %v1440 = vunpack.c.l.b16 %v340
    %v1441 = vunpack.c.l.b16 %v341
    %v1442 = vunpack.c.l.b16 %v342
    %v1443 = vunpack.c.l.b16 %v343
    %v1444 = vunpack.c.l.b16 %v344
    %v1445 = vunpack.c.l.b16 %v345
    %v1446 = vunpack.c.l.b16 %v346
    %v1447 = vunpack.c.l.b16 %v347
    %v1448 = vunpack.c.l.b16 %v348
    %v1449 = vunpack.c.l.b16 %v349
    %v1450 = vunpack.c.l.b16 %v350
    %v1451 = vunpack.c.l.b16 %v351
    %v1452 = vunpack.c.l.b16 %v352
    %v1453 = vunpack.c.l.b16 %v353
    %v1454 = vunpack.c.l.b16 %v354
    %v1455 = vunpack.c.l.b16 %v355
    %v1456 = vunpack.c.l.b16 %v356
    %v1457 = vunpack.c.l.b16 %v357
    %v1458 = vunpack.c.l.b16 %v358
    %v1459 = vunpack.c.l.b16 %v359
    %v1460 = vunpack.c.l.b16 %v360
    %v1461 = vunpack.c.l.b16 %v361
    %v1462 = vunpack.c.l.b16 %v362
    %v1463 = vunpack.c.l.b16 %v363
    %v1464 = vunpack.c.l.b16 %v364
    %v1465 = vunpack.c.l.b16 %v365
    %v1466 = vunpack.c.l.b16 %v366
    %v1467 = vunpack.c.l.b16 %v367
    %v1468 = vunpack.c.l.b16 %v368
    %v1469 = vunpack.c.l.b16 %v369
    %v1470 = vunpack.c.l.b16 %v370
    %v1471 = vunpack.c.l.b16 %v371
    %v1472 = vunpack.c.l.b16 %v372
    %v1473 = vunpack.c.l.b16 %v373
    %v1474 = vunpack.c.l.b16 %v374
    %v1475 = vunpack.c.l.b16 %v375
    %v1476 = vunpack.c.l.b16 %v376
    %v1477 = vunpack.c.l.b16 %v377
    %v1478 = vunpack.c.l.b16 %v378
    %v1479 = vunpack.c.l.b16 %v379
    %v1480 = vunpack.c.l.b16 %v380
    %v1481 = vunpack.c.l.b16 %v381
    %v1482 = vunpack.c.l.b16 %v382
    %v1483 = vunpack.c.l.b16 %v383
    %v1484 = vunpack.c.l.b16 %v384
    %v1485 = vunpack.c.l.b16 %v385
    %v1486 = vunpack.c.l.b16 %v386
    %v1487 = vunpack.c.l.b16 %v387
    %v1488 = vunpack.c.l.b16 %v388
    %v1489 = vunpack.c.l.b16 %v389
    %v1490 = vunpack.c.l.b16 %v390
    %v1491 = vunpack.c.l.b16 %v391
    %v1492 = vunpack.c.l.b16 %v392
    %v1493 = vunpack.c.l.b16 %v393
    %v1494 = vunpack.c.l.b16 %v394
    %v1495 = vunpack.c.l.b16 %v395
    %v1496 = vunpack.c.l.b16 %v396
    %v1497 = vunpack.c.l.b16 %v397
    %v1498 = vunpack.c.l.b16 %v398
    %v1499 = vunpack.c.l.b16 %v399
    %v1500 = vunpack.c.l.b16 %v400
    %v1501 = vunpack.c.l.b16 %v401
    %v1502 = vunpack.c.l.b16 %v402
    %v1503 = vunpack.c.l.b16 %v403
    %v1504 = vunpack.c.l.b16 %v404
    %v1505 = vunpack.c.l.b16 %v405
    %v1506 = vunpack.c.l.b16 %v406
    %v1507 = vunpack.c.l.b16 %v407
    %v1508 = vunpack.c.l.b16 %v408
    %v1509 = vunpack.c.l.b16 %v409
    %v1510 = vunpack.c.l.b16 %v410
    %v1511 = vunpack.c.l.b16 %v411
    %v1512 = vunpack.c.l.b16 %v412
    %v1513 = vunpack.c.l.b16 %v413
    %v1514 = vunpack.c.l.b16 %v414
    %v1515 = vunpack.c.l.b16 %v415
    %v1516 = vunpack.c.l.b16 %v416
    %v1517 = vunpack.c.l.b16 %v417
    %v1518 = vunpack.c.l.b16 %v418
    %v1519 = vunpack.c.l.b16 %v419
    %v1520 = vunpack.c.l.b16 %v420
    %v1521 = vunpack.c.l.b16 %v421
    %v1522 = vunpack.c.l.b16 %v422
    %v1523 = vunpack.c.l.b16 %v423
    %v1524 = vunpack.c.l.b16 %v424
    %v1525 = vunpack.c.l.b16 %v425
    %v1526 = vunpack.c.l.b16 %v426
    %v1527 = vunpack.c.l.b16 %v427
    %v1528 = vunpack.c.l.b16 %v428
    %v1529 = vunpack.c.l.b16 %v429
    %v1530 = vunpack.c.l.b16 %v430
    %v1531 = vunpack.c.l.b16 %v431
    %v1532 = vunpack.c.l.b16 %v432
    %v1533 = vunpack.c.l.b16 %v433
    %v1534 = vunpack.c.l.b16 %v434
    %v1535 = vunpack.c.l.b16 %v435
    %v1536 = vunpack.c.l.b16 %v436
    %v1537 = vunpack.c.l.b16 %v437
    %v1538 = vunpack.c.l.b16 %v438
    %v1539 = vunpack.c.l.b16 %v439
    %v1540 = vunpack.c.l.b16 %v440
    %v1541 = vunpack.c.l.b16 %v441
    %v1542 = vunpack.c.l.b16 %v442
    %v1543 = vunpack.c.l.b16 %v443
    %v1544 = vunpack.c.l.b16 %v444
    %v1545 = vunpack.c.l.b16 %v445
    %v1546 = vunpack.c.l.b16 %v446
    %v1547 = vunpack.c.l.b16 %v447
    %v1548 = vunpack.c.l.b16 %v448
    %v1549 = vunpack.c.l.b16 %v449
    %v1550 = vunpack.c.l.b16 %v450
    %v1551 = vunpack.c.l.b16 %v451
    %v1552 = vunpack.c.l.b16 %v452
    %v1553 = vunpack.c.l.b16 %v453
    %v1554 = vunpack.c.l.b16 %v454
    %v1555 = vunpack.c.l.b16 %v455
    %v1556 = vunpack.c.l.b16 %v456
    %v1557 = vunpack.c.l.b16 %v457
    %v1558 = vunpack.c.l.b16 %v458
    %v1559 = vunpack.c.l.b16 %v459
    %v1560 = vunpack.c.l.b16 %v460
    %v1561 = vunpack.c.l.b16 %v461
    %v1562 = vunpack.c.l.b16 %v462
    %v1563 = vunpack.c.l.b16 %v463
    %v1564 = vunpack.c.l.b16 %v464
    %v1565 = vunpack.c.l.b16 %v465
    %v1566 = vunpack.c.l.b16 %v466
    %v1567 = vunpack.c.l.b16 %v467
    %v1568 = vunpack.c.l.b16 %v468
    %v1569 = vunpack.c.l.b16 %v469
    %v1570 = vunpack.c.l.b16 %v470
    %v1571 = vunpack.c.l.b16 %v471
    %v1572 = vunpack.c.l.b16 %v472
    %v1573 = vunpack.c.l.b16 %v473
    %v1574 = vunpack.c.l.b16 %v474
    %v1575 = vunpack.c.l.b16 %v475
    %v1576 = vunpack.c.l.b16 %v476
    %v1577 = vunpack.c.l.b16 %v477
    %v1578 = vunpack.c.l.b16 %v478
    %v1579 = vunpack.c.l.b16 %v479
    %v1580 = vunpack.c.l.b16 %v480
    %v1581 = vunpack.c.l.b16 %v481
    %v1582 = vunpack.c.l.b16 %v482
    %v1583 = vunpack.c.l.b16 %v483
    %v1584 = vunpack.c.l.b16 %v484
    %v1585 = vunpack.c.l.b16 %v485
    %v1586 = vunpack.c.l.b16 %v486
    %v1587 = vunpack.c.l.b16 %v487
    %v1588 = vunpack.c.l.b16 %v488
    %v1589 = vunpack.c.l.b16 %v489
    %v1590 = vunpack.c.l.b16 %v490
    %v1591 = vunpack.c.l.b16 %v491
    %v1592 = vunpack.c.l.b16 %v492
    %v1593 = vunpack.c.l.b16 %v493
    %v1594 = vunpack.c.l.b16 %v494
    %v1595 = vunpack.c.l.b16 %v495
    %v1596 = vunpack.c.l.b16 %v496
    %v1597 = vunpack.c.l.b16 %v497
    %v1598 = vunpack.c.l.b16 %v498
    %v1599 = vunpack.c.l.b16 %v499
    %v1600 = vunpack.c.l.b16 %v500
    %v1601 = vunpack.c.l.b16 %v501
    %v1602 = vunpack.c.l.b16 %v502
    %v1603 = vunpack.c.l.b16 %v503
    %v1604 = vunpack.c.l.b16 %v504
    %v1605 = vunpack.c.l.b16 %v505
    %v1606 = vunpack.c.l.b16 %v506
    %v1607 = vunpack.c.l.b16 %v507
    %v1608 = vunpack.c.l.b16 %v508
    %v1609 = vunpack.c.l.b16 %v509
    %v1610 = vunpack.c.l.b16 %v510
    %v1611 = vunpack.c.l.b16 %v511
    %v1612 = vunpack.c.l.b16 %v512
    %v1613 = vunpack.c.l.b16 %v513
    %v1614 = vunpack.c.l.b16 %v514
    %v1615 = vunpack.c.l.b16 %v515
    %v1616 = vunpack.c.l.b16 %v516
    %v1617 = vunpack.c.l.b16 %v517
    %v1618 = vunpack.c.l.b16 %v518
    %v1619 = vunpack.c.l.b16 %v519
    %v1620 = vunpack.c.l.b16 %v520
    %v1621 = vunpack.c.l.b16 %v521
    %v1622 = vunpack.c.l.b16 %v522
    %v1623 = vunpack.c.l.b16 %v523
    %v1624 = vunpack.c.l.b16 %v524
    %v1625 = vunpack.c.l.b16 %v525
    %v1626 = vunpack.c.l.b16 %v526
    %v1627 = vunpack.c.l.b16 %v527
    %v1628 = vunpack.c.l.b16 %v528
    %v1629 = vunpack.c.l.b16 %v529
    %v1630 = vunpack.c.l.b16 %v530
    %v1631 = vunpack.c.l.b16 %v531
    %v1632 = vunpack.c.l.b16 %v532
    %v1633 = vunpack.c.l.b16 %v533
    %v1634 = vunpack.c.l.b16 %v534
    %v1635 = vunpack.c.l.b16 %v535
    %v1636 = vunpack.c.l.b16 %v536
    %v1637 = vpack.c.b16 %v1126, %v1125
    %v1638 = vpack.c.b16 %v1128, %v1127
    %v1639 = vpack.c.b16 %v1130, %v1129
    %v1640 = vpack.c.b16 %v1132, %v1131
    %v1641 = vpack.c.b16 %v1134, %v1133
    %v1642 = vpack.c.b16 %v1136, %v1135
    %v1643 = vpack.c.b16 %v1138, %v1137
    %v1644 = vpack.c.b16 %v1140, %v1139
    %v1645 = vpack.c.b16 %v1142, %v1141
    %v1646 = vpack.c.b16 %v1144, %v1143
    %v1647 = vpack.c.b16 %v1146, %v1145
    %v1648 = vpack.c.b16 %v1148, %v1147
    %v1649 = vpack.c.b16 %v1150, %v1149
    %v1650 = vpack.c.b16 %v1152, %v1151
    %v1651 = vpack.c.b16 %v1154, %v1153
    %v1652 = vpack.c.b16 %v1156, %v1155
    %v1653 = vpack.c.b16 %v1158, %v1157
    %v1654 = vpack.c.b16 %v1160, %v1159
    %v1655 = vpack.c.b16 %v1162, %v1161
    %v1656 = vpack.c.b16 %v1164, %v1163
    %v1657 = vpack.c.b16 %v1166, %v1165
    %v1658 = vpack.c.b16 %v1168, %v1167
    %v1659 = vpack.c.b16 %v1170, %v1169
    %v1660 = vpack.c.b16 %v1172, %v1171
    %v1661 = vpack.c.b16 %v1174, %v1173
    %v1662 = vpack.c.b16 %v1176, %v1175
    %v1663 = vpack.c.b16 %v1178, %v1177
    %v1664 = vpack.c.b16 %v1180, %v1179
    %v1665 = vpack.c.b16 %v1182, %v1181
    %v1666 = vpack.c.b16 %v1184, %v1183
    %v1667 = vpack.c.b16 %v1186, %v1185
    %v1668 = vpack.c.b16 %v1188, %v1187
    %v1669 = vpack.c.b16 %v1190, %v1189
    %v1670 = vpack.c.b16 %v1192, %v1191
    %v1671 = vpack.c.b16 %v1194, %v1193
    %v1672 = vpack.c.b16 %v1196, %v1195
    %v1673 = vpack.c.b16 %v1198, %v1197
    %v1674 = vpack.c.b16 %v1200, %v1199
    %v1675 = vpack.c.b16 %v1202, %v1201
    %v1676 = vpack.c.b16 %v1204, %v1203
    %v1677 = vpack.c.b16 %v1206, %v1205
    %v1678 = vpack.c.b16 %v1208, %v1207
    %v1679 = vpack.c.b16 %v1210, %v1209
    %v1680 = vpack.c.b16 %v1212, %v1211
    %v1681 = vpack.c.b16 %v1214, %v1213
    %v1682 = vpack.c.b16 %v1216, %v1215
    %v1683 = vpack.c.b16 %v1218, %v1217
    %v1684 = vpack.c.b16 %v1220, %v1219
    %v1685 = vpack.c.b16 %v1222, %v1221
    %v1686 = vpack.c.b16 %v1224, %v1223
    %v1687 = vpack.c.b16 %v1226, %v1225
    %v1688 = vpack.c.b16 %v1228, %v1227
    %v1689 = vpack.c.b16 %v1230, %v1229
    %v1690 = vpack.c.b16 %v1232, %v1231
    %v1691 = vpack.c.b16 %v1234, %v1233
    %v1692 = vpack.c.b16 %v1236, %v1235
    %v1693 = vpack.c.b16 %v1238, %v1237
    %v1694 = vpack.c.b16 %v1240, %v1239
    %v1695 = vpack.c.b16 %v1242, %v1241
    %v1696 = vpack.c.b16 %v1244, %v1243
    %v1697 = vpack.c.b16 %v1246, %v1245
    %v1698 = vpack.c.b16 %v1248, %v1247
    %v1699 = vpack.c.b16 %v1250, %v1249
    %v1700 = vpack.c.b16 %v1252, %v1251
    %v1701 = vpack.c.b16 %v1254, %v1253
    %v1702 = vpack.c.b16 %v1256, %v1255
    %v1703 = vpack.c.b16 %v1258, %v1257
    %v1704 = vpack.c.b16 %v1260, %v1259
    %v1705 = vpack.c.b16 %v1262, %v1261
    %v1706 = vpack.c.b16 %v1264, %v1263
    %v1707 = vpack.c.b16 %v1266, %v1265
    %v1708 = vpack.c.b16 %v1268, %v1267
    %v1709 = vpack.c.b16 %v1270, %v1269
    %v1710 = vpack.c.b16 %v1272, %v1271
    %v1711 = vpack.c.b16 %v1274, %v1273
    %v1712 = vpack.c.b16 %v1276, %v1275
    %v1713 = vpack.c.b16 %v1278, %v1277
    %v1714 = vpack.c.b16 %v1280, %v1279
    %v1715 = vpack.c.b16 %v1282, %v1281
    %v1716 = vpack.c.b16 %v1284, %v1283
    %v1717 = vpack.c.b16 %v1286, %v1285
    %v1718 = vpack.c.b16 %v1288, %v1287
    %v1719 = vpack.c.b16 %v1290, %v1289
    %v1720 = vpack.c.b16 %v1292, %v1291
    %v1721 = vpack.c.b16 %v1294, %v1293
    %v1722 = vpack.c.b16 %v1296, %v1295
    %v1723 = vpack.c.b16 %v1298, %v1297
    %v1724 = vpack.c.b16 %v1300, %v1299
    %v1725 = vpack.c.b16 %v1302, %v1301
    %v1726 = vpack.c.b16 %v1304, %v1303
    %v1727 = vpack.c.b16 %v1306, %v1305
    %v1728 = vpack.c.b16 %v1308, %v1307
    %v1729 = vpack.c.b16 %v1310, %v1309
    %v1730 = vpack.c.b16 %v1312, %v1311
    %v1731 = vpack.c.b16 %v1314, %v1313
    %v1732 = vpack.c.b16 %v1316, %v1315
    %v1733 = vpack.c.b16 %v1318, %v1317
    %v1734 = vpack.c.b16 %v1320, %v1319
    %v1735 = vpack.c.b16 %v1322, %v1321
    %v1736 = vpack.c.b16 %v1324, %v1323
    %v1737 = vpack.c.b16 %v1326, %v1325
    %v1738 = vpack.c.b16 %v1328, %v1327
    %v1739 = vpack.c.b16 %v1330, %v1329
    %v1740 = vpack.c.b16 %v1332, %v1331
    %v1741 = vpack.c.b16 %v1334, %v1333
    %v1742 = vpack.c.b16 %v1336, %v1335
    %v1743 = vpack.c.b16 %v1338, %v1337
    %v1744 = vpack.c.b16 %v1340, %v1339
    %v1745 = vpack.c.b16 %v1342, %v1341
    %v1746 = vpack.c.b16 %v1344, %v1343
    %v1747 = vpack.c.b16 %v1346, %v1345
    %v1748 = vpack.c.b16 %v1348, %v1347
    %v1749 = vpack.c.b16 %v1350, %v1349
    %v1750 = vpack.c.b16 %v1352, %v1351
    %v1751 = vpack.c.b16 %v1354, %v1353
    %v1752 = vpack.c.b16 %v1356, %v1355
    %v1753 = vpack.c.b16 %v1358, %v1357
    %v1754 = vpack.c.b16 %v1360, %v1359
    %v1755 = vpack.c.b16 %v1362, %v1361
    %v1756 = vpack.c.b16 %v1364, %v1363
    %v1757 = vpack.c.b16 %v1366, %v1365
    %v1758 = vpack.c.b16 %v1368, %v1367
    %v1759 = vpack.c.b16 %v1370, %v1369
    %v1760 = vpack.c.b16 %v1372, %v1371
    %v1761 = vpack.c.b16 %v1374, %v1373
    %v1762 = vpack.c.b16 %v1376, %v1375
    %v1763 = vpack.c.b16 %v1378, %v1377
    %v1764 = vpack.c.b16 %v1380, %v1379
    %v1765 = vpack.c.b16 %v1382, %v1381
    %v1766 = vpack.c.b16 %v1384, %v1383
    %v1767 = vpack.c.b16 %v1386, %v1385
    %v1768 = vpack.c.b16 %v1388, %v1387
    %v1769 = vpack.c.b16 %v1390, %v1389
    %v1770 = vpack.c.b16 %v1392, %v1391
    %v1771 = vpack.c.b16 %v1394, %v1393
    %v1772 = vpack.c.b16 %v1396, %v1395
    %v1773 = vpack.c.b16 %v1398, %v1397
    %v1774 = vpack.c.b16 %v1400, %v1399
    %v1775 = vpack.c.b16 %v1402, %v1401
    %v1776 = vpack.c.b16 %v1404, %v1403
    %v1777 = vpack.c.b16 %v1406, %v1405
    %v1778 = vpack.c.b16 %v1408, %v1407
    %v1779 = vpack.c.b16 %v1410, %v1409
    %v1780 = vpack.c.b16 %v1412, %v1411
    %v1781 = vpack.c.b16 %v1414, %v1413
    %v1782 = vpack.c.b16 %v1416, %v1415
    %v1783 = vpack.c.b16 %v1418, %v1417
    %v1784 = vpack.c.b16 %v1420, %v1419
    %v1785 = vpack.c.b16 %v1422, %v1421
    %v1786 = vpack.c.b16 %v1424, %v1423
    %v1787 = vpack.c.b16 %v1426, %v1425
    %v1788 = vpack.c.b16 %v1428, %v1427
    %v1789 = vpack.c.b16 %v1430, %v1429
    %v1790 = vpack.c.b16 %v1432, %v1431
    %v1791 = vpack.c.b16 %v1434, %v1433
    %v1792 = vpack.c.b16 %v1436, %v1435
    %v1793 = vpack.c.b16 %v1438, %v1437
    %v1794 = vpack.c.b16 %v1440, %v1439
    %v1795 = vpack.c.b16 %v1442, %v1441
    %v1796 = vpack.c.b16 %v1444, %v1443
    %v1797 = vpack.c.b16 %v1446, %v1445
    %v1798 = vpack.c.b16 %v1448, %v1447
    %v1799 = vpack.c.b16 %v1450, %v1449
    %v1800 = vpack.c.b16 %v1452, %v1451
    %v1801 = vpack.c.b16 %v1454, %v1453
    %v1802 = vpack.c.b16 %v1456, %v1455
    %v1803 = vpack.c.b16 %v1458, %v1457
    %v1804 = vpack.c.b16 %v1460, %v1459
    %v1805 = vpack.c.b16 %v1462, %v1461
    %v1806 = vpack.c.b16 %v1464, %v1463
    %v1807 = vpack.c.b16 %v1466, %v1465
    %v1808 = vpack.c.b16 %v1468, %v1467
    %v1809 = vpack.c.b16 %v1470, %v1469
    %v1810 = vpack.c.b16 %v1472, %v1471
    %v1811 = vpack.c.b16 %v1474, %v1473
    %v1812 = vpack.c.b16 %v1476, %v1475
    %v1813 = vpack.c.b16 %v1478, %v1477
    %v1814 = vpack.c.b16 %v1480, %v1479
    %v1815 = vpack.c.b16 %v1482, %v1481
    %v1816 = vpack.c.b16 %v1484, %v1483
    %v1817 = vpack.c.b16 %v1486, %v1485
    %v1818 = vpack.c.b16 %v1488, %v1487
    %v1819 = vpack.c.b16 %v1490, %v1489
    %v1820 = vpack.c.b16 %v1492, %v1491
    %v1821 = vpack.c.b16 %v1494, %v1493
    %v1822 = vpack.c.b16 %v1496, %v1495
    %v1823 = vpack.c.b16 %v1498, %v1497
    %v1824 = vpack.c.b16 %v1500, %v1499
    %v1825 = vpack.c.b16 %v1502, %v1501
    %v1826 = vpack.c.b16 %v1504, %v1503
    %v1827 = vpack.c.b16 %v1506, %v1505
    %v1828 = vpack.c.b16 %v1508, %v1507
    %v1829 = vpack.c.b16 %v1510, %v1509
    %v1830 = vpack.c.b16 %v1512, %v1511
    %v1831 = vpack.c.b16 %v1514, %v1513
    %v1832 = vpack.c.b16 %v1516, %v1515
    %v1833 = vpack.c.b16 %v1518, %v1517
    %v1834 = vpack.c.b16 %v1520, %v1519
    %v1835 = vpack.c.b16 %v1522, %v1521
    %v1836 = vpack.c.b16 %v1524, %v1523
    %v1837 = vpack.c.b16 %v1526, %v1525
    %v1838 = vpack.c.b16 %v1528, %v1527
    %v1839 = vpack.c.b16 %v1530, %v1529
    %v1840 = vpack.c.b16 %v1532, %v1531
    %v1841 = vpack.c.b16 %v1534, %v1533
    %v1842 = vpack.c.b16 %v1536, %v1535
    %v1843 = vpack.c.b16 %v1538, %v1537
    %v1844 = vpack.c.b16 %v1540, %v1539
    %v1845 = vpack.c.b16 %v1542, %v1541
    %v1846 = vpack.c.b16 %v1544, %v1543
    %v1847 = vpack.c.b16 %v1546, %v1545
    %v1848 = vpack.c.b16 %v1548, %v1547
    %v1849 = vpack.c.b16 %v1550, %v1549
    %v1850 = vpack.c.b16 %v1552, %v1551
    %v1851 = vpack.c.b16 %v1554, %v1553
    %v1852 = vpack.c.b16 %v1556, %v1555
    %v1853 = vpack.c.b16 %v1558, %v1557
    %v1854 = vpack.c.b16 %v1560, %v1559
    %v1855 = vpack.c.b16 %v1562, %v1561
    %v1856 = vpack.c.b16 %v1564, %v1563
    %v1857 = vpack.c.b16 %v1566, %v1565
    %v1858 = vpack.c.b16 %v1568, %v1567
    %v1859 = vpack.c.b16 %v1570, %v1569
    %v1860 = vpack.c.b16 %v1572, %v1571
    %v1861 = vpack.c.b16 %v1574, %v1573
    %v1862 = vpack.c.b16 %v1576, %v1575
    %v1863 = vpack.c.b16 %v1578, %v1577
    %v1864 = vpack.c.b16 %v1580, %v1579
    %v1865 = vpack.c.b16 %v1582, %v1581
    %v1866 = vpack.c.b16 %v1584, %v1583
    %v1867 = vpack.c.b16 %v1586, %v1585
    %v1868 = vpack.c.b16 %v1588, %v1587
    %v1869 = vpack.c.b16 %v1590, %v1589
    %v1870 = vpack.c.b16 %v1592, %v1591
    %v1871 = vpack.c.b16 %v1594, %v1593
    %v1872 = vpack.c.b16 %v1596, %v1595
    %v1873 = vpack.c.b16 %v1598, %v1597
    %v1874 = vpack.c.b16 %v1600, %v1599
    %v1875 = vpack.c.b16 %v1602, %v1601
    %v1876 = vpack.c.b16 %v1604, %v1603
    %v1877 = vpack.c.b16 %v1606, %v1605
    %v1878 = vpack.c.b16 %v1608, %v1607
    %v1879 = vpack.c.b16 %v1610, %v1609
    %v1880 = vpack.c.b16 %v1612, %v1611
    %v1881 = vpack.c.b16 %v1614, %v1613
    %v1882 = vpack.c.b16 %v1616, %v1615
    %v1883 = vpack.c.b16 %v1618, %v1617
    %v1884 = vpack.c.b16 %v1620, %v1619
    %v1885 = vpack.c.b16 %v1622, %v1621
    %v1886 = vpack.c.b16 %v1624, %v1623
    %v1887 = vpack.c.b16 %v1626, %v1625
    %v1888 = vpack.c.b16 %v1628, %v1627
    %v1889 = vpack.c.b16 %v1630, %v1629
    %v1890 = vpack.c.b16 %v1632, %v1631
    %v1891 = vpack.c.b16 %v1634, %v1633
    %v1892 = vpack.c.b16 %v1636, %v1635
    %2149 = vmatpush.bf16.msra.mxu0 %v1644
    %2150 = vmatpush.bf16.msra.mxu0 %v1643
    %2151 = vmatpush.bf16.msra.mxu0 %v1642
    %2152 = vmatpush.bf16.msra.mxu0 %v1641
    %2153 = vmatpush.bf16.msra.mxu0 %v1640
    %2154 = vmatpush.bf16.msra.mxu0 %v1639
    %2155 = vmatpush.bf16.msra.mxu0 %v1638
    %2156 = vmatpush.bf16.msra.mxu0 %v1637
    %2157 = vmatmul.bf16.gmra.mxu0 %v543
    %v2158 = vpop.f32.mrf.mxu0
    %v2159 = vadd.f32 %v539, %v2158
    %v2160 = vpop.f32.mrf.mxu0
    %2161 = vdwg.mxu0
    %2162 = vmatpush.bf16.msra.mxu0 %v1652
    %2163 = vmatpush.bf16.msra.mxu0 %v1651
    %2164 = vmatpush.bf16.msra.mxu0 %v1650
    %2165 = vmatpush.bf16.msra.mxu0 %v1649
    %2166 = vmatpush.bf16.msra.mxu0 %v1648
    %2167 = vmatpush.bf16.msra.mxu0 %v1647
    %2168 = vmatpush.bf16.msra.mxu0 %v1646
    %2169 = vmatpush.bf16.msra.mxu0 %v1645
    %2170 = vmatmul.bf16.gmra.mxu0 %v544
    %v2171 = vpop.f32.mrf.mxu0
    %v2172 = vadd.f32 %v2159, %v2171
    %v2173 = vpop.f32.mrf.mxu0
    %2174 = vdwg.mxu0
    %2175 = vmatpush.bf16.msra.mxu0 %v1660
    %2176 = vmatpush.bf16.msra.mxu0 %v1659
    %2177 = vmatpush.bf16.msra.mxu0 %v1658
    %2178 = vmatpush.bf16.msra.mxu0 %v1657
    %2179 = vmatpush.bf16.msra.mxu0 %v1656
    %2180 = vmatpush.bf16.msra.mxu0 %v1655
    %2181 = vmatpush.bf16.msra.mxu0 %v1654
    %2182 = vmatpush.bf16.msra.mxu0 %v1653
    %2183 = vmatmul.bf16.gmra.mxu0 %v545
    %v2184 = vpop.f32.mrf.mxu0
    %v2185 = vadd.f32 %v2172, %v2184
    %v2186 = vpop.f32.mrf.mxu0
    %2187 = vdwg.mxu0
    %2188 = vmatpush.bf16.msra.mxu0 %v1668
    %2189 = vmatpush.bf16.msra.mxu0 %v1667
    %2190 = vmatpush.bf16.msra.mxu0 %v1666
    %2191 = vmatpush.bf16.msra.mxu0 %v1665
    %2192 = vmatpush.bf16.msra.mxu0 %v1664
    %2193 = vmatpush.bf16.msra.mxu0 %v1663
    %2194 = vmatpush.bf16.msra.mxu0 %v1662
    %2195 = vmatpush.bf16.msra.mxu0 %v1661
    %2196 = vmatmul.bf16.gmra.mxu0 %v546
    %v2197 = vpop.f32.mrf.mxu0
    %v2198 = vadd.f32 %v2185, %v2197
    %v2199 = vpop.f32.mrf.mxu0
    %2200 = vdwg.mxu0
    %2201 = vmatpush.bf16.msra.mxu0 %v1676
    %2202 = vmatpush.bf16.msra.mxu0 %v1675
    %2203 = vmatpush.bf16.msra.mxu0 %v1674
    %2204 = vmatpush.bf16.msra.mxu0 %v1673
    %2205 = vmatpush.bf16.msra.mxu0 %v1672
    %2206 = vmatpush.bf16.msra.mxu0 %v1671
    %2207 = vmatpush.bf16.msra.mxu0 %v1670
    %2208 = vmatpush.bf16.msra.mxu0 %v1669
    %2209 = vmatmul.bf16.gmra.mxu0 %v547
    %v2210 = vpop.f32.mrf.mxu0
    %v2211 = vadd.f32 %v2198, %v2210
    %v2212 = vpop.f32.mrf.mxu0
    %2213 = vdwg.mxu0
    %2214 = vmatpush.bf16.msra.mxu0 %v1684
    %2215 = vmatpush.bf16.msra.mxu0 %v1683
    %2216 = vmatpush.bf16.msra.mxu0 %v1682
    %2217 = vmatpush.bf16.msra.mxu0 %v1681
    %2218 = vmatpush.bf16.msra.mxu0 %v1680
    %2219 = vmatpush.bf16.msra.mxu0 %v1679
    %2220 = vmatpush.bf16.msra.mxu0 %v1678
    %2221 = vmatpush.bf16.msra.mxu0 %v1677
    %2222 = vmatmul.bf16.gmra.mxu0 %v548
    %v2223 = vpop.f32.mrf.mxu0
    %v2224 = vadd.f32 %v2211, %v2223
    %v2225 = vpop.f32.mrf.mxu0
    %2226 = vdwg.mxu0
    %2227 = vmatpush.bf16.msra.mxu0 %v1692
    %2228 = vmatpush.bf16.msra.mxu0 %v1691
    %2229 = vmatpush.bf16.msra.mxu0 %v1690
    %2230 = vmatpush.bf16.msra.mxu0 %v1689
    %2231 = vmatpush.bf16.msra.mxu0 %v1688
    %2232 = vmatpush.bf16.msra.mxu0 %v1687
    %2233 = vmatpush.bf16.msra.mxu0 %v1686
    %2234 = vmatpush.bf16.msra.mxu0 %v1685
    %2235 = vmatmul.bf16.gmra.mxu0 %v549
    %v2236 = vpop.f32.mrf.mxu0
    %v2237 = vadd.f32 %v2224, %v2236
    %v2238 = vpop.f32.mrf.mxu0
    %2239 = vdwg.mxu0
    %2240 = vmatpush.bf16.msra.mxu0 %v1700
    %2241 = vmatpush.bf16.msra.mxu0 %v1699
    %2242 = vmatpush.bf16.msra.mxu0 %v1698
    %2243 = vmatpush.bf16.msra.mxu0 %v1697
    %2244 = vmatpush.bf16.msra.mxu0 %v1696
    %2245 = vmatpush.bf16.msra.mxu0 %v1695
    %2246 = vmatpush.bf16.msra.mxu0 %v1694
    %2247 = vmatpush.bf16.msra.mxu0 %v1693
    %2248 = vmatmul.bf16.gmra.mxu0 %v550
    %v2249 = vpop.f32.mrf.mxu0
    %v2250 = vadd.f32 %v2237, %v2249
    %v2251 = vpop.f32.mrf.mxu0
    %2252 = vdwg.mxu0
    %2253 = vmatpush.bf16.msra.mxu0 %v1708
    %2254 = vmatpush.bf16.msra.mxu0 %v1707
    %2255 = vmatpush.bf16.msra.mxu0 %v1706
    %2256 = vmatpush.bf16.msra.mxu0 %v1705
    %2257 = vmatpush.bf16.msra.mxu0 %v1704
    %2258 = vmatpush.bf16.msra.mxu0 %v1703
    %2259 = vmatpush.bf16.msra.mxu0 %v1702
    %2260 = vmatpush.bf16.msra.mxu0 %v1701
    %2261 = vmatmul.bf16.gmra.mxu0 %v553
    %v2262 = vpop.f32.mrf.mxu0
    %v2263 = vadd.f32 %v2250, %v2262
    %v2264 = vpop.f32.mrf.mxu0
    %2265 = vdwg.mxu0
    %2266 = vmatpush.bf16.msra.mxu0 %v1716
    %2267 = vmatpush.bf16.msra.mxu0 %v1715
    %2268 = vmatpush.bf16.msra.mxu0 %v1714
    %2269 = vmatpush.bf16.msra.mxu0 %v1713
    %2270 = vmatpush.bf16.msra.mxu0 %v1712
    %2271 = vmatpush.bf16.msra.mxu0 %v1711
    %2272 = vmatpush.bf16.msra.mxu0 %v1710
    %2273 = vmatpush.bf16.msra.mxu0 %v1709
    %2274 = vmatmul.bf16.gmra.mxu0 %v554
    %v2275 = vpop.f32.mrf.mxu0
    %v2276 = vadd.f32 %v2263, %v2275
    %v2277 = vpop.f32.mrf.mxu0
    %2278 = vdwg.mxu0
    %2279 = vmatpush.bf16.msra.mxu0 %v1724
    %2280 = vmatpush.bf16.msra.mxu0 %v1723
    %2281 = vmatpush.bf16.msra.mxu0 %v1722
    %2282 = vmatpush.bf16.msra.mxu0 %v1721
    %2283 = vmatpush.bf16.msra.mxu0 %v1720
    %2284 = vmatpush.bf16.msra.mxu0 %v1719
    %2285 = vmatpush.bf16.msra.mxu0 %v1718
    %2286 = vmatpush.bf16.msra.mxu0 %v1717
    %2287 = vmatmul.bf16.gmra.mxu0 %v555
    %v2288 = vpop.f32.mrf.mxu0
    %v2289 = vadd.f32 %v2276, %v2288
    %v2290 = vpop.f32.mrf.mxu0
    %2291 = vdwg.mxu0
    %2292 = vmatpush.bf16.msra.mxu0 %v1732
    %2293 = vmatpush.bf16.msra.mxu0 %v1731
    %2294 = vmatpush.bf16.msra.mxu0 %v1730
    %2295 = vmatpush.bf16.msra.mxu0 %v1729
    %2296 = vmatpush.bf16.msra.mxu0 %v1728
    %2297 = vmatpush.bf16.msra.mxu0 %v1727
    %2298 = vmatpush.bf16.msra.mxu0 %v1726
    %2299 = vmatpush.bf16.msra.mxu0 %v1725
    %2300 = vmatmul.bf16.gmra.mxu0 %v556
    %v2301 = vpop.f32.mrf.mxu0
    %v2302 = vadd.f32 %v2289, %v2301
    %v2303 = vpop.f32.mrf.mxu0
    %2304 = vdwg.mxu0
    %2305 = vmatpush.bf16.msra.mxu0 %v1740
    %2306 = vmatpush.bf16.msra.mxu0 %v1739
    %2307 = vmatpush.bf16.msra.mxu0 %v1738
    %2308 = vmatpush.bf16.msra.mxu0 %v1737
    %2309 = vmatpush.bf16.msra.mxu0 %v1736
    %2310 = vmatpush.bf16.msra.mxu0 %v1735
    %2311 = vmatpush.bf16.msra.mxu0 %v1734
    %2312 = vmatpush.bf16.msra.mxu0 %v1733
    %2313 = vmatmul.bf16.gmra.mxu0 %v557
    %v2314 = vpop.f32.mrf.mxu0
    %v2315 = vadd.f32 %v2302, %v2314
    %v2316 = vpop.f32.mrf.mxu0
    %2317 = vdwg.mxu0
    %2318 = vmatpush.bf16.msra.mxu0 %v1748
    %2319 = vmatpush.bf16.msra.mxu0 %v1747
    %2320 = vmatpush.bf16.msra.mxu0 %v1746
    %2321 = vmatpush.bf16.msra.mxu0 %v1745
    %2322 = vmatpush.bf16.msra.mxu0 %v1744
    %2323 = vmatpush.bf16.msra.mxu0 %v1743
    %2324 = vmatpush.bf16.msra.mxu0 %v1742
    %2325 = vmatpush.bf16.msra.mxu0 %v1741
    %2326 = vmatmul.bf16.gmra.mxu0 %v558
    %v2327 = vpop.f32.mrf.mxu0
    %v2328 = vadd.f32 %v2315, %v2327
    %v2329 = vpop.f32.mrf.mxu0
    %2330 = vdwg.mxu0
    %2331 = vmatpush.bf16.msra.mxu0 %v1756
    %2332 = vmatpush.bf16.msra.mxu0 %v1755
    %2333 = vmatpush.bf16.msra.mxu0 %v1754
    %2334 = vmatpush.bf16.msra.mxu0 %v1753
    %2335 = vmatpush.bf16.msra.mxu0 %v1752
    %2336 = vmatpush.bf16.msra.mxu0 %v1751
    %2337 = vmatpush.bf16.msra.mxu0 %v1750
    %2338 = vmatpush.bf16.msra.mxu0 %v1749
    %2339 = vmatmul.bf16.gmra.mxu0 %v559
    %v2340 = vpop.f32.mrf.mxu0
    %v2341 = vadd.f32 %v2328, %v2340
    %v2342 = vpop.f32.mrf.mxu0
    %2343 = vdwg.mxu0
    %2344 = vmatpush.bf16.msra.mxu0 %v1764
    %2345 = vmatpush.bf16.msra.mxu0 %v1763
    %2346 = vmatpush.bf16.msra.mxu0 %v1762
    %2347 = vmatpush.bf16.msra.mxu0 %v1761
    %2348 = vmatpush.bf16.msra.mxu0 %v1760
    %2349 = vmatpush.bf16.msra.mxu0 %v1759
    %2350 = vmatpush.bf16.msra.mxu0 %v1758
    %2351 = vmatpush.bf16.msra.mxu0 %v1757
    %2352 = vmatmul.bf16.gmra.mxu0 %v560
    %v2353 = vpop.f32.mrf.mxu0
    %v2354 = vadd.f32 %v2341, %v2353
    %v2355 = vpop.f32.mrf.mxu0
    %2356 = vdwg.mxu0
    %2357 = vmatpush.bf16.msra.mxu0 %v1772
    %2358 = vmatpush.bf16.msra.mxu0 %v1771
    %2359 = vmatpush.bf16.msra.mxu0 %v1770
    %2360 = vmatpush.bf16.msra.mxu0 %v1769
    %2361 = vmatpush.bf16.msra.mxu0 %v1768
    %2362 = vmatpush.bf16.msra.mxu0 %v1767
    %2363 = vmatpush.bf16.msra.mxu0 %v1766
    %2364 = vmatpush.bf16.msra.mxu0 %v1765
    %2365 = vmatmul.bf16.gmra.mxu0 %v563
    %v2366 = vpop.f32.mrf.mxu0
    %v2367 = vadd.f32 %v2354, %v2366
    %v2368 = vpop.f32.mrf.mxu0
    %2369 = vdwg.mxu0
    %2370 = vmatpush.bf16.msra.mxu0 %v1780
    %2371 = vmatpush.bf16.msra.mxu0 %v1779
    %2372 = vmatpush.bf16.msra.mxu0 %v1778
    %2373 = vmatpush.bf16.msra.mxu0 %v1777
    %2374 = vmatpush.bf16.msra.mxu0 %v1776
    %2375 = vmatpush.bf16.msra.mxu0 %v1775
    %2376 = vmatpush.bf16.msra.mxu0 %v1774
    %2377 = vmatpush.bf16.msra.mxu0 %v1773
    %2378 = vmatmul.bf16.gmra.mxu0 %v564
    %v2379 = vpop.f32.mrf.mxu0
    %v2380 = vadd.f32 %v2367, %v2379
    %v2381 = vpop.f32.mrf.mxu0
    %2382 = vdwg.mxu0
    %2383 = vmatpush.bf16.msra.mxu0 %v1788
    %2384 = vmatpush.bf16.msra.mxu0 %v1787
    %2385 = vmatpush.bf16.msra.mxu0 %v1786
    %2386 = vmatpush.bf16.msra.mxu0 %v1785
    %2387 = vmatpush.bf16.msra.mxu0 %v1784
    %2388 = vmatpush.bf16.msra.mxu0 %v1783
    %2389 = vmatpush.bf16.msra.mxu0 %v1782
    %2390 = vmatpush.bf16.msra.mxu0 %v1781
    %2391 = vmatmul.bf16.gmra.mxu0 %v565
    %v2392 = vpop.f32.mrf.mxu0
    %v2393 = vadd.f32 %v2380, %v2392
    %v2394 = vpop.f32.mrf.mxu0
    %2395 = vdwg.mxu0
    %2396 = vmatpush.bf16.msra.mxu0 %v1796
    %2397 = vmatpush.bf16.msra.mxu0 %v1795
    %2398 = vmatpush.bf16.msra.mxu0 %v1794
    %2399 = vmatpush.bf16.msra.mxu0 %v1793
    %2400 = vmatpush.bf16.msra.mxu0 %v1792
    %2401 = vmatpush.bf16.msra.mxu0 %v1791
    %2402 = vmatpush.bf16.msra.mxu0 %v1790
    %2403 = vmatpush.bf16.msra.mxu0 %v1789
    %2404 = vmatmul.bf16.gmra.mxu0 %v566
    %v2405 = vpop.f32.mrf.mxu0
    %v2406 = vadd.f32 %v2393, %v2405
    %v2407 = vpop.f32.mrf.mxu0
    %2408 = vdwg.mxu0
    %2409 = vmatpush.bf16.msra.mxu0 %v1804
    %2410 = vmatpush.bf16.msra.mxu0 %v1803
    %2411 = vmatpush.bf16.msra.mxu0 %v1802
    %2412 = vmatpush.bf16.msra.mxu0 %v1801
    %2413 = vmatpush.bf16.msra.mxu0 %v1800
    %2414 = vmatpush.bf16.msra.mxu0 %v1799
    %2415 = vmatpush.bf16.msra.mxu0 %v1798
    %2416 = vmatpush.bf16.msra.mxu0 %v1797
    %2417 = vmatmul.bf16.gmra.mxu0 %v567
    %v2418 = vpop.f32.mrf.mxu0
    %v2419 = vadd.f32 %v2406, %v2418
    %v2420 = vpop.f32.mrf.mxu0
    %2421 = vdwg.mxu0
    %2422 = vmatpush.bf16.msra.mxu0 %v1812
    %2423 = vmatpush.bf16.msra.mxu0 %v1811
    %2424 = vmatpush.bf16.msra.mxu0 %v1810
    %2425 = vmatpush.bf16.msra.mxu0 %v1809
    %2426 = vmatpush.bf16.msra.mxu0 %v1808
    %2427 = vmatpush.bf16.msra.mxu0 %v1807
    %2428 = vmatpush.bf16.msra.mxu0 %v1806
    %2429 = vmatpush.bf16.msra.mxu0 %v1805
    %2430 = vmatmul.bf16.gmra.mxu0 %v568
    %v2431 = vpop.f32.mrf.mxu0
    %v2432 = vadd.f32 %v2419, %v2431
    %v2433 = vpop.f32.mrf.mxu0
    %2434 = vdwg.mxu0
    %2435 = vmatpush.bf16.msra.mxu0 %v1820
    %2436 = vmatpush.bf16.msra.mxu0 %v1819
    %2437 = vmatpush.bf16.msra.mxu0 %v1818
    %2438 = vmatpush.bf16.msra.mxu0 %v1817
    %2439 = vmatpush.bf16.msra.mxu0 %v1816
    %2440 = vmatpush.bf16.msra.mxu0 %v1815
    %2441 = vmatpush.bf16.msra.mxu0 %v1814
    %2442 = vmatpush.bf16.msra.mxu0 %v1813
    %2443 = vmatmul.bf16.gmra.mxu0 %v569
    %v2444 = vpop.f32.mrf.mxu0
    %v2445 = vadd.f32 %v2432, %v2444
    %v2446 = vpop.f32.mrf.mxu0
    %2447 = vdwg.mxu0
    %2448 = vmatpush.bf16.msra.mxu0 %v1828
    %2449 = vmatpush.bf16.msra.mxu0 %v1827
    %2450 = vmatpush.bf16.msra.mxu0 %v1826
    %2451 = vmatpush.bf16.msra.mxu0 %v1825
    %2452 = vmatpush.bf16.msra.mxu0 %v1824
    %2453 = vmatpush.bf16.msra.mxu0 %v1823
    %2454 = vmatpush.bf16.msra.mxu0 %v1822
    %2455 = vmatpush.bf16.msra.mxu0 %v1821
    %2456 = vmatmul.bf16.gmra.mxu0 %v570
    %v2457 = vpop.f32.mrf.mxu0
    %v2458 = vadd.f32 %v2445, %v2457
    %v2459 = vpop.f32.mrf.mxu0
    %2460 = vdwg.mxu0
    %2461 = vmatpush.bf16.msra.mxu0 %v1836
    %2462 = vmatpush.bf16.msra.mxu0 %v1835
    %2463 = vmatpush.bf16.msra.mxu0 %v1834
    %2464 = vmatpush.bf16.msra.mxu0 %v1833
    %2465 = vmatpush.bf16.msra.mxu0 %v1832
    %2466 = vmatpush.bf16.msra.mxu0 %v1831
    %2467 = vmatpush.bf16.msra.mxu0 %v1830
    %2468 = vmatpush.bf16.msra.mxu0 %v1829
    %2469 = vmatmul.bf16.gmra.mxu0 %v573
    %v2470 = vpop.f32.mrf.mxu0
    %v2471 = vadd.f32 %v2458, %v2470
    %v2472 = vpop.f32.mrf.mxu0
    %2473 = vdwg.mxu0
    %2474 = vmatpush.bf16.msra.mxu0 %v1844
    %2475 = vmatpush.bf16.msra.mxu0 %v1843
    %2476 = vmatpush.bf16.msra.mxu0 %v1842
    %2477 = vmatpush.bf16.msra.mxu0 %v1841
    %2478 = vmatpush.bf16.msra.mxu0 %v1840
    %2479 = vmatpush.bf16.msra.mxu0 %v1839
    %2480 = vmatpush.bf16.msra.mxu0 %v1838
    %2481 = vmatpush.bf16.msra.mxu0 %v1837
    %2482 = vmatmul.bf16.gmra.mxu0 %v574
    %v2483 = vpop.f32.mrf.mxu0
    %v2484 = vadd.f32 %v2471, %v2483
    %v2485 = vpop.f32.mrf.mxu0
    %2486 = vdwg.mxu0
    %2487 = vmatpush.bf16.msra.mxu0 %v1852
    %2488 = vmatpush.bf16.msra.mxu0 %v1851
    %2489 = vmatpush.bf16.msra.mxu0 %v1850
    %2490 = vmatpush.bf16.msra.mxu0 %v1849
    %2491 = vmatpush.bf16.msra.mxu0 %v1848
    %2492 = vmatpush.bf16.msra.mxu0 %v1847
    %2493 = vmatpush.bf16.msra.mxu0 %v1846
    %2494 = vmatpush.bf16.msra.mxu0 %v1845
    %2495 = vmatmul.bf16.gmra.mxu0 %v575
    %v2496 = vpop.f32.mrf.mxu0
    %v2497 = vadd.f32 %v2484, %v2496
    %v2498 = vpop.f32.mrf.mxu0
    %2499 = vdwg.mxu0
    %2500 = vmatpush.bf16.msra.mxu0 %v1860
    %2501 = vmatpush.bf16.msra.mxu0 %v1859
    %2502 = vmatpush.bf16.msra.mxu0 %v1858
    %2503 = vmatpush.bf16.msra.mxu0 %v1857
    %2504 = vmatpush.bf16.msra.mxu0 %v1856
    %2505 = vmatpush.bf16.msra.mxu0 %v1855
    %2506 = vmatpush.bf16.msra.mxu0 %v1854
    %2507 = vmatpush.bf16.msra.mxu0 %v1853
    %2508 = vmatmul.bf16.gmra.mxu0 %v576
    %v2509 = vpop.f32.mrf.mxu0
    %v2510 = vadd.f32 %v2497, %v2509
    %v2511 = vpop.f32.mrf.mxu0
    %2512 = vdwg.mxu0
    %2513 = vmatpush.bf16.msra.mxu0 %v1868
    %2514 = vmatpush.bf16.msra.mxu0 %v1867
    %2515 = vmatpush.bf16.msra.mxu0 %v1866
    %2516 = vmatpush.bf16.msra.mxu0 %v1865
    %2517 = vmatpush.bf16.msra.mxu0 %v1864
    %2518 = vmatpush.bf16.msra.mxu0 %v1863
    %2519 = vmatpush.bf16.msra.mxu0 %v1862
    %2520 = vmatpush.bf16.msra.mxu0 %v1861
    %2521 = vmatmul.bf16.gmra.mxu0 %v577
    %v2522 = vpop.f32.mrf.mxu0
    %v2523 = vadd.f32 %v2510, %v2522
    %v2524 = vpop.f32.mrf.mxu0
    %2525 = vdwg.mxu0
    %2526 = vmatpush.bf16.msra.mxu0 %v1876
    %2527 = vmatpush.bf16.msra.mxu0 %v1875
    %2528 = vmatpush.bf16.msra.mxu0 %v1874
    %2529 = vmatpush.bf16.msra.mxu0 %v1873
    %2530 = vmatpush.bf16.msra.mxu0 %v1872
    %2531 = vmatpush.bf16.msra.mxu0 %v1871
    %2532 = vmatpush.bf16.msra.mxu0 %v1870
    %2533 = vmatpush.bf16.msra.mxu0 %v1869
    %2534 = vmatmul.bf16.gmra.mxu0 %v578
    %v2535 = vpop.f32.mrf.mxu0
    %v2536 = vadd.f32 %v2523, %v2535
    %v2537 = vpop.f32.mrf.mxu0
    %2538 = vdwg.mxu0
    %2539 = vmatpush.bf16.msra.mxu0 %v1884
    %2540 = vmatpush.bf16.msra.mxu0 %v1883
    %2541 = vmatpush.bf16.msra.mxu0 %v1882
    %2542 = vmatpush.bf16.msra.mxu0 %v1881
    %2543 = vmatpush.bf16.msra.mxu0 %v1880
    %2544 = vmatpush.bf16.msra.mxu0 %v1879
    %2545 = vmatpush.bf16.msra.mxu0 %v1878
    %2546 = vmatpush.bf16.msra.mxu0 %v1877
    %2547 = vmatmul.bf16.gmra.mxu0 %v579
    %v2548 = vpop.f32.mrf.mxu0
    %v2549 = vadd.f32 %v2536, %v2548
    %v2550 = vpop.f32.mrf.mxu0
    %2551 = vdwg.mxu0
    %2552 = vmatpush.bf16.msra.mxu0 %v1892
    %2553 = vmatpush.bf16.msra.mxu0 %v1891
    %2554 = vmatpush.bf16.msra.mxu0 %v1890
    %2555 = vmatpush.bf16.msra.mxu0 %v1889
    %2556 = vmatpush.bf16.msra.mxu0 %v1888
    %2557 = vmatpush.bf16.msra.mxu0 %v1887
    %2558 = vmatpush.bf16.msra.mxu0 %v1886
    %2559 = vmatpush.bf16.msra.mxu0 %v1885
    %2560 = vmatmul.bf16.gmra.mxu0 %v580
    %v2561 = vpop.f32.mrf.mxu0
    %v2562 = vadd.f32 %v2549, %v2561
    %v2563 = vpop.f32.mrf.mxu0
    %2564 = vdwg.mxu0
    %v2565 = vmax.f32 %v2562, 0.0
    %v2566 = vpack.c.bf16 %v2565, %v2565
    %v2567 = vld [vmem:[%s3] sm:$0xf]
    %v2568 = vld [vmem:[%s3 + $0x4] sm:$0xf]
    %v2569 = vld [vmem:[%s3 + $0x8] sm:$0xf]
    %v2570 = vld [vmem:[%s3 + $0xc] sm:$0xf]
    %v2571 = vld [vmem:[%s3 + $0x10] sm:$0xf]
    %v2572 = vld [vmem:[%s3 + $0x14] sm:$0xf]
    %v2573 = vld [vmem:[%s3 + $0x18] sm:$0xf]
    %v2574 = vld [vmem:[%s3 + $0x1c] sm:$0xf]
    %v2575 = vld [vmem:[%s3 + $0x20] sm:$0xf]
    %v2576 = vld [vmem:[%s3 + $0x24] sm:$0xf]
    %v2577 = vld [vmem:[%s3 + $0x28] sm:$0xf]
    %v2578 = vld [vmem:[%s3 + $0x2c] sm:$0xf]
    %v2579 = vld [vmem:[%s3 + $0x30] sm:$0xf]
    %v2580 = vld [vmem:[%s3 + $0x34] sm:$0xf]
    %v2581 = vld [vmem:[%s3 + $0x38] sm:$0xf]
    %v2582 = vld [vmem:[%s3 + $0x3c] sm:$0xf]
    %v2583 = vld [vmem:[%s4] sm:$0x1]
    %v2585 = vperm.slane %v2583, 0
    %v2603 = vunpack.c.l.b16 %v2567
    %v2604 = vunpack.c.l.b16 %v2568
    %v2605 = vunpack.c.l.b16 %v2569
    %v2606 = vunpack.c.l.b16 %v2570
    %v2607 = vunpack.c.l.b16 %v2571
    %v2608 = vunpack.c.l.b16 %v2572
    %v2609 = vunpack.c.l.b16 %v2573
    %v2610 = vunpack.c.l.b16 %v2574
    %v2611 = vunpack.c.l.b16 %v2575
    %v2612 = vunpack.c.l.b16 %v2576
    %v2613 = vunpack.c.l.b16 %v2577
    %v2614 = vunpack.c.l.b16 %v2578
    %v2615 = vunpack.c.l.b16 %v2579
    %v2616 = vunpack.c.l.b16 %v2580
    %v2617 = vunpack.c.l.b16 %v2581
    %v2618 = vunpack.c.l.b16 %v2582
    %v2619 = vpack.c.b16 %v2604, %v2603
    %v2620 = vpack.c.b16 %v2606, %v2605
    %v2621 = vpack.c.b16 %v2608, %v2607
    %v2622 = vpack.c.b16 %v2610, %v2609
    %v2623 = vpack.c.b16 %v2612, %v2611
    %v2624 = vpack.c.b16 %v2614, %v2613
    %v2625 = vpack.c.b16 %v2616, %v2615
    %v2626 = vpack.c.b16 %v2618, %v2617
    %2635 = vmatpush.bf16.msra.mxu0 %v2626
    %2636 = vmatpush.bf16.msra.mxu0 %v2625
    %2637 = vmatpush.bf16.msra.mxu0 %v2624
    %2638 = vmatpush.bf16.msra.mxu0 %v2623
    %2639 = vmatpush.bf16.msra.mxu0 %v2622
    %2640 = vmatpush.bf16.msra.mxu0 %v2621
    %2641 = vmatpush.bf16.msra.mxu0 %v2620
    %2642 = vmatpush.bf16.msra.mxu0 %v2619
    %2643 = vmatmul.bf16.gmra.mxu0 %v2566
    %v2644 = vpop.f32.mrf.mxu0
    %v2645 = vadd.f32 %v2585, %v2644
    %v2646 = vpop.f32.mrf.mxu0
    %2647 = vdwg.mxu0
    %vm2648 = vcmask 1041408
    %v2649 = vsel %vm2648, %v2645, -inf
    %2650 = vmax.xlane.f32.xlu0 %v2649
    %v2651 = vpop.xlane.xlu0 %2650
    %v2652 = vsub.f32 %v2645, %v2651
    %v2653 = vmul.f32 %v2652, 1.442695
    %v2654 = vpow.pop %v2653
    %v2655 = vsel %vm2648, %v2654, 0.0
    %2656 = vadd.xlane.f32.xlu0 %v2655
    %v2657 = vpop.xlane.xlu0 %2656
    %v2658 = vlog2.pop %v2657
    %v2659 = vmul.f32 %v2658, 0.6931472
    %v2660 = vadd.f32 %v2659, %v2651
    %v2661 = vsub.f32 %v2645, %v2660
    %2662 = vst [vmem:[#allocation2] sm:$0x3] %v2661
    // Predicated region
    $region22: #{net_forward.3} parent=1 // pred_check
      _
    $region23: #{net_forward.3} parent=1 // pred_check_branch
      %2664 = sbr.rel (0) target = $region25
    $region24: #{net_forward.3} parent=1 // pred_region
      %2666 = vsyncadd [#allocation3], 0
      %s2668 = sshll.u32 [#allocation2], 4
      %s2669 = int_to_ptr.vmem [resolvable:$true] %s2668
      %s2670 = sshll.u32 %s5, 4
      %s2671 = int_to_ptr.hbm [resolvable:$true] %s2670
      %2673 = dma.vmem_to_hbm [thread:$0]  %s2669, 32, %s2671, [#allocation3]
    $region25: #{net_forward.3} parent=1 // pred_fallthru
      _
    // Predicated region
    $region26: #{net_forward.3} parent=1 // pred_check
      _
    $region27: #{net_forward.3} parent=1 // pred_check_branch
      %2675 = sbr.rel (0) target = $region29
    $region28: #{net_forward.3} parent=1 // pred_region
      %2677 = dma.done [#allocation3], 32
    $region29: #{net_forward.3} parent=1 // pred_fallthru
      _
    %2678 = vsyncpa [#allocation3], 1

</llo_original>
